<compile_context>
chip_gen: v7x
topology: tpu7x:2x2x1
jax: 0.10.0
libtpu: 0.0.40
codegen_flags: <defaults>
</compile_context>

<pallas_src>
import jax
import jax.numpy as jnp
from jax.experimental import pallas as pl
from jax.experimental.pallas import tpu as pltpu


# ---------------------------------------------------------------------------
# Fused kernel: 2-layer LSTM (wavefront-interleaved) + FC head
# ---------------------------------------------------------------------------
def _fused_lstm_fc_kernel(x_ref,
                          wih1_ref, whh1_ref, b1_ref,
                          wih2_ref, whh2_ref, b2_ref,
                          fw1_ref, fb1_ref, fw2_ref, fb2_ref,
                          out_ref):
    B = out_ref.shape[0]
    T = x_ref.shape[0] // B
    H = whh1_ref.shape[0]
    bf16 = jnp.bfloat16

    def sigmoid1(v):
        # one EUP op (tanh) instead of exp + divide
        return 0.5 * jnp.tanh(0.5 * v) + 0.5

    def lstm_cell(gates, c, first):
        # gate column order is [i | f | o | g]
        sig = sigmoid1(gates[:, :3 * H])            # (B, 3H): i, f, o
        g = jnp.tanh(gates[:, 3 * H:])              # (B, H)
        i_g = sig[:, :H]
        o_g = sig[:, 2 * H:]
        if first:                                   # t == 0: c_prev == 0
            c_new = i_g * g
        else:
            c_new = sig[:, H:2 * H] * c + i_g * g   # f*c + i*g
        h_new = o_g * jnp.tanh(c_new)
        return h_new, c_new

    whh1 = whh1_ref[...]                            # (H, 4H) bf16
    whh2 = whh2_ref[...]                            # (H, 4H) bf16
    wih2 = wih2_ref[...]                            # (H, 4H) bf16
    b1 = b1_ref[...]                                # (1, 4H) f32
    b2 = b2_ref[...]                                # (1, 4H) f32

    # Layer-1 input projection for ALL timesteps in one matmul (rows are t*B + b).
    xp1 = jnp.dot(x_ref[...].astype(bf16), wih1_ref[...],
                  preferred_element_type=jnp.float32) + b1          # (T*B, 4H) f32

    h1 = c1 = h2 = c2 = None
    for t in range(T):                              # static unroll, T known at trace time
        # ----- layer 1, step t
        g1 = xp1[t * B:(t + 1) * B, :]
        if t > 0:
            g1 = g1 + jnp.dot(h1.astype(bf16), whh1,
                              preferred_element_type=jnp.float32)
        h1, c1 = lstm_cell(g1, c1, first=(t == 0))

        # ----- layer 2, step t (inter-layer Dropout(0.2) is identity in eval)
        g2 = jnp.dot(h1.astype(bf16), wih2,
                     preferred_element_type=jnp.float32) + b2
        if t > 0:
            g2 = g2 + jnp.dot(h2.astype(bf16), whh2,
                              preferred_element_type=jnp.float32)
        h2, c2 = lstm_cell(g2, c2, first=(t == 0))

    # ----- FC head on the final hidden state of layer 2 (== out[:, -1, :])
    z = jnp.dot(h2.astype(bf16), fw1_ref[...],
                preferred_element_type=jnp.float32) + fb1_ref[...]
    z = jnp.maximum(z, 0.0)                         # ReLU; Dropout(0.3) identity in eval
    y = jnp.dot(z.astype(bf16), fw2_ref[...],
                preferred_element_type=jnp.float32) + fb2_ref[...]
    out_ref[...] = y.astype(out_ref.dtype)


# ---------------------------------------------------------------------------
# Wrapper: single fused grid-less pallas_call, everything VMEM-resident
# ---------------------------------------------------------------------------
def lstm_digit_classifier_forward(x_bti, kparams):
    assert len(kparams["lstm"]) == 2, "kernel is specialized for num_layers=2"
    B, T, I = x_bti.shape
    l1, l2 = kparams["lstm"]
    fc = kparams["fc"]
    H = l1["w_hh_t"].shape[0]
    out_dim = fc["w2_t"].shape[1]

    # Batch-major -> time-major regroup in the wrapper (pure layout plumbing,
    # handled by XLA); row order becomes t*B + b.
    x_tm = jnp.transpose(x_bti, (1, 0, 2)).reshape(T * B, I)

    vmem = pl.BlockSpec(memory_space=pltpu.MemorySpace.VMEM)
    flops = 2 * (T * B * I * 4 * H              # xp1 for all steps
                 + 3 * T * B * H * 4 * H        # h1@Whh1, h1@Wih2, h2@Whh2
                 + B * H * 64 + B * 64 * out_dim)
    cost = pl.CostEstimate(
        flops=flops,
        transcendentals=2 * T * 5 * B * H,      # per step per layer: 3H sig + 2H tanh
        bytes_accessed=2 * ((I + 3 * H) * 4 * H + H * 64 + 64 * out_dim)
                       + 4 * (B * T * I + B * out_dim))

    return pl.pallas_call(
        _fused_lstm_fc_kernel,
        out_shape=jax.ShapeDtypeStruct((B, out_dim), x_bti.dtype),
        in_specs=[vmem] * 11,
        out_specs=vmem,
        cost_estimate=cost,
    )(x_tm,
      l1["w_ih_t"], l1["w_hh_t"], l1["b"],
      l2["w_ih_t"], l2["w_hh_t"], l2["b"],
      fc["w1_t"], fc["b1"], fc["w2_t"], fc["b2"])


# ---------------------------------------------------------------------------
# Parameters: PyTorch layout ([i,f,g,o] gates, (out,in) matrices) and the
# kernel-layout conversion (transpose, fuse biases, reorder to [i,f,o,g], bf16).
# ---------------------------------------------------------------------------
def init_torch_params(key, input_size, hidden_size, num_layers, fc_hidden, output_size):
    params = {"lstm": [], "fc": {}}
    k_lstm = 1.0 / jnp.sqrt(hidden_size)
    for layer in range(num_layers):
        in_sz = input_size if layer == 0 else hidden_size
        key, k1, k2, k3, k4 = jax.random.split(key, 5)
        params["lstm"].append({
            "w_ih": jax.random.uniform(k1, (4 * hidden_size, in_sz), jnp.float32, -k_lstm, k_lstm),
            "w_hh": jax.random.uniform(k2, (4 * hidden_size, hidden_size), jnp.float32, -k_lstm, k_lstm),
            "b_ih": jax.random.uniform(k3, (4 * hidden_size,), jnp.float32, -k_lstm, k_lstm),
            "b_hh": jax.random.uniform(k4, (4 * hidden_size,), jnp.float32, -k_lstm, k_lstm),
        })
    key, k1, k2, k3, k4 = jax.random.split(key, 5)
    kf1 = 1.0 / jnp.sqrt(hidden_size)
    kf2 = 1.0 / jnp.sqrt(fc_hidden)
    params["fc"] = {
        "w1": jax.random.uniform(k1, (fc_hidden, hidden_size), jnp.float32, -kf1, kf1),
        "b1": jax.random.uniform(k2, (fc_hidden,), jnp.float32, -kf1, kf1),
        "w2": jax.random.uniform(k3, (output_size, fc_hidden), jnp.float32, -kf2, kf2),
        "b2": jax.random.uniform(k4, (output_size,), jnp.float32, -kf2, kf2),
    }
    return params


def _reorder_ifgo_to_ifog(w):
    """Reorder PyTorch's [i, f, g, o] gate blocks (axis 0) to [i, f, o, g]."""
    i, f, g, o = jnp.split(w, 4, axis=0)
    return jnp.concatenate([i, f, o, g], axis=0)


def prepare_kernel_params(tparams):
    kp = {"lstm": [], "fc": {}}
    for layer in tparams["lstm"]:
        w_ih = _reorder_ifgo_to_ifog(layer["w_ih"])
        w_hh = _reorder_ifgo_to_ifog(layer["w_hh"])
        b = _reorder_ifgo_to_ifog(layer["b_ih"] + layer["b_hh"])
        kp["lstm"].append({
            "w_ih_t": w_ih.T.astype(jnp.bfloat16),   # (in, 4H), gate cols [i|f|o|g]
            "w_hh_t": w_hh.T.astype(jnp.bfloat16),   # (H, 4H)
            "b": b.reshape(1, -1),                   # (1, 4H) fused bias, f32
        })
    fc = tparams["fc"]
    kp["fc"] = {
        "w1_t": fc["w1"].T.astype(jnp.bfloat16), "b1": fc["b1"].reshape(1, -1),
        "w2_t": fc["w2"].T.astype(jnp.bfloat16), "b2": fc["b2"].reshape(1, -1),
    }
    return kp


# ---------------------------------------------------------------------------
# Pure-JAX f32 reference (PyTorch layout / gate order) for the correctness check
# ---------------------------------------------------------------------------
def _reference_forward(x_bti, tparams):
    x = jnp.transpose(x_bti, (1, 0, 2))  # (T, B, I)
    for layer in tparams["lstm"]:
        H = layer["w_hh"].shape[1]
        B = x.shape[1]
        w_ih_t = layer["w_ih"].T
        w_hh_t = layer["w_hh"].T
        b = layer["b_ih"] + layer["b_hh"]

        def step(carry, x_t):
            h, c = carry
            gates = x_t @ w_ih_t + h @ w_hh_t + b
            i = jax.nn.sigmoid(gates[:, 0 * H:1 * H])
            f = jax.nn.sigmoid(gates[:, 1 * H:2 * H])
            g = jnp.tanh(gates[:, 2 * H:3 * H])
            o = jax.nn.sigmoid(gates[:, 3 * H:4 * H])
            c = f * c + i * g
            h = o * jnp.tanh(c)
            return (h, c), h

        init = (jnp.zeros((B, H), jnp.float32), jnp.zeros((B, H), jnp.float32))
        _, x = jax.lax.scan(step, init, x)
    last = x[-1]
    fc = tparams["fc"]
    z = jnp.maximum(last @ fc["w1"].T + fc["b1"], 0.0)
    return z @ fc["w2"].T + fc["b2"]


if __name__ == "__main__":
    # Shapes from the module defaults: input_size=10, hidden=128, 2 layers, output=10.
    # B=8 fills a full f32 sublane group; T=8 timesteps.
    B, T = 8, 8
    INPUT_SIZE, HIDDEN, NUM_LAYERS, FC_HIDDEN, OUTPUT = 10, 128, 2, 64, 10

    key = jax.random.PRNGKey(0)
    key, kx, kp = jax.random.split(key, 3)
    x = jax.random.normal(kx, (B, T, INPUT_SIZE), jnp.float32)

    tparams = init_torch_params(kp, INPUT_SIZE, HIDDEN, NUM_LAYERS, FC_HIDDEN, OUTPUT)
    kparams = prepare_kernel_params(tparams)

    out = jax.block_until_ready(lstm_digit_classifier_forward(x, kparams))
    assert out.shape == (B, OUTPUT), out.shape

    # f32 reference; kernel uses bf16 MXU operands with f32 accumulation, so use a
    # bf16-appropriate tolerance.
    ref = jax.block_until_ready(_reference_forward(x, tparams))
    assert jnp.allclose(out, ref, atol=2e-2, rtol=2e-2), (
        float(jnp.max(jnp.abs(out - ref))), out, ref)

    print("KERNEL_OK")
</pallas_src>

<mosaic_0001>
module attributes {stable_mosaic.version = 11 : i64} {
  func.func @_fused_lstm_fc_kernel(%arg0: memref<64x10xf32, #tpu.memory_space<vmem>>, %arg1: memref<10x512xbf16, #tpu.memory_space<vmem>>, %arg2: memref<128x512xbf16, #tpu.memory_space<vmem>>, %arg3: memref<1x512xf32, #tpu.memory_space<vmem>>, %arg4: memref<128x512xbf16, #tpu.memory_space<vmem>>, %arg5: memref<128x512xbf16, #tpu.memory_space<vmem>>, %arg6: memref<1x512xf32, #tpu.memory_space<vmem>>, %arg7: memref<128x64xbf16, #tpu.memory_space<vmem>>, %arg8: memref<1x64xf32, #tpu.memory_space<vmem>>, %arg9: memref<64x10xbf16, #tpu.memory_space<vmem>>, %arg10: memref<1x10xf32, #tpu.memory_space<vmem>>, %arg11: memref<8x10xf32, #tpu.memory_space<vmem>>) attributes {dimension_semantics = [], scalar_prefetch = 0 : i64, scratch_operands = 0 : i64, tpu.core_type = #tpu.core_type<tc>} {
    %c0 = arith.constant 0 : index
    %c0_0 = arith.constant 0 : index
    %0 = vector.load %arg2[%c0, %c0_0] : memref<128x512xbf16, #tpu.memory_space<vmem>>, vector<128x512xbf16>
    %c0_1 = arith.constant 0 : index
    %c0_2 = arith.constant 0 : index
    %1 = vector.load %arg5[%c0_1, %c0_2] : memref<128x512xbf16, #tpu.memory_space<vmem>>, vector<128x512xbf16>
    %c0_3 = arith.constant 0 : index
    %c0_4 = arith.constant 0 : index
    %2 = vector.load %arg4[%c0_3, %c0_4] : memref<128x512xbf16, #tpu.memory_space<vmem>>, vector<128x512xbf16>
    %c0_5 = arith.constant 0 : index
    %c0_6 = arith.constant 0 : index
    %3 = vector.load %arg3[%c0_5, %c0_6] : memref<1x512xf32, #tpu.memory_space<vmem>>, vector<1x512xf32>
    %c0_7 = arith.constant 0 : index
    %c0_8 = arith.constant 0 : index
    %4 = vector.load %arg6[%c0_7, %c0_8] : memref<1x512xf32, #tpu.memory_space<vmem>>, vector<1x512xf32>
    %c0_9 = arith.constant 0 : index
    %c0_10 = arith.constant 0 : index
    %5 = vector.load %arg0[%c0_9, %c0_10] : memref<64x10xf32, #tpu.memory_space<vmem>>, vector<64x10xf32>
    %6 = arith.truncf %5 : vector<64x10xf32> to vector<64x10xbf16>
    %c0_11 = arith.constant 0 : index
    %c0_12 = arith.constant 0 : index
    %7 = vector.load %arg1[%c0_11, %c0_12] : memref<10x512xbf16, #tpu.memory_space<vmem>>, vector<10x512xbf16>
    %cst = arith.constant dense<0.000000e+00> : vector<64x512xf32>
    %8 = tpu.matmul %6, %7, %cst {dimension_numbers = #tpu.dot_dimension_numbers<[1], [0], [0], [1], [0, 0, 1, 1], [], []>} : vector<64x10xbf16>, vector<10x512xbf16>, vector<64x512xf32> -> vector<64x512xf32>
    %9 = vector.broadcast %3 : vector<1x512xf32> to vector<64x512xf32>
    %10 = arith.addf %8, %9 : vector<64x512xf32>
    %11 = vector.extract_strided_slice %10 {offsets = [0, 0], sizes = [8, 512], strides = [1, 1]} : vector<64x512xf32> to vector<8x512xf32>
    %12 = vector.extract_strided_slice %11 {offsets = [0, 0], sizes = [8, 384], strides = [1, 1]} : vector<8x512xf32> to vector<8x384xf32>
    %cst_13 = arith.constant 5.000000e-01 : f32
    %13 = vector.broadcast %cst_13 : f32 to vector<8x384xf32>
    %14 = arith.mulf %13, %12 : vector<8x384xf32>
    %15 = math.tanh %14 : vector<8x384xf32>
    %cst_14 = arith.constant 5.000000e-01 : f32
    %16 = vector.broadcast %cst_14 : f32 to vector<8x384xf32>
    %17 = arith.mulf %16, %15 : vector<8x384xf32>
    %cst_15 = arith.constant 5.000000e-01 : f32
    %18 = vector.broadcast %cst_15 : f32 to vector<8x384xf32>
    %19 = arith.addf %17, %18 : vector<8x384xf32>
    %20 = vector.extract_strided_slice %11 {offsets = [0, 384], sizes = [8, 128], strides = [1, 1]} : vector<8x512xf32> to vector<8x128xf32>
    %21 = math.tanh %20 : vector<8x128xf32>
    %22 = vector.extract_strided_slice %19 {offsets = [0, 0], sizes = [8, 128], strides = [1, 1]} : vector<8x384xf32> to vector<8x128xf32>
    %23 = vector.extract_strided_slice %19 {offsets = [0, 256], sizes = [8, 128], strides = [1, 1]} : vector<8x384xf32> to vector<8x128xf32>
    %24 = arith.mulf %22, %21 : vector<8x128xf32>
    %25 = math.tanh %24 : vector<8x128xf32>
    %26 = arith.mulf %23, %25 : vector<8x128xf32>
    %27 = arith.truncf %26 : vector<8x128xf32> to vector<8x128xbf16>
    %cst_16 = arith.constant dense<0.000000e+00> : vector<8x512xf32>
    %28 = tpu.matmul %27, %2, %cst_16 {dimension_numbers = #tpu.dot_dimension_numbers<[1], [0], [0], [1], [0, 0, 1, 1], [], []>} : vector<8x128xbf16>, vector<128x512xbf16>, vector<8x512xf32> -> vector<8x512xf32>
    %29 = vector.broadcast %4 : vector<1x512xf32> to vector<8x512xf32>
    %30 = arith.addf %28, %29 : vector<8x512xf32>
    %31 = vector.extract_strided_slice %30 {offsets = [0, 0], sizes = [8, 384], strides = [1, 1]} : vector<8x512xf32> to vector<8x384xf32>
    %cst_17 = arith.constant 5.000000e-01 : f32
    %32 = vector.broadcast %cst_17 : f32 to vector<8x384xf32>
    %33 = arith.mulf %32, %31 : vector<8x384xf32>
    %34 = math.tanh %33 : vector<8x384xf32>
    %cst_18 = arith.constant 5.000000e-01 : f32
    %35 = vector.broadcast %cst_18 : f32 to vector<8x384xf32>
    %36 = arith.mulf %35, %34 : vector<8x384xf32>
    %cst_19 = arith.constant 5.000000e-01 : f32
    %37 = vector.broadcast %cst_19 : f32 to vector<8x384xf32>
    %38 = arith.addf %36, %37 : vector<8x384xf32>
    %39 = vector.extract_strided_slice %30 {offsets = [0, 384], sizes = [8, 128], strides = [1, 1]} : vector<8x512xf32> to vector<8x128xf32>
    %40 = math.tanh %39 : vector<8x128xf32>
    %41 = vector.extract_strided_slice %38 {offsets = [0, 0], sizes = [8, 128], strides = [1, 1]} : vector<8x384xf32> to vector<8x128xf32>
    %42 = vector.extract_strided_slice %38 {offsets = [0, 256], sizes = [8, 128], strides = [1, 1]} : vector<8x384xf32> to vector<8x128xf32>
    %43 = arith.mulf %41, %40 : vector<8x128xf32>
    %44 = math.tanh %43 : vector<8x128xf32>
    %45 = arith.mulf %42, %44 : vector<8x128xf32>
    %46 = vector.extract_strided_slice %10 {offsets = [8, 0], sizes = [8, 512], strides = [1, 1]} : vector<64x512xf32> to vector<8x512xf32>
    %47 = arith.truncf %26 : vector<8x128xf32> to vector<8x128xbf16>
    %cst_20 = arith.constant dense<0.000000e+00> : vector<8x512xf32>
    %48 = tpu.matmul %47, %0, %cst_20 {dimension_numbers = #tpu.dot_dimension_numbers<[1], [0], [0], [1], [0, 0, 1, 1], [], []>} : vector<8x128xbf16>, vector<128x512xbf16>, vector<8x512xf32> -> vector<8x512xf32>
    %49 = arith.addf %46, %48 : vector<8x512xf32>
    %50 = vector.extract_strided_slice %49 {offsets = [0, 0], sizes = [8, 384], strides = [1, 1]} : vector<8x512xf32> to vector<8x384xf32>
    %cst_21 = arith.constant 5.000000e-01 : f32
    %51 = vector.broadcast %cst_21 : f32 to vector<8x384xf32>
    %52 = arith.mulf %51, %50 : vector<8x384xf32>
    %53 = math.tanh %52 : vector<8x384xf32>
    %cst_22 = arith.constant 5.000000e-01 : f32
    %54 = vector.broadcast %cst_22 : f32 to vector<8x384xf32>
    %55 = arith.mulf %54, %53 : vector<8x384xf32>
    %cst_23 = arith.constant 5.000000e-01 : f32
    %56 = vector.broadcast %cst_23 : f32 to vector<8x384xf32>
    %57 = arith.addf %55, %56 : vector<8x384xf32>
    %58 = vector.extract_strided_slice %49 {offsets = [0, 384], sizes = [8, 128], strides = [1, 1]} : vector<8x512xf32> to vector<8x128xf32>
    %59 = math.tanh %58 : vector<8x128xf32>
    %60 = vector.extract_strided_slice %57 {offsets = [0, 0], sizes = [8, 128], strides = [1, 1]} : vector<8x384xf32> to vector<8x128xf32>
    %61 = vector.extract_strided_slice %57 {offsets = [0, 256], sizes = [8, 128], strides = [1, 1]} : vector<8x384xf32> to vector<8x128xf32>
    %62 = vector.extract_strided_slice %57 {offsets = [0, 128], sizes = [8, 128], strides = [1, 1]} : vector<8x384xf32> to vector<8x128xf32>
    %63 = arith.mulf %62, %24 : vector<8x128xf32>
    %64 = arith.mulf %60, %59 : vector<8x128xf32>
    %65 = arith.addf %63, %64 : vector<8x128xf32>
    %66 = math.tanh %65 : vector<8x128xf32>
    %67 = arith.mulf %61, %66 : vector<8x128xf32>
    %68 = arith.truncf %67 : vector<8x128xf32> to vector<8x128xbf16>
    %cst_24 = arith.constant dense<0.000000e+00> : vector<8x512xf32>
    %69 = tpu.matmul %68, %2, %cst_24 {dimension_numbers = #tpu.dot_dimension_numbers<[1], [0], [0], [1], [0, 0, 1, 1], [], []>} : vector<8x128xbf16>, vector<128x512xbf16>, vector<8x512xf32> -> vector<8x512xf32>
    %70 = vector.broadcast %4 : vector<1x512xf32> to vector<8x512xf32>
    %71 = arith.addf %69, %70 : vector<8x512xf32>
    %72 = arith.truncf %45 : vector<8x128xf32> to vector<8x128xbf16>
    %cst_25 = arith.constant dense<0.000000e+00> : vector<8x512xf32>
    %73 = tpu.matmul %72, %1, %cst_25 {dimension_numbers = #tpu.dot_dimension_numbers<[1], [0], [0], [1], [0, 0, 1, 1], [], []>} : vector<8x128xbf16>, vector<128x512xbf16>, vector<8x512xf32> -> vector<8x512xf32>
    %74 = arith.addf %71, %73 : vector<8x512xf32>
    %75 = vector.extract_strided_slice %74 {offsets = [0, 0], sizes = [8, 384], strides = [1, 1]} : vector<8x512xf32> to vector<8x384xf32>
    %cst_26 = arith.constant 5.000000e-01 : f32
    %76 = vector.broadcast %cst_26 : f32 to vector<8x384xf32>
    %77 = arith.mulf %76, %75 : vector<8x384xf32>
    %78 = math.tanh %77 : vector<8x384xf32>
    %cst_27 = arith.constant 5.000000e-01 : f32
    %79 = vector.broadcast %cst_27 : f32 to vector<8x384xf32>
    %80 = arith.mulf %79, %78 : vector<8x384xf32>
    %cst_28 = arith.constant 5.000000e-01 : f32
    %81 = vector.broadcast %cst_28 : f32 to vector<8x384xf32>
    %82 = arith.addf %80, %81 : vector<8x384xf32>
    %83 = vector.extract_strided_slice %74 {offsets = [0, 384], sizes = [8, 128], strides = [1, 1]} : vector<8x512xf32> to vector<8x128xf32>
    %84 = math.tanh %83 : vector<8x128xf32>
    %85 = vector.extract_strided_slice %82 {offsets = [0, 0], sizes = [8, 128], strides = [1, 1]} : vector<8x384xf32> to vector<8x128xf32>
    %86 = vector.extract_strided_slice %82 {offsets = [0, 256], sizes = [8, 128], strides = [1, 1]} : vector<8x384xf32> to vector<8x128xf32>
    %87 = vector.extract_strided_slice %82 {offsets = [0, 128], sizes = [8, 128], strides = [1, 1]} : vector<8x384xf32> to vector<8x128xf32>
    %88 = arith.mulf %87, %43 : vector<8x128xf32>
    %89 = arith.mulf %85, %84 : vector<8x128xf32>
    %90 = arith.addf %88, %89 : vector<8x128xf32>
    %91 = math.tanh %90 : vector<8x128xf32>
    %92 = arith.mulf %86, %91 : vector<8x128xf32>
    %93 = vector.extract_strided_slice %10 {offsets = [16, 0], sizes = [8, 512], strides = [1, 1]} : vector<64x512xf32> to vector<8x512xf32>
    %94 = arith.truncf %67 : vector<8x128xf32> to vector<8x128xbf16>
    %cst_29 = arith.constant dense<0.000000e+00> : vector<8x512xf32>
    %95 = tpu.matmul %94, %0, %cst_29 {dimension_numbers = #tpu.dot_dimension_numbers<[1], [0], [0], [1], [0, 0, 1, 1], [], []>} : vector<8x128xbf16>, vector<128x512xbf16>, vector<8x512xf32> -> vector<8x512xf32>
    %96 = arith.addf %93, %95 : vector<8x512xf32>
    %97 = vector.extract_strided_slice %96 {offsets = [0, 0], sizes = [8, 384], strides = [1, 1]} : vector<8x512xf32> to vector<8x384xf32>
    %cst_30 = arith.constant 5.000000e-01 : f32
    %98 = vector.broadcast %cst_30 : f32 to vector<8x384xf32>
    %99 = arith.mulf %98, %97 : vector<8x384xf32>
    %100 = math.tanh %99 : vector<8x384xf32>
    %cst_31 = arith.constant 5.000000e-01 : f32
    %101 = vector.broadcast %cst_31 : f32 to vector<8x384xf32>
    %102 = arith.mulf %101, %100 : vector<8x384xf32>
    %cst_32 = arith.constant 5.000000e-01 : f32
    %103 = vector.broadcast %cst_32 : f32 to vector<8x384xf32>
    %104 = arith.addf %102, %103 : vector<8x384xf32>
    %105 = vector.extract_strided_slice %96 {offsets = [0, 384], sizes = [8, 128], strides = [1, 1]} : vector<8x512xf32> to vector<8x128xf32>
    %106 = math.tanh %105 : vector<8x128xf32>
    %107 = vector.extract_strided_slice %104 {offsets = [0, 0], sizes = [8, 128], strides = [1, 1]} : vector<8x384xf32> to vector<8x128xf32>
    %108 = vector.extract_strided_slice %104 {offsets = [0, 256], sizes = [8, 128], strides = [1, 1]} : vector<8x384xf32> to vector<8x128xf32>
    %109 = vector.extract_strided_slice %104 {offsets = [0, 128], sizes = [8, 128], strides = [1, 1]} : vector<8x384xf32> to vector<8x128xf32>
    %110 = arith.mulf %109, %65 : vector<8x128xf32>
    %111 = arith.mulf %107, %106 : vector<8x128xf32>
    %112 = arith.addf %110, %111 : vector<8x128xf32>
    %113 = math.tanh %112 : vector<8x128xf32>
    %114 = arith.mulf %108, %113 : vector<8x128xf32>
    %115 = arith.truncf %114 : vector<8x128xf32> to vector<8x128xbf16>
    %cst_33 = arith.constant dense<0.000000e+00> : vector<8x512xf32>
    %116 = tpu.matmul %115, %2, %cst_33 {dimension_numbers = #tpu.dot_dimension_numbers<[1], [0], [0], [1], [0, 0, 1, 1], [], []>} : vector<8x128xbf16>, vector<128x512xbf16>, vector<8x512xf32> -> vector<8x512xf32>
    %117 = vector.broadcast %4 : vector<1x512xf32> to vector<8x512xf32>
    %118 = arith.addf %116, %117 : vector<8x512xf32>
    %119 = arith.truncf %92 : vector<8x128xf32> to vector<8x128xbf16>
    %cst_34 = arith.constant dense<0.000000e+00> : vector<8x512xf32>
    %120 = tpu.matmul %119, %1, %cst_34 {dimension_numbers = #tpu.dot_dimension_numbers<[1], [0], [0], [1], [0, 0, 1, 1], [], []>} : vector<8x128xbf16>, vector<128x512xbf16>, vector<8x512xf32> -> vector<8x512xf32>
    %121 = arith.addf %118, %120 : vector<8x512xf32>
    %122 = vector.extract_strided_slice %121 {offsets = [0, 0], sizes = [8, 384], strides = [1, 1]} : vector<8x512xf32> to vector<8x384xf32>
    %cst_35 = arith.constant 5.000000e-01 : f32
    %123 = vector.broadcast %cst_35 : f32 to vector<8x384xf32>
    %124 = arith.mulf %123, %122 : vector<8x384xf32>
    %125 = math.tanh %124 : vector<8x384xf32>
    %cst_36 = arith.constant 5.000000e-01 : f32
    %126 = vector.broadcast %cst_36 : f32 to vector<8x384xf32>
    %127 = arith.mulf %126, %125 : vector<8x384xf32>
    %cst_37 = arith.constant 5.000000e-01 : f32
    %128 = vector.broadcast %cst_37 : f32 to vector<8x384xf32>
    %129 = arith.addf %127, %128 : vector<8x384xf32>
    %130 = vector.extract_strided_slice %121 {offsets = [0, 384], sizes = [8, 128], strides = [1, 1]} : vector<8x512xf32> to vector<8x128xf32>
    %131 = math.tanh %130 : vector<8x128xf32>
    %132 = vector.extract_strided_slice %129 {offsets = [0, 0], sizes = [8, 128], strides = [1, 1]} : vector<8x384xf32> to vector<8x128xf32>
    %133 = vector.extract_strided_slice %129 {offsets = [0, 256], sizes = [8, 128], strides = [1, 1]} : vector<8x384xf32> to vector<8x128xf32>
    %134 = vector.extract_strided_slice %129 {offsets = [0, 128], sizes = [8, 128], strides = [1, 1]} : vector<8x384xf32> to vector<8x128xf32>
    %135 = arith.mulf %134, %90 : vector<8x128xf32>
    %136 = arith.mulf %132, %131 : vector<8x128xf32>
    %137 = arith.addf %135, %136 : vector<8x128xf32>
    %138 = math.tanh %137 : vector<8x128xf32>
    %139 = arith.mulf %133, %138 : vector<8x128xf32>
    %140 = vector.extract_strided_slice %10 {offsets = [24, 0], sizes = [8, 512], strides = [1, 1]} : vector<64x512xf32> to vector<8x512xf32>
    %141 = arith.truncf %114 : vector<8x128xf32> to vector<8x128xbf16>
    %cst_38 = arith.constant dense<0.000000e+00> : vector<8x512xf32>
    %142 = tpu.matmul %141, %0, %cst_38 {dimension_numbers = #tpu.dot_dimension_numbers<[1], [0], [0], [1], [0, 0, 1, 1], [], []>} : vector<8x128xbf16>, vector<128x512xbf16>, vector<8x512xf32> -> vector<8x512xf32>
    %143 = arith.addf %140, %142 : vector<8x512xf32>
    %144 = vector.extract_strided_slice %143 {offsets = [0, 0], sizes = [8, 384], strides = [1, 1]} : vector<8x512xf32> to vector<8x384xf32>
    %cst_39 = arith.constant 5.000000e-01 : f32
    %145 = vector.broadcast %cst_39 : f32 to vector<8x384xf32>
    %146 = arith.mulf %145, %144 : vector<8x384xf32>
    %147 = math.tanh %146 : vector<8x384xf32>
    %cst_40 = arith.constant 5.000000e-01 : f32
    %148 = vector.broadcast %cst_40 : f32 to vector<8x384xf32>
    %149 = arith.mulf %148, %147 : vector<8x384xf32>
    %cst_41 = arith.constant 5.000000e-01 : f32
    %150 = vector.broadcast %cst_41 : f32 to vector<8x384xf32>
    %151 = arith.addf %149, %150 : vector<8x384xf32>
    %152 = vector.extract_strided_slice %143 {offsets = [0, 384], sizes = [8, 128], strides = [1, 1]} : vector<8x512xf32> to vector<8x128xf32>
    %153 = math.tanh %152 : vector<8x128xf32>
    %154 = vector.extract_strided_slice %151 {offsets = [0, 0], sizes = [8, 128], strides = [1, 1]} : vector<8x384xf32> to vector<8x128xf32>
    %155 = vector.extract_strided_slice %151 {offsets = [0, 256], sizes = [8, 128], strides = [1, 1]} : vector<8x384xf32> to vector<8x128xf32>
    %156 = vector.extract_strided_slice %151 {offsets = [0, 128], sizes = [8, 128], strides = [1, 1]} : vector<8x384xf32> to vector<8x128xf32>
    %157 = arith.mulf %156, %112 : vector<8x128xf32>
    %158 = arith.mulf %154, %153 : vector<8x128xf32>
    %159 = arith.addf %157, %158 : vector<8x128xf32>
    %160 = math.tanh %159 : vector<8x128xf32>
    %161 = arith.mulf %155, %160 : vector<8x128xf32>
    %162 = arith.truncf %161 : vector<8x128xf32> to vector<8x128xbf16>
    %cst_42 = arith.constant dense<0.000000e+00> : vector<8x512xf32>
    %163 = tpu.matmul %162, %2, %cst_42 {dimension_numbers = #tpu.dot_dimension_numbers<[1], [0], [0], [1], [0, 0, 1, 1], [], []>} : vector<8x128xbf16>, vector<128x512xbf16>, vector<8x512xf32> -> vector<8x512xf32>
    %164 = vector.broadcast %4 : vector<1x512xf32> to vector<8x512xf32>
    %165 = arith.addf %163, %164 : vector<8x512xf32>
    %166 = arith.truncf %139 : vector<8x128xf32> to vector<8x128xbf16>
    %cst_43 = arith.constant dense<0.000000e+00> : vector<8x512xf32>
    %167 = tpu.matmul %166, %1, %cst_43 {dimension_numbers = #tpu.dot_dimension_numbers<[1], [0], [0], [1], [0, 0, 1, 1], [], []>} : vector<8x128xbf16>, vector<128x512xbf16>, vector<8x512xf32> -> vector<8x512xf32>
    %168 = arith.addf %165, %167 : vector<8x512xf32>
    %169 = vector.extract_strided_slice %168 {offsets = [0, 0], sizes = [8, 384], strides = [1, 1]} : vector<8x512xf32> to vector<8x384xf32>
    %cst_44 = arith.constant 5.000000e-01 : f32
    %170 = vector.broadcast %cst_44 : f32 to vector<8x384xf32>
    %171 = arith.mulf %170, %169 : vector<8x384xf32>
    %172 = math.tanh %171 : vector<8x384xf32>
    %cst_45 = arith.constant 5.000000e-01 : f32
    %173 = vector.broadcast %cst_45 : f32 to vector<8x384xf32>
    %174 = arith.mulf %173, %172 : vector<8x384xf32>
    %cst_46 = arith.constant 5.000000e-01 : f32
    %175 = vector.broadcast %cst_46 : f32 to vector<8x384xf32>
    %176 = arith.addf %174, %175 : vector<8x384xf32>
    %177 = vector.extract_strided_slice %168 {offsets = [0, 384], sizes = [8, 128], strides = [1, 1]} : vector<8x512xf32> to vector<8x128xf32>
    %178 = math.tanh %177 : vector<8x128xf32>
    %179 = vector.extract_strided_slice %176 {offsets = [0, 0], sizes = [8, 128], strides = [1, 1]} : vector<8x384xf32> to vector<8x128xf32>
    %180 = vector.extract_strided_slice %176 {offsets = [0, 256], sizes = [8, 128], strides = [1, 1]} : vector<8x384xf32> to vector<8x128xf32>
    %181 = vector.extract_strided_slice %176 {offsets = [0, 128], sizes = [8, 128], strides = [1, 1]} : vector<8x384xf32> to vector<8x128xf32>
    %182 = arith.mulf %181, %137 : vector<8x128xf32>
    %183 = arith.mulf %179, %178 : vector<8x128xf32>
    %184 = arith.addf %182, %183 : vector<8x128xf32>
    %185 = math.tanh %184 : vector<8x128xf32>
    %186 = arith.mulf %180, %185 : vector<8x128xf32>
    %187 = vector.extract_strided_slice %10 {offsets = [32, 0], sizes = [8, 512], strides = [1, 1]} : vector<64x512xf32> to vector<8x512xf32>
    %188 = arith.truncf %161 : vector<8x128xf32> to vector<8x128xbf16>
    %cst_47 = arith.constant dense<0.000000e+00> : vector<8x512xf32>
    %189 = tpu.matmul %188, %0, %cst_47 {dimension_numbers = #tpu.dot_dimension_numbers<[1], [0], [0], [1], [0, 0, 1, 1], [], []>} : vector<8x128xbf16>, vector<128x512xbf16>, vector<8x512xf32> -> vector<8x512xf32>
    %190 = arith.addf %187, %189 : vector<8x512xf32>
    %191 = vector.extract_strided_slice %190 {offsets = [0, 0], sizes = [8, 384], strides = [1, 1]} : vector<8x512xf32> to vector<8x384xf32>
    %cst_48 = arith.constant 5.000000e-01 : f32
    %192 = vector.broadcast %cst_48 : f32 to vector<8x384xf32>
    %193 = arith.mulf %192, %191 : vector<8x384xf32>
    %194 = math.tanh %193 : vector<8x384xf32>
    %cst_49 = arith.constant 5.000000e-01 : f32
    %195 = vector.broadcast %cst_49 : f32 to vector<8x384xf32>
    %196 = arith.mulf %195, %194 : vector<8x384xf32>
    %cst_50 = arith.constant 5.000000e-01 : f32
    %197 = vector.broadcast %cst_50 : f32 to vector<8x384xf32>
    %198 = arith.addf %196, %197 : vector<8x384xf32>
    %199 = vector.extract_strided_slice %190 {offsets = [0, 384], sizes = [8, 128], strides = [1, 1]} : vector<8x512xf32> to vector<8x128xf32>
    %200 = math.tanh %199 : vector<8x128xf32>
    %201 = vector.extract_strided_slice %198 {offsets = [0, 0], sizes = [8, 128], strides = [1, 1]} : vector<8x384xf32> to vector<8x128xf32>
    %202 = vector.extract_strided_slice %198 {offsets = [0, 256], sizes = [8, 128], strides = [1, 1]} : vector<8x384xf32> to vector<8x128xf32>
    %203 = vector.extract_strided_slice %198 {offsets = [0, 128], sizes = [8, 128], strides = [1, 1]} : vector<8x384xf32> to vector<8x128xf32>
    %204 = arith.mulf %203, %159 : vector<8x128xf32>
    %205 = arith.mulf %201, %200 : vector<8x128xf32>
    %206 = arith.addf %204, %205 : vector<8x128xf32>
    %207 = math.tanh %206 : vector<8x128xf32>
    %208 = arith.mulf %202, %207 : vector<8x128xf32>
    %209 = arith.truncf %208 : vector<8x128xf32> to vector<8x128xbf16>
    %cst_51 = arith.constant dense<0.000000e+00> : vector<8x512xf32>
    %210 = tpu.matmul %209, %2, %cst_51 {dimension_numbers = #tpu.dot_dimension_numbers<[1], [0], [0], [1], [0, 0, 1, 1], [], []>} : vector<8x128xbf16>, vector<128x512xbf16>, vector<8x512xf32> -> vector<8x512xf32>
    %211 = vector.broadcast %4 : vector<1x512xf32> to vector<8x512xf32>
    %212 = arith.addf %210, %211 : vector<8x512xf32>
    %213 = arith.truncf %186 : vector<8x128xf32> to vector<8x128xbf16>
    %cst_52 = arith.constant dense<0.000000e+00> : vector<8x512xf32>
    %214 = tpu.matmul %213, %1, %cst_52 {dimension_numbers = #tpu.dot_dimension_numbers<[1], [0], [0], [1], [0, 0, 1, 1], [], []>} : vector<8x128xbf16>, vector<128x512xbf16>, vector<8x512xf32> -> vector<8x512xf32>
    %215 = arith.addf %212, %214 : vector<8x512xf32>
    %216 = vector.extract_strided_slice %215 {offsets = [0, 0], sizes = [8, 384], strides = [1, 1]} : vector<8x512xf32> to vector<8x384xf32>
    %cst_53 = arith.constant 5.000000e-01 : f32
    %217 = vector.broadcast %cst_53 : f32 to vector<8x384xf32>
    %218 = arith.mulf %217, %216 : vector<8x384xf32>
    %219 = math.tanh %218 : vector<8x384xf32>
    %cst_54 = arith.constant 5.000000e-01 : f32
    %220 = vector.broadcast %cst_54 : f32 to vector<8x384xf32>
    %221 = arith.mulf %220, %219 : vector<8x384xf32>
    %cst_55 = arith.constant 5.000000e-01 : f32
    %222 = vector.broadcast %cst_55 : f32 to vector<8x384xf32>
    %223 = arith.addf %221, %222 : vector<8x384xf32>
    %224 = vector.extract_strided_slice %215 {offsets = [0, 384], sizes = [8, 128], strides = [1, 1]} : vector<8x512xf32> to vector<8x128xf32>
    %225 = math.tanh %224 : vector<8x128xf32>
    %226 = vector.extract_strided_slice %223 {offsets = [0, 0], sizes = [8, 128], strides = [1, 1]} : vector<8x384xf32> to vector<8x128xf32>
    %227 = vector.extract_strided_slice %223 {offsets = [0, 256], sizes = [8, 128], strides = [1, 1]} : vector<8x384xf32> to vector<8x128xf32>
    %228 = vector.extract_strided_slice %223 {offsets = [0, 128], sizes = [8, 128], strides = [1, 1]} : vector<8x384xf32> to vector<8x128xf32>
    %229 = arith.mulf %228, %184 : vector<8x128xf32>
    %230 = arith.mulf %226, %225 : vector<8x128xf32>
    %231 = arith.addf %229, %230 : vector<8x128xf32>
    %232 = math.tanh %231 : vector<8x128xf32>
    %233 = arith.mulf %227, %232 : vector<8x128xf32>
    %234 = vector.extract_strided_slice %10 {offsets = [40, 0], sizes = [8, 512], strides = [1, 1]} : vector<64x512xf32> to vector<8x512xf32>
    %235 = arith.truncf %208 : vector<8x128xf32> to vector<8x128xbf16>
    %cst_56 = arith.constant dense<0.000000e+00> : vector<8x512xf32>
    %236 = tpu.matmul %235, %0, %cst_56 {dimension_numbers = #tpu.dot_dimension_numbers<[1], [0], [0], [1], [0, 0, 1, 1], [], []>} : vector<8x128xbf16>, vector<128x512xbf16>, vector<8x512xf32> -> vector<8x512xf32>
    %237 = arith.addf %234, %236 : vector<8x512xf32>
    %238 = vector.extract_strided_slice %237 {offsets = [0, 0], sizes = [8, 384], strides = [1, 1]} : vector<8x512xf32> to vector<8x384xf32>
    %cst_57 = arith.constant 5.000000e-01 : f32
    %239 = vector.broadcast %cst_57 : f32 to vector<8x384xf32>
    %240 = arith.mulf %239, %238 : vector<8x384xf32>
    %241 = math.tanh %240 : vector<8x384xf32>
    %cst_58 = arith.constant 5.000000e-01 : f32
    %242 = vector.broadcast %cst_58 : f32 to vector<8x384xf32>
    %243 = arith.mulf %242, %241 : vector<8x384xf32>
    %cst_59 = arith.constant 5.000000e-01 : f32
    %244 = vector.broadcast %cst_59 : f32 to vector<8x384xf32>
    %245 = arith.addf %243, %244 : vector<8x384xf32>
    %246 = vector.extract_strided_slice %237 {offsets = [0, 384], sizes = [8, 128], strides = [1, 1]} : vector<8x512xf32> to vector<8x128xf32>
    %247 = math.tanh %246 : vector<8x128xf32>
    %248 = vector.extract_strided_slice %245 {offsets = [0, 0], sizes = [8, 128], strides = [1, 1]} : vector<8x384xf32> to vector<8x128xf32>
    %249 = vector.extract_strided_slice %245 {offsets = [0, 256], sizes = [8, 128], strides = [1, 1]} : vector<8x384xf32> to vector<8x128xf32>
    %250 = vector.extract_strided_slice %245 {offsets = [0, 128], sizes = [8, 128], strides = [1, 1]} : vector<8x384xf32> to vector<8x128xf32>
    %251 = arith.mulf %250, %206 : vector<8x128xf32>
    %252 = arith.mulf %248, %247 : vector<8x128xf32>
    %253 = arith.addf %251, %252 : vector<8x128xf32>
    %254 = math.tanh %253 : vector<8x128xf32>
    %255 = arith.mulf %249, %254 : vector<8x128xf32>
    %256 = arith.truncf %255 : vector<8x128xf32> to vector<8x128xbf16>
    %cst_60 = arith.constant dense<0.000000e+00> : vector<8x512xf32>
    %257 = tpu.matmul %256, %2, %cst_60 {dimension_numbers = #tpu.dot_dimension_numbers<[1], [0], [0], [1], [0, 0, 1, 1], [], []>} : vector<8x128xbf16>, vector<128x512xbf16>, vector<8x512xf32> -> vector<8x512xf32>
    %258 = vector.broadcast %4 : vector<1x512xf32> to vector<8x512xf32>
    %259 = arith.addf %257, %258 : vector<8x512xf32>
    %260 = arith.truncf %233 : vector<8x128xf32> to vector<8x128xbf16>
    %cst_61 = arith.constant dense<0.000000e+00> : vector<8x512xf32>
    %261 = tpu.matmul %260, %1, %cst_61 {dimension_numbers = #tpu.dot_dimension_numbers<[1], [0], [0], [1], [0, 0, 1, 1], [], []>} : vector<8x128xbf16>, vector<128x512xbf16>, vector<8x512xf32> -> vector<8x512xf32>
    %262 = arith.addf %259, %261 : vector<8x512xf32>
    %263 = vector.extract_strided_slice %262 {offsets = [0, 0], sizes = [8, 384], strides = [1, 1]} : vector<8x512xf32> to vector<8x384xf32>
    %cst_62 = arith.constant 5.000000e-01 : f32
    %264 = vector.broadcast %cst_62 : f32 to vector<8x384xf32>
    %265 = arith.mulf %264, %263 : vector<8x384xf32>
    %266 = math.tanh %265 : vector<8x384xf32>
    %cst_63 = arith.constant 5.000000e-01 : f32
    %267 = vector.broadcast %cst_63 : f32 to vector<8x384xf32>
    %268 = arith.mulf %267, %266 : vector<8x384xf32>
    %cst_64 = arith.constant 5.000000e-01 : f32
    %269 = vector.broadcast %cst_64 : f32 to vector<8x384xf32>
    %270 = arith.addf %268, %269 : vector<8x384xf32>
    %271 = vector.extract_strided_slice %262 {offsets = [0, 384], sizes = [8, 128], strides = [1, 1]} : vector<8x512xf32> to vector<8x128xf32>
    %272 = math.tanh %271 : vector<8x128xf32>
    %273 = vector.extract_strided_slice %270 {offsets = [0, 0], sizes = [8, 128], strides = [1, 1]} : vector<8x384xf32> to vector<8x128xf32>
    %274 = vector.extract_strided_slice %270 {offsets = [0, 256], sizes = [8, 128], strides = [1, 1]} : vector<8x384xf32> to vector<8x128xf32>
    %275 = vector.extract_strided_slice %270 {offsets = [0, 128], sizes = [8, 128], strides = [1, 1]} : vector<8x384xf32> to vector<8x128xf32>
    %276 = arith.mulf %275, %231 : vector<8x128xf32>
    %277 = arith.mulf %273, %272 : vector<8x128xf32>
    %278 = arith.addf %276, %277 : vector<8x128xf32>
    %279 = math.tanh %278 : vector<8x128xf32>
    %280 = arith.mulf %274, %279 : vector<8x128xf32>
    %281 = vector.extract_strided_slice %10 {offsets = [48, 0], sizes = [8, 512], strides = [1, 1]} : vector<64x512xf32> to vector<8x512xf32>
    %282 = arith.truncf %255 : vector<8x128xf32> to vector<8x128xbf16>
    %cst_65 = arith.constant dense<0.000000e+00> : vector<8x512xf32>
    %283 = tpu.matmul %282, %0, %cst_65 {dimension_numbers = #tpu.dot_dimension_numbers<[1], [0], [0], [1], [0, 0, 1, 1], [], []>} : vector<8x128xbf16>, vector<128x512xbf16>, vector<8x512xf32> -> vector<8x512xf32>
    %284 = arith.addf %281, %283 : vector<8x512xf32>
    %285 = vector.extract_strided_slice %284 {offsets = [0, 0], sizes = [8, 384], strides = [1, 1]} : vector<8x512xf32> to vector<8x384xf32>
    %cst_66 = arith.constant 5.000000e-01 : f32
    %286 = vector.broadcast %cst_66 : f32 to vector<8x384xf32>
    %287 = arith.mulf %286, %285 : vector<8x384xf32>
    %288 = math.tanh %287 : vector<8x384xf32>
    %cst_67 = arith.constant 5.000000e-01 : f32
    %289 = vector.broadcast %cst_67 : f32 to vector<8x384xf32>
    %290 = arith.mulf %289, %288 : vector<8x384xf32>
    %cst_68 = arith.constant 5.000000e-01 : f32
    %291 = vector.broadcast %cst_68 : f32 to vector<8x384xf32>
    %292 = arith.addf %290, %291 : vector<8x384xf32>
    %293 = vector.extract_strided_slice %284 {offsets = [0, 384], sizes = [8, 128], strides = [1, 1]} : vector<8x512xf32> to vector<8x128xf32>
    %294 = math.tanh %293 : vector<8x128xf32>
    %295 = vector.extract_strided_slice %292 {offsets = [0, 0], sizes = [8, 128], strides = [1, 1]} : vector<8x384xf32> to vector<8x128xf32>
    %296 = vector.extract_strided_slice %292 {offsets = [0, 256], sizes = [8, 128], strides = [1, 1]} : vector<8x384xf32> to vector<8x128xf32>
    %297 = vector.extract_strided_slice %292 {offsets = [0, 128], sizes = [8, 128], strides = [1, 1]} : vector<8x384xf32> to vector<8x128xf32>
    %298 = arith.mulf %297, %253 : vector<8x128xf32>
    %299 = arith.mulf %295, %294 : vector<8x128xf32>
    %300 = arith.addf %298, %299 : vector<8x128xf32>
    %301 = math.tanh %300 : vector<8x128xf32>
    %302 = arith.mulf %296, %301 : vector<8x128xf32>
    %303 = arith.truncf %302 : vector<8x128xf32> to vector<8x128xbf16>
    %cst_69 = arith.constant dense<0.000000e+00> : vector<8x512xf32>
    %304 = tpu.matmul %303, %2, %cst_69 {dimension_numbers = #tpu.dot_dimension_numbers<[1], [0], [0], [1], [0, 0, 1, 1], [], []>} : vector<8x128xbf16>, vector<128x512xbf16>, vector<8x512xf32> -> vector<8x512xf32>
    %305 = vector.broadcast %4 : vector<1x512xf32> to vector<8x512xf32>
    %306 = arith.addf %304, %305 : vector<8x512xf32>
    %307 = arith.truncf %280 : vector<8x128xf32> to vector<8x128xbf16>
    %cst_70 = arith.constant dense<0.000000e+00> : vector<8x512xf32>
    %308 = tpu.matmul %307, %1, %cst_70 {dimension_numbers = #tpu.dot_dimension_numbers<[1], [0], [0], [1], [0, 0, 1, 1], [], []>} : vector<8x128xbf16>, vector<128x512xbf16>, vector<8x512xf32> -> vector<8x512xf32>
    %309 = arith.addf %306, %308 : vector<8x512xf32>
    %310 = vector.extract_strided_slice %309 {offsets = [0, 0], sizes = [8, 384], strides = [1, 1]} : vector<8x512xf32> to vector<8x384xf32>
    %cst_71 = arith.constant 5.000000e-01 : f32
    %311 = vector.broadcast %cst_71 : f32 to vector<8x384xf32>
    %312 = arith.mulf %311, %310 : vector<8x384xf32>
    %313 = math.tanh %312 : vector<8x384xf32>
    %cst_72 = arith.constant 5.000000e-01 : f32
    %314 = vector.broadcast %cst_72 : f32 to vector<8x384xf32>
    %315 = arith.mulf %314, %313 : vector<8x384xf32>
    %cst_73 = arith.constant 5.000000e-01 : f32
    %316 = vector.broadcast %cst_73 : f32 to vector<8x384xf32>
    %317 = arith.addf %315, %316 : vector<8x384xf32>
    %318 = vector.extract_strided_slice %309 {offsets = [0, 384], sizes = [8, 128], strides = [1, 1]} : vector<8x512xf32> to vector<8x128xf32>
    %319 = math.tanh %318 : vector<8x128xf32>
    %320 = vector.extract_strided_slice %317 {offsets = [0, 0], sizes = [8, 128], strides = [1, 1]} : vector<8x384xf32> to vector<8x128xf32>
    %321 = vector.extract_strided_slice %317 {offsets = [0, 256], sizes = [8, 128], strides = [1, 1]} : vector<8x384xf32> to vector<8x128xf32>
    %322 = vector.extract_strided_slice %317 {offsets = [0, 128], sizes = [8, 128], strides = [1, 1]} : vector<8x384xf32> to vector<8x128xf32>
    %323 = arith.mulf %322, %278 : vector<8x128xf32>
    %324 = arith.mulf %320, %319 : vector<8x128xf32>
    %325 = arith.addf %323, %324 : vector<8x128xf32>
    %326 = math.tanh %325 : vector<8x128xf32>
    %327 = arith.mulf %321, %326 : vector<8x128xf32>
    %328 = vector.extract_strided_slice %10 {offsets = [56, 0], sizes = [8, 512], strides = [1, 1]} : vector<64x512xf32> to vector<8x512xf32>
    %329 = arith.truncf %302 : vector<8x128xf32> to vector<8x128xbf16>
    %cst_74 = arith.constant dense<0.000000e+00> : vector<8x512xf32>
    %330 = tpu.matmul %329, %0, %cst_74 {dimension_numbers = #tpu.dot_dimension_numbers<[1], [0], [0], [1], [0, 0, 1, 1], [], []>} : vector<8x128xbf16>, vector<128x512xbf16>, vector<8x512xf32> -> vector<8x512xf32>
    %331 = arith.addf %328, %330 : vector<8x512xf32>
    %332 = vector.extract_strided_slice %331 {offsets = [0, 0], sizes = [8, 384], strides = [1, 1]} : vector<8x512xf32> to vector<8x384xf32>
    %cst_75 = arith.constant 5.000000e-01 : f32
    %333 = vector.broadcast %cst_75 : f32 to vector<8x384xf32>
    %334 = arith.mulf %333, %332 : vector<8x384xf32>
    %335 = math.tanh %334 : vector<8x384xf32>
    %cst_76 = arith.constant 5.000000e-01 : f32
    %336 = vector.broadcast %cst_76 : f32 to vector<8x384xf32>
    %337 = arith.mulf %336, %335 : vector<8x384xf32>
    %cst_77 = arith.constant 5.000000e-01 : f32
    %338 = vector.broadcast %cst_77 : f32 to vector<8x384xf32>
    %339 = arith.addf %337, %338 : vector<8x384xf32>
    %340 = vector.extract_strided_slice %331 {offsets = [0, 384], sizes = [8, 128], strides = [1, 1]} : vector<8x512xf32> to vector<8x128xf32>
    %341 = math.tanh %340 : vector<8x128xf32>
    %342 = vector.extract_strided_slice %339 {offsets = [0, 0], sizes = [8, 128], strides = [1, 1]} : vector<8x384xf32> to vector<8x128xf32>
    %343 = vector.extract_strided_slice %339 {offsets = [0, 256], sizes = [8, 128], strides = [1, 1]} : vector<8x384xf32> to vector<8x128xf32>
    %344 = vector.extract_strided_slice %339 {offsets = [0, 128], sizes = [8, 128], strides = [1, 1]} : vector<8x384xf32> to vector<8x128xf32>
    %345 = arith.mulf %344, %300 : vector<8x128xf32>
    %346 = arith.mulf %342, %341 : vector<8x128xf32>
    %347 = arith.addf %345, %346 : vector<8x128xf32>
    %348 = math.tanh %347 : vector<8x128xf32>
    %349 = arith.mulf %343, %348 : vector<8x128xf32>
    %350 = arith.truncf %349 : vector<8x128xf32> to vector<8x128xbf16>
    %cst_78 = arith.constant dense<0.000000e+00> : vector<8x512xf32>
    %351 = tpu.matmul %350, %2, %cst_78 {dimension_numbers = #tpu.dot_dimension_numbers<[1], [0], [0], [1], [0, 0, 1, 1], [], []>} : vector<8x128xbf16>, vector<128x512xbf16>, vector<8x512xf32> -> vector<8x512xf32>
    %352 = vector.broadcast %4 : vector<1x512xf32> to vector<8x512xf32>
    %353 = arith.addf %351, %352 : vector<8x512xf32>
    %354 = arith.truncf %327 : vector<8x128xf32> to vector<8x128xbf16>
    %cst_79 = arith.constant dense<0.000000e+00> : vector<8x512xf32>
    %355 = tpu.matmul %354, %1, %cst_79 {dimension_numbers = #tpu.dot_dimension_numbers<[1], [0], [0], [1], [0, 0, 1, 1], [], []>} : vector<8x128xbf16>, vector<128x512xbf16>, vector<8x512xf32> -> vector<8x512xf32>
    %356 = arith.addf %353, %355 : vector<8x512xf32>
    %357 = vector.extract_strided_slice %356 {offsets = [0, 0], sizes = [8, 384], strides = [1, 1]} : vector<8x512xf32> to vector<8x384xf32>
    %cst_80 = arith.constant 5.000000e-01 : f32
    %358 = vector.broadcast %cst_80 : f32 to vector<8x384xf32>
    %359 = arith.mulf %358, %357 : vector<8x384xf32>
    %360 = math.tanh %359 : vector<8x384xf32>
    %cst_81 = arith.constant 5.000000e-01 : f32
    %361 = vector.broadcast %cst_81 : f32 to vector<8x384xf32>
    %362 = arith.mulf %361, %360 : vector<8x384xf32>
    %cst_82 = arith.constant 5.000000e-01 : f32
    %363 = vector.broadcast %cst_82 : f32 to vector<8x384xf32>
    %364 = arith.addf %362, %363 : vector<8x384xf32>
    %365 = vector.extract_strided_slice %356 {offsets = [0, 384], sizes = [8, 128], strides = [1, 1]} : vector<8x512xf32> to vector<8x128xf32>
    %366 = math.tanh %365 : vector<8x128xf32>
    %367 = vector.extract_strided_slice %364 {offsets = [0, 0], sizes = [8, 128], strides = [1, 1]} : vector<8x384xf32> to vector<8x128xf32>
    %368 = vector.extract_strided_slice %364 {offsets = [0, 256], sizes = [8, 128], strides = [1, 1]} : vector<8x384xf32> to vector<8x128xf32>
    %369 = vector.extract_strided_slice %364 {offsets = [0, 128], sizes = [8, 128], strides = [1, 1]} : vector<8x384xf32> to vector<8x128xf32>
    %370 = arith.mulf %369, %325 : vector<8x128xf32>
    %371 = arith.mulf %367, %366 : vector<8x128xf32>
    %372 = arith.addf %370, %371 : vector<8x128xf32>
    %373 = math.tanh %372 : vector<8x128xf32>
    %374 = arith.mulf %368, %373 : vector<8x128xf32>
    %375 = arith.truncf %374 : vector<8x128xf32> to vector<8x128xbf16>
    %c0_83 = arith.constant 0 : index
    %c0_84 = arith.constant 0 : index
    %376 = vector.load %arg7[%c0_83, %c0_84] : memref<128x64xbf16, #tpu.memory_space<vmem>>, vector<128x64xbf16>
    %cst_85 = arith.constant dense<0.000000e+00> : vector<8x64xf32>
    %377 = tpu.matmul %375, %376, %cst_85 {dimension_numbers = #tpu.dot_dimension_numbers<[1], [0], [0], [1], [0, 0, 1, 1], [], []>} : vector<8x128xbf16>, vector<128x64xbf16>, vector<8x64xf32> -> vector<8x64xf32>
    %c0_86 = arith.constant 0 : index
    %c0_87 = arith.constant 0 : index
    %378 = vector.load %arg8[%c0_86, %c0_87] : memref<1x64xf32, #tpu.memory_space<vmem>>, vector<1x64xf32>
    %379 = vector.broadcast %378 : vector<1x64xf32> to vector<8x64xf32>
    %380 = arith.addf %377, %379 : vector<8x64xf32>
    %cst_88 = arith.constant 0.000000e+00 : f32
    %381 = vector.broadcast %cst_88 : f32 to vector<8x64xf32>
    %382 = arith.maximumf %380, %381 : vector<8x64xf32>
    %383 = arith.truncf %382 : vector<8x64xf32> to vector<8x64xbf16>
    %c0_89 = arith.constant 0 : index
    %c0_90 = arith.constant 0 : index
    %384 = vector.load %arg9[%c0_89, %c0_90] : memref<64x10xbf16, #tpu.memory_space<vmem>>, vector<64x10xbf16>
    %cst_91 = arith.constant dense<0.000000e+00> : vector<8x10xf32>
    %385 = tpu.matmul %383, %384, %cst_91 {dimension_numbers = #tpu.dot_dimension_numbers<[1], [0], [0], [1], [0, 0, 1, 1], [], []>} : vector<8x64xbf16>, vector<64x10xbf16>, vector<8x10xf32> -> vector<8x10xf32>
    %c0_92 = arith.constant 0 : index
    %c0_93 = arith.constant 0 : index
    %386 = vector.load %arg10[%c0_92, %c0_93] : memref<1x10xf32, #tpu.memory_space<vmem>>, vector<1x10xf32>
    %387 = vector.broadcast %386 : vector<1x10xf32> to vector<8x10xf32>
    %388 = arith.addf %385, %387 : vector<8x10xf32>
    %c0_94 = arith.constant 0 : index
    %c0_95 = arith.constant 0 : index
    %389 = vector.load %arg11[%c0_94, %c0_95] : memref<8x10xf32, #tpu.memory_space<vmem>>, vector<8x10xf32>
    tpu.vector_store %arg11[%c0_94, %c0_95], %388 {strides = array<i32>} : memref<8x10xf32, #tpu.memory_space<vmem>>, vector<8x10xf32>,
    return
  }
}

</mosaic_0001>

<llo_original>
// kernel: tpu_custom_call.1
$region0: #{tpu_custom_call.1}
  #allocation0 [shape = 'u32[]', space=smem, size = 0x4, offset = 0x4, fixed_abs, tag = 'smem constant byte address 0x4 - core index']
  #allocation1 [shape = 'u32[144,128]{1,0:T(1,128)}', space=vmem, size = 0x12000, scoped, tag = 'internal scratch']
  %s0 = inlined_call_operand.vmem [shape: f32[64,10], index: 0, kind: input, shape index: {}]
  %s1 = inlined_call_operand.vmem [shape: bf16[10,512], index: 1, kind: input, shape index: {}]
  %s2 = inlined_call_operand.hbm [shape: bf16[128,512], index: 2, kind: input, shape index: {}]
  %s3 = inlined_call_operand.vmem [shape: f32[1,512], index: 3, kind: input, shape index: {}]
  %s4 = inlined_call_operand.hbm [shape: bf16[128,512], index: 4, kind: input, shape index: {}]
  %s5 = inlined_call_operand.hbm [shape: bf16[128,512], index: 5, kind: input, shape index: {}]
  %s6 = inlined_call_operand.vmem [shape: f32[1,512], index: 6, kind: input, shape index: {}]
  %s7 = inlined_call_operand.vmem [shape: bf16[128,64], index: 7, kind: input, shape index: {}]
  %s8 = inlined_call_operand.vmem [shape: f32[1,64], index: 8, kind: input, shape index: {}]
  %s9 = inlined_call_operand.vmem [shape: bf16[64,10], index: 9, kind: input, shape index: {}]
  %s10 = inlined_call_operand.vmem [shape: f32[1,10], index: 10, kind: input, shape index: {}]
  %s11 = inlined_call_operand.hbm [shape: f32[8,10], index: 11, kind: output, shape index: {}]
  %s12 = sld [smem:[#allocation0]]
  $region66: #{tpu_custom_call.1} parent=0
    _
  %s14 = ssub.s32 1, %s12
  %s15 = scalar_select 0, %s14, %s12
  $region1: #{tpu_custom_call.1} parent=0
    #allocation2 [shape = 'u8[131072]{0}', space=vmem, size = 0x20000, scoped, tag = 'input window, operand 2, single buffered']
    #allocation3 [shape = 's32[1]{0}', space=sflag, size = 0x4, scoped, tag = 'scoped memory for tpu_custom_call.1']
    #allocation4 [shape = 's32[1]{0}', space=sflag, size = 0x4, scoped, tag = 'scoped memory for tpu_custom_call.1']
    #allocation5 [shape = 'u8[131072]{0}', space=vmem, size = 0x20000, scoped, tag = 'input window, operand 4, single buffered']
    #allocation6 [shape = 's32[1]{0}', space=sflag, size = 0x4, scoped, tag = 'scoped memory for tpu_custom_call.1']
    #allocation7 [shape = 'u8[131072]{0}', space=vmem, size = 0x20000, scoped, tag = 'input window, operand 5, single buffered']
    #allocation8 [shape = 'u8[4096]{0}', space=vmem, size = 0x1000, scoped, tag = 'output window, operand 0, single buffered']
    %16 = vsyncpa [#allocation3], 0
    %17 = vsyncpa [#allocation6], 0
    %18 = vsyncpa [#allocation4], 0
    // Predicated region
    $region2: #{tpu_custom_call.1} parent=1 // pred_check
      _
    $region3: #{tpu_custom_call.1} parent=1 // pred_check_branch
      %20 = sbr.rel (0) target = $region5
    $region4: #{tpu_custom_call.1} parent=1 // pred_region
      _
    $region5: #{tpu_custom_call.1} parent=1 // pred_fallthru
      _
    // Predicated region
    $region6: #{tpu_custom_call.1} parent=1 // pred_check
      _
    $region7: #{tpu_custom_call.1} parent=1 // pred_check_branch
      %22 = sbr.rel (0) target = $region9
    $region8: #{tpu_custom_call.1} parent=1 // pred_region
      _
    $region9: #{tpu_custom_call.1} parent=1 // pred_fallthru
      _
    // Predicated region
    $region10: #{tpu_custom_call.1} parent=1 // pred_check
      _
    $region11: #{tpu_custom_call.1} parent=1 // pred_check_branch
      %24 = sbr.rel (0) target = $region13
    $region12: #{tpu_custom_call.1} parent=1 // pred_region
      %s26 = ssub.s32 4096, 4096
      %27 = vsyncadd [#allocation3], %s26
      %s28 = sshll.u32 [#allocation2], 4
      %s29 = int_to_ptr.vmem [resolvable:$true] %s28
      %34 = dma.hbm_to_vmem [thread:$0]  %s2, 4096, %s29, [#allocation3], 256, 256, 16
    $region13: #{tpu_custom_call.1} parent=1 // pred_fallthru
      _
    // Predicated region
    $region14: #{tpu_custom_call.1} parent=1 // pred_check
      _
    $region15: #{tpu_custom_call.1} parent=1 // pred_check_branch
      %36 = sbr.rel (0) target = $region17
    $region16: #{tpu_custom_call.1} parent=1 // pred_region
      _
    $region17: #{tpu_custom_call.1} parent=1 // pred_fallthru
      _
    // Predicated region
    $region18: #{tpu_custom_call.1} parent=1 // pred_check
      _
    $region19: #{tpu_custom_call.1} parent=1 // pred_check_branch
      %38 = sbr.rel (0) target = $region21
    $region20: #{tpu_custom_call.1} parent=1 // pred_region
      %s40 = ssub.s32 4096, 4096
      %41 = vsyncadd [#allocation6], %s40
      %s42 = sshll.u32 [#allocation5], 4
      %s43 = int_to_ptr.vmem [resolvable:$true] %s42
      %48 = dma.hbm_to_vmem [thread:$0]  %s4, 4096, %s43, [#allocation6], 256, 256, 16
    $region21: #{tpu_custom_call.1} parent=1 // pred_fallthru
      _
    // Predicated region
    $region22: #{tpu_custom_call.1} parent=1 // pred_check
      _
    $region23: #{tpu_custom_call.1} parent=1 // pred_check_branch
      %50 = sbr.rel (0) target = $region25
    $region24: #{tpu_custom_call.1} parent=1 // pred_region
      %s52 = ssub.s32 4096, 4096
      %53 = vsyncadd [#allocation6], %s52
      %s54 = sshll.u32 [#allocation7], 4
      %s55 = int_to_ptr.vmem [resolvable:$true] %s54
      %60 = dma.hbm_to_vmem [thread:$0]  %s5, 4096, %s55, [#allocation6], 256, 256, 16
    $region25: #{tpu_custom_call.1} parent=1 // pred_fallthru
      _
    // Predicated region
    $region26: #{tpu_custom_call.1} parent=1 // pred_check
      _
    $region27: #{tpu_custom_call.1} parent=1 // pred_check_branch
      %62 = sbr.rel (0) target = $region29
    $region28: #{tpu_custom_call.1} parent=1 // pred_region
      _
    $region29: #{tpu_custom_call.1} parent=1 // pred_fallthru
      _
    // Predicated region
    $region30: #{tpu_custom_call.1} parent=1 // pred_check
      _
    $region31: #{tpu_custom_call.1} parent=1 // pred_check_branch
      %64 = sbr.rel (0) target = $region33
    $region32: #{tpu_custom_call.1} parent=1 // pred_region
      _
    $region33: #{tpu_custom_call.1} parent=1 // pred_fallthru
      _
    // Predicated region
    $region34: #{tpu_custom_call.1} parent=1 // pred_check
      _
    $region35: #{tpu_custom_call.1} parent=1 // pred_check_branch
      %66 = sbr.rel (0) target = $region37
    $region36: #{tpu_custom_call.1} parent=1 // pred_region
      _
    $region37: #{tpu_custom_call.1} parent=1 // pred_fallthru
      _
    // Predicated region
    $region38: #{tpu_custom_call.1} parent=1 // pred_check
      _
    $region39: #{tpu_custom_call.1} parent=1 // pred_check_branch
      %68 = sbr.rel (0) target = $region41
    $region40: #{tpu_custom_call.1} parent=1 // pred_region
      _
    $region41: #{tpu_custom_call.1} parent=1 // pred_fallthru
      _
    // Predicated region
    $region42: #{tpu_custom_call.1} parent=1 // pred_check
      _
    $region43: #{tpu_custom_call.1} parent=1 // pred_check_branch
      %70 = sbr.rel (0) target = $region45
    $region44: #{tpu_custom_call.1} parent=1 // pred_region
      _
    $region45: #{tpu_custom_call.1} parent=1 // pred_fallthru
      _
    // Predicated region
    $region46: #{tpu_custom_call.1} parent=1 // pred_check
      _
    $region47: #{tpu_custom_call.1} parent=1 // pred_check_branch
      %72 = sbr.rel (0) target = $region49
    $region48: #{tpu_custom_call.1} parent=1 // pred_region
      %73 = dma.done [#allocation3], 4096
    $region49: #{tpu_custom_call.1} parent=1 // pred_fallthru
      _
    // Predicated region
    $region50: #{tpu_custom_call.1} parent=1 // pred_check
      _
    $region51: #{tpu_custom_call.1} parent=1 // pred_check_branch
      %75 = sbr.rel (0) target = $region53
    $region52: #{tpu_custom_call.1} parent=1 // pred_region
      %76 = dma.done [#allocation6], 4096
    $region53: #{tpu_custom_call.1} parent=1 // pred_fallthru
      _
    // Predicated region
    $region54: #{tpu_custom_call.1} parent=1 // pred_check
      _
    $region55: #{tpu_custom_call.1} parent=1 // pred_check_branch
      %78 = sbr.rel (0) target = $region57
    $region56: #{tpu_custom_call.1} parent=1 // pred_region
      %79 = dma.done [#allocation6], 4096
    $region57: #{tpu_custom_call.1} parent=1 // pred_fallthru
      _
    %v81 = vld [vmem:[#allocation2] sm:$0xff]
    %v82 = vld [vmem:[#allocation2 + $0x8] sm:$0xff]
    %v83 = vld [vmem:[#allocation2 + $0x10] sm:$0xff]
    %v84 = vld [vmem:[#allocation2 + $0x18] sm:$0xff]
    %v85 = vld [vmem:[#allocation2 + $0x20] sm:$0xff]
    %v86 = vld [vmem:[#allocation2 + $0x28] sm:$0xff]
    %v87 = vld [vmem:[#allocation2 + $0x30] sm:$0xff]
    %v88 = vld [vmem:[#allocation2 + $0x38] sm:$0xff]
    %v89 = vld [vmem:[#allocation2 + $0x40] sm:$0xff]
    %v90 = vld [vmem:[#allocation2 + $0x48] sm:$0xff]
    %v91 = vld [vmem:[#allocation2 + $0x50] sm:$0xff]
    %v92 = vld [vmem:[#allocation2 + $0x58] sm:$0xff]
    %v93 = vld [vmem:[#allocation2 + $0x60] sm:$0xff]
    %v94 = vld [vmem:[#allocation2 + $0x68] sm:$0xff]
    %v95 = vld [vmem:[#allocation2 + $0x70] sm:$0xff]
    %v96 = vld [vmem:[#allocation2 + $0x78] sm:$0xff]
    %v97 = vld [vmem:[#allocation2 + $0x80] sm:$0xff]
    %v98 = vld [vmem:[#allocation2 + $0x88] sm:$0xff]
    %v99 = vld [vmem:[#allocation2 + $0x90] sm:$0xff]
    %v100 = vld [vmem:[#allocation2 + $0x98] sm:$0xff]
    %v101 = vld [vmem:[#allocation2 + $0xa0] sm:$0xff]
    %v102 = vld [vmem:[#allocation2 + $0xa8] sm:$0xff]
    %v103 = vld [vmem:[#allocation2 + $0xb0] sm:$0xff]
    %v104 = vld [vmem:[#allocation2 + $0xb8] sm:$0xff]
    %v105 = vld [vmem:[#allocation2 + $0xc0] sm:$0xff]
    %v106 = vld [vmem:[#allocation2 + $0xc8] sm:$0xff]
    %v107 = vld [vmem:[#allocation2 + $0xd0] sm:$0xff]
    %v108 = vld [vmem:[#allocation2 + $0xd8] sm:$0xff]
    %v109 = vld [vmem:[#allocation2 + $0xe0] sm:$0xff]
    %v110 = vld [vmem:[#allocation2 + $0xe8] sm:$0xff]
    %v111 = vld [vmem:[#allocation2 + $0xf0] sm:$0xff]
    %v112 = vld [vmem:[#allocation2 + $0xf8] sm:$0xff]
    %v113 = vld [vmem:[#allocation7] sm:$0xff]
    %v114 = vld [vmem:[#allocation7 + $0x8] sm:$0xff]
    %v115 = vld [vmem:[#allocation7 + $0x10] sm:$0xff]
    %v116 = vld [vmem:[#allocation7 + $0x18] sm:$0xff]
    %v117 = vld [vmem:[#allocation7 + $0x20] sm:$0xff]
    %v118 = vld [vmem:[#allocation7 + $0x28] sm:$0xff]
    %v119 = vld [vmem:[#allocation7 + $0x30] sm:$0xff]
    %v120 = vld [vmem:[#allocation7 + $0x38] sm:$0xff]
    %v121 = vld [vmem:[#allocation7 + $0x40] sm:$0xff]
    %v122 = vld [vmem:[#allocation7 + $0x48] sm:$0xff]
    %v123 = vld [vmem:[#allocation7 + $0x50] sm:$0xff]
    %v124 = vld [vmem:[#allocation7 + $0x58] sm:$0xff]
    %v125 = vld [vmem:[#allocation7 + $0x60] sm:$0xff]
    %v126 = vld [vmem:[#allocation7 + $0x68] sm:$0xff]
    %v127 = vld [vmem:[#allocation7 + $0x70] sm:$0xff]
    %v128 = vld [vmem:[#allocation7 + $0x78] sm:$0xff]
    %v129 = vld [vmem:[#allocation7 + $0x80] sm:$0xff]
    %v130 = vld [vmem:[#allocation7 + $0x88] sm:$0xff]
    %v131 = vld [vmem:[#allocation7 + $0x90] sm:$0xff]
    %v132 = vld [vmem:[#allocation7 + $0x98] sm:$0xff]
    %v133 = vld [vmem:[#allocation7 + $0xa0] sm:$0xff]
    %v134 = vld [vmem:[#allocation7 + $0xa8] sm:$0xff]
    %v135 = vld [vmem:[#allocation7 + $0xb0] sm:$0xff]
    %v136 = vld [vmem:[#allocation7 + $0xb8] sm:$0xff]
    %v137 = vld [vmem:[#allocation7 + $0xc0] sm:$0xff]
    %v138 = vld [vmem:[#allocation7 + $0xc8] sm:$0xff]
    %v139 = vld [vmem:[#allocation7 + $0xd0] sm:$0xff]
    %v140 = vld [vmem:[#allocation7 + $0xd8] sm:$0xff]
    %v141 = vld [vmem:[#allocation7 + $0xe0] sm:$0xff]
    %v142 = vld [vmem:[#allocation7 + $0xe8] sm:$0xff]
    %v143 = vld [vmem:[#allocation7 + $0xf0] sm:$0xff]
    %v144 = vld [vmem:[#allocation7 + $0xf8] sm:$0xff]
    %v145 = vld [vmem:[#allocation5] sm:$0xff]
    %v146 = vld [vmem:[#allocation5 + $0x8] sm:$0xff]
    %v147 = vld [vmem:[#allocation5 + $0x10] sm:$0xff]
    %v148 = vld [vmem:[#allocation5 + $0x18] sm:$0xff]
    %v149 = vld [vmem:[#allocation5 + $0x20] sm:$0xff]
    %v150 = vld [vmem:[#allocation5 + $0x28] sm:$0xff]
    %v151 = vld [vmem:[#allocation5 + $0x30] sm:$0xff]
    %v152 = vld [vmem:[#allocation5 + $0x38] sm:$0xff]
    %v153 = vld [vmem:[#allocation5 + $0x40] sm:$0xff]
    %v154 = vld [vmem:[#allocation5 + $0x48] sm:$0xff]
    %v155 = vld [vmem:[#allocation5 + $0x50] sm:$0xff]
    %v156 = vld [vmem:[#allocation5 + $0x58] sm:$0xff]
    %v157 = vld [vmem:[#allocation5 + $0x60] sm:$0xff]
    %v158 = vld [vmem:[#allocation5 + $0x68] sm:$0xff]
    %v159 = vld [vmem:[#allocation5 + $0x70] sm:$0xff]
    %v160 = vld [vmem:[#allocation5 + $0x78] sm:$0xff]
    %v161 = vld [vmem:[#allocation5 + $0x80] sm:$0xff]
    %v162 = vld [vmem:[#allocation5 + $0x88] sm:$0xff]
    %v163 = vld [vmem:[#allocation5 + $0x90] sm:$0xff]
    %v164 = vld [vmem:[#allocation5 + $0x98] sm:$0xff]
    %v165 = vld [vmem:[#allocation5 + $0xa0] sm:$0xff]
    %v166 = vld [vmem:[#allocation5 + $0xa8] sm:$0xff]
    %v167 = vld [vmem:[#allocation5 + $0xb0] sm:$0xff]
    %v168 = vld [vmem:[#allocation5 + $0xb8] sm:$0xff]
    %v169 = vld [vmem:[#allocation5 + $0xc0] sm:$0xff]
    %v170 = vld [vmem:[#allocation5 + $0xc8] sm:$0xff]
    %v171 = vld [vmem:[#allocation5 + $0xd0] sm:$0xff]
    %v172 = vld [vmem:[#allocation5 + $0xd8] sm:$0xff]
    %v173 = vld [vmem:[#allocation5 + $0xe0] sm:$0xff]
    %v174 = vld [vmem:[#allocation5 + $0xe8] sm:$0xff]
    %v175 = vld [vmem:[#allocation5 + $0xf0] sm:$0xff]
    %v176 = vld [vmem:[#allocation5 + $0xf8] sm:$0xff]
    %v177 = vld [vmem:[%s3] sm:$0xf]
    %v178 = vld [vmem:[%s6] sm:$0xf]
    %v179 = vld [vmem:[%s0] sm:$0xff]
    %v180 = vld [vmem:[%s0 + $0x8] sm:$0xff]
    %v181 = vld [vmem:[%s0 + $0x10] sm:$0xff]
    %v182 = vld [vmem:[%s0 + $0x18] sm:$0xff]
    %v183 = vld [vmem:[%s0 + $0x20] sm:$0xff]
    %v184 = vld [vmem:[%s0 + $0x28] sm:$0xff]
    %v185 = vld [vmem:[%s0 + $0x30] sm:$0xff]
    %v186 = vld [vmem:[%s0 + $0x38] sm:$0xff]
    %v187 = vpack.c.bf16 %v180, %v179
    %v188 = vpack.c.bf16 %v182, %v181
    %v189 = vpack.c.bf16 %v184, %v183
    %v190 = vpack.c.bf16 %v186, %v185
    %v191 = vld [vmem:[%s1] sm:$0xff]
    %v192 = vld [vmem:[%s1 + $0x8] sm:$0xff]
    %v193 = vld [vmem:[%s1 + $0x10] sm:$0x11]
    %v194 = vld [vmem:[%s1 + $0x18] sm:$0x11]
    %v196 = vlaneseq
    %v197 = vshrl.u32 %v196, 7
    %v198 = vsub.s32 0, %v197
    %v199 = vrot.slane %v177, %v198
    %v200 = vlaneseq
    %v201 = vshrl.u32 %v200, 7
    %v202 = vsub.s32 1, %v201
    %v203 = vrot.slane %v177, %v202
    %v204 = vlaneseq
    %v205 = vshrl.u32 %v204, 7
    %v206 = vsub.s32 2, %v205
    %v207 = vrot.slane %v177, %v206
    %v208 = vlaneseq
    %v209 = vshrl.u32 %v208, 7
    %v210 = vsub.s32 3, %v209
    %v211 = vrot.slane %v177, %v210
    %v220 = vunpack.c.l.b16 %v191
    %v221 = vunpack.c.h.b16 %v191
    %v222 = vunpack.c.l.b16 %v192
    %v223 = vunpack.c.h.b16 %v192
    %v224 = vunpack.c.l.b16 %v193
    %v225 = vunpack.c.h.b16 %v193
    %v226 = vunpack.c.l.b16 %v194
    %v227 = vunpack.c.h.b16 %v194
    %v228 = vpack.c.b16 %v224, %v220
    %v229 = vpack.c.b16 %v225, %v221
    %v230 = vpack.c.b16 %v226, %v222
    %v231 = vpack.c.b16 %v227, %v223
    %vm232 = vcmask 80896
    %v234 = vsel %vm232, %v187, 0
    %v237 = vsel %vm232, %v188, 0
    %v240 = vsel %vm232, %v189, 0
    %v243 = vsel %vm232, %v190, 0
    %vm245 = vcmask 1044480
    %v247 = vsel %vm245, %v228, 0
    %v250 = vsel %vm245, %v229, 0
    %v253 = vsel %vm245, %v230, 0
    %v256 = vsel %vm245, %v231, 0
    %258 = vmatprep.subr.bf16.mxu0 %v250
    %259 = vmatpush1.bf16.msra.mxu0 %v247
    %260 = vmatprep.subr.bf16.mxu0 0
    %261 = vmatpush1.bf16.msra.mxu0 0
    %262 = vmatprep.subr.bf16.mxu0 0
    %263 = vmatpush1.bf16.msra.mxu0 0
    %264 = vmatprep.subr.bf16.mxu0 0
    %265 = vmatpush1.bf16.msra.mxu0 0
    %266 = vmatprep.subr.bf16.mxu0 0
    %267 = vmatpush1.bf16.msra.mxu0 0
    %268 = vmatprep.subr.bf16.mxu0 0
    %269 = vmatpush1.bf16.msra.mxu0 0
    %270 = vmatprep.subr.bf16.mxu0 0
    %271 = vmatpush1.bf16.msra.mxu0 0
    %272 = vmatprep.subr.bf16.mxu0 0
    %273 = vmatpush1.bf16.msra.mxu0 0
    %274 = vmatprep.subr.bf16.mxu0 0
    %275 = vmatpush1.bf16.msra.mxu0 0
    %276 = vmatprep.subr.bf16.mxu0 0
    %277 = vmatpush1.bf16.msra.mxu0 0
    %278 = vmatprep.subr.bf16.mxu0 0
    %279 = vmatpush1.bf16.msra.mxu0 0
    %280 = vmatprep.subr.bf16.mxu0 0
    %281 = vmatpush1.bf16.msra.mxu0 0
    %282 = vmatprep.subr.bf16.mxu0 0
    %283 = vmatpush1.bf16.msra.mxu0 0
    %284 = vmatprep.subr.bf16.mxu0 0
    %285 = vmatpush1.bf16.msra.mxu0 0
    %286 = vmatprep.subr.bf16.mxu0 0
    %287 = vmatpush1.bf16.msra.mxu0 0
    %288 = vmatprep.subr.bf16.mxu0 0
    %289 = vmatpush1.bf16.msra.mxu0 0
    %290 = vmatprep.mubr.bf16.mxu0 0
    %291 = vmatmul.mubr.bf16.gmra.mrb[0].mxu0 %v234
    %v292 = vpop.f32.mrb[0].mxu0
    %v293 = vadd.f32 %v199, %v292
    %v294 = vpop.f32.mrb[0].mxu0
    %v295 = vpop.f32.mrb[0].mxu0
    %v296 = vadd.f32 %v199, %v295
    %v297 = vpop.f32.mrb[0].mxu0
    %v298 = vadd.f32 %v203, %v297
    %299 = vmatprep.mubr.bf16.mxu0 0
    %300 = vmatmul.mubr.bf16.gmra.mrb[0].mxu0 %v237
    %v301 = vpop.f32.mrb[0].mxu0
    %v302 = vadd.f32 %v199, %v301
    %v303 = vpop.f32.mrb[0].mxu0
    %v304 = vadd.f32 %v203, %v303
    %v305 = vpop.f32.mrb[0].mxu0
    %v306 = vadd.f32 %v199, %v305
    %v307 = vpop.f32.mrb[0].mxu0
    %v308 = vadd.f32 %v203, %v307
    %309 = vmatprep.mubr.bf16.mxu0 0
    %310 = vmatmul.mubr.bf16.gmra.mrb[0].mxu0 %v240
    %v311 = vpop.f32.mrb[0].mxu0
    %v312 = vadd.f32 %v199, %v311
    %v313 = vpop.f32.mrb[0].mxu0
    %v314 = vadd.f32 %v203, %v313
    %v315 = vpop.f32.mrb[0].mxu0
    %v316 = vadd.f32 %v199, %v315
    %v317 = vpop.f32.mrb[0].mxu0
    %v318 = vadd.f32 %v203, %v317
    %319 = vmatprep.mubr.bf16.mxu0 0
    %320 = vmatmul.mubr.bf16.gmra.mrb[0].mxu0 %v243
    %v321 = vpop.f32.mrb[0].mxu0
    %v322 = vadd.f32 %v199, %v321
    %v323 = vpop.f32.mrb[0].mxu0
    %v324 = vadd.f32 %v203, %v323
    %v325 = vpop.f32.mrb[0].mxu0
    %v326 = vadd.f32 %v199, %v325
    %v327 = vpop.f32.mrb[0].mxu0
    %v328 = vadd.f32 %v203, %v327
    %329 = vdwg.mxu0
    %330 = vmatprep.subr.bf16.mxu0 %v256
    %331 = vmatpush1.bf16.msra.mxu0 %v253
    %332 = vmatprep.subr.bf16.mxu0 0
    %333 = vmatpush1.bf16.msra.mxu0 0
    %334 = vmatprep.subr.bf16.mxu0 0
    %335 = vmatpush1.bf16.msra.mxu0 0
    %336 = vmatprep.subr.bf16.mxu0 0
    %337 = vmatpush1.bf16.msra.mxu0 0
    %338 = vmatprep.subr.bf16.mxu0 0
    %339 = vmatpush1.bf16.msra.mxu0 0
    %340 = vmatprep.subr.bf16.mxu0 0
    %341 = vmatpush1.bf16.msra.mxu0 0
    %342 = vmatprep.subr.bf16.mxu0 0
    %343 = vmatpush1.bf16.msra.mxu0 0
    %344 = vmatprep.subr.bf16.mxu0 0
    %345 = vmatpush1.bf16.msra.mxu0 0
    %346 = vmatprep.subr.bf16.mxu0 0
    %347 = vmatpush1.bf16.msra.mxu0 0
    %348 = vmatprep.subr.bf16.mxu0 0
    %349 = vmatpush1.bf16.msra.mxu0 0
    %350 = vmatprep.subr.bf16.mxu0 0
    %351 = vmatpush1.bf16.msra.mxu0 0
    %352 = vmatprep.subr.bf16.mxu0 0
    %353 = vmatpush1.bf16.msra.mxu0 0
    %354 = vmatprep.subr.bf16.mxu0 0
    %355 = vmatpush1.bf16.msra.mxu0 0
    %356 = vmatprep.subr.bf16.mxu0 0
    %357 = vmatpush1.bf16.msra.mxu0 0
    %358 = vmatprep.subr.bf16.mxu0 0
    %359 = vmatpush1.bf16.msra.mxu0 0
    %360 = vmatprep.subr.bf16.mxu0 0
    %361 = vmatpush1.bf16.msra.mxu0 0
    %362 = vmatprep.mubr.bf16.mxu0 0
    %363 = vmatmul.mubr.bf16.gmra.mrb[0].mxu0 %v234
    %v364 = vpop.f32.mrb[0].mxu0
    %v365 = vadd.f32 %v207, %v364
    %v366 = vpop.f32.mrb[0].mxu0
    %v367 = vadd.f32 %v211, %v366
    %v368 = vpop.f32.mrb[0].mxu0
    %v369 = vadd.f32 %v207, %v368
    %v370 = vpop.f32.mrb[0].mxu0
    %v371 = vadd.f32 %v211, %v370
    %372 = vmatprep.mubr.bf16.mxu0 0
    %373 = vmatmul.mubr.bf16.gmra.mrb[0].mxu0 %v237
    %v374 = vpop.f32.mrb[0].mxu0
    %v375 = vadd.f32 %v207, %v374
    %v376 = vpop.f32.mrb[0].mxu0
    %v377 = vadd.f32 %v211, %v376
    %v378 = vpop.f32.mrb[0].mxu0
    %v379 = vadd.f32 %v207, %v378
    %v380 = vpop.f32.mrb[0].mxu0
    %v381 = vadd.f32 %v211, %v380
    %382 = vmatprep.mubr.bf16.mxu0 0
    %383 = vmatmul.mubr.bf16.gmra.mrb[0].mxu0 %v240
    %v384 = vpop.f32.mrb[0].mxu0
    %v385 = vadd.f32 %v207, %v384
    %v386 = vpop.f32.mrb[0].mxu0
    %v387 = vadd.f32 %v211, %v386
    %v388 = vpop.f32.mrb[0].mxu0
    %v389 = vadd.f32 %v207, %v388
    %v390 = vpop.f32.mrb[0].mxu0
    %v391 = vadd.f32 %v211, %v390
    %392 = vmatprep.mubr.bf16.mxu0 0
    %393 = vmatmul.mubr.bf16.gmra.mrb[0].mxu0 %v243
    %v394 = vpop.f32.mrb[0].mxu0
    %v395 = vadd.f32 %v207, %v394
    %v396 = vpop.f32.mrb[0].mxu0
    %v397 = vadd.f32 %v211, %v396
    %v398 = vpop.f32.mrb[0].mxu0
    %v399 = vadd.f32 %v207, %v398
    %v400 = vpop.f32.mrb[0].mxu0
    %v401 = vadd.f32 %v211, %v400
    %402 = vdwg.mxu0
    %v403 = vmul.f32 %v293, 0.5
    %v404 = vmul.f32 %v365, 0.5
    %v405 = vtanh.pop %v403
    %v406 = vtanh.pop %v404
    %v407 = vmul.f32 %v405, 0.5
    %v408 = vmul.f32 %v406, 0.5
    %v409 = vadd.f32 %v407, 0.5
    %v410 = vadd.f32 %v408, 0.5
    %v411 = vtanh.pop %v367
    %v412 = vmul.f32 %v409, %v411
    %v413 = vtanh.pop %v412
    %v414 = vmul.f32 %v410, %v413
    %v415 = vpack.c.bf16 %v414, %v414
    %v417 = vlaneseq
    %v418 = vshrl.u32 %v417, 7
    %v419 = vsub.s32 0, %v418
    %v420 = vrot.slane %v178, %v419
    %v421 = vlaneseq
    %v422 = vshrl.u32 %v421, 7
    %v423 = vsub.s32 1, %v422
    %v424 = vrot.slane %v178, %v423
    %v425 = vlaneseq
    %v426 = vshrl.u32 %v425, 7
    %v427 = vsub.s32 2, %v426
    %v428 = vrot.slane %v178, %v427
    %v429 = vlaneseq
    %v430 = vshrl.u32 %v429, 7
    %v431 = vsub.s32 3, %v430
    %v432 = vrot.slane %v178, %v431
    %v469 = vunpack.c.l.b16 %v145
    %v470 = vunpack.c.h.b16 %v145
    %v471 = vunpack.c.l.b16 %v146
    %v472 = vunpack.c.h.b16 %v146
    %v473 = vunpack.c.l.b16 %v147
    %v474 = vunpack.c.h.b16 %v147
    %v475 = vunpack.c.l.b16 %v148
    %v476 = vunpack.c.h.b16 %v148
    %v477 = vunpack.c.l.b16 %v149
    %v478 = vunpack.c.h.b16 %v149
    %v479 = vunpack.c.l.b16 %v150
    %v480 = vunpack.c.h.b16 %v150
    %v481 = vunpack.c.l.b16 %v151
    %v482 = vunpack.c.h.b16 %v151
    %v483 = vunpack.c.l.b16 %v152
    %v484 = vunpack.c.h.b16 %v152
    %v485 = vunpack.c.l.b16 %v153
    %v486 = vunpack.c.h.b16 %v153
    %v487 = vunpack.c.l.b16 %v154
    %v488 = vunpack.c.h.b16 %v154
    %v489 = vunpack.c.l.b16 %v155
    %v490 = vunpack.c.h.b16 %v155
    %v491 = vunpack.c.l.b16 %v156
    %v492 = vunpack.c.h.b16 %v156
    %v493 = vunpack.c.l.b16 %v157
    %v494 = vunpack.c.h.b16 %v157
    %v495 = vunpack.c.l.b16 %v158
    %v496 = vunpack.c.h.b16 %v158
    %v497 = vunpack.c.l.b16 %v159
    %v498 = vunpack.c.h.b16 %v159
    %v499 = vunpack.c.l.b16 %v160
    %v500 = vunpack.c.h.b16 %v160
    %v501 = vunpack.c.l.b16 %v161
    %v502 = vunpack.c.h.b16 %v161
    %v503 = vunpack.c.l.b16 %v162
    %v504 = vunpack.c.h.b16 %v162
    %v505 = vunpack.c.l.b16 %v163
    %v506 = vunpack.c.h.b16 %v163
    %v507 = vunpack.c.l.b16 %v164
    %v508 = vunpack.c.h.b16 %v164
    %v509 = vunpack.c.l.b16 %v165
    %v510 = vunpack.c.h.b16 %v165
    %v511 = vunpack.c.l.b16 %v166
    %v512 = vunpack.c.h.b16 %v166
    %v513 = vunpack.c.l.b16 %v167
    %v514 = vunpack.c.h.b16 %v167
    %v515 = vunpack.c.l.b16 %v168
    %v516 = vunpack.c.h.b16 %v168
    %v517 = vunpack.c.l.b16 %v169
    %v518 = vunpack.c.h.b16 %v169
    %v519 = vunpack.c.l.b16 %v170
    %v520 = vunpack.c.h.b16 %v170
    %v521 = vunpack.c.l.b16 %v171
    %v522 = vunpack.c.h.b16 %v171
    %v523 = vunpack.c.l.b16 %v172
    %v524 = vunpack.c.h.b16 %v172
    %v525 = vunpack.c.l.b16 %v173
    %v526 = vunpack.c.h.b16 %v173
    %v527 = vunpack.c.l.b16 %v174
    %v528 = vunpack.c.h.b16 %v174
    %v529 = vunpack.c.l.b16 %v175
    %v530 = vunpack.c.h.b16 %v175
    %v531 = vunpack.c.l.b16 %v176
    %v532 = vunpack.c.h.b16 %v176
    %v533 = vpack.c.b16 %v473, %v469
    %v534 = vpack.c.b16 %v474, %v470
    %v535 = vpack.c.b16 %v475, %v471
    %v536 = vpack.c.b16 %v476, %v472
    %v537 = vpack.c.b16 %v481, %v477
    %v538 = vpack.c.b16 %v482, %v478
    %v539 = vpack.c.b16 %v483, %v479
    %v540 = vpack.c.b16 %v484, %v480
    %v541 = vpack.c.b16 %v489, %v485
    %v542 = vpack.c.b16 %v490, %v486
    %v543 = vpack.c.b16 %v491, %v487
    %v544 = vpack.c.b16 %v492, %v488
    %v545 = vpack.c.b16 %v497, %v493
    %v546 = vpack.c.b16 %v498, %v494
    %v547 = vpack.c.b16 %v499, %v495
    %v548 = vpack.c.b16 %v500, %v496
    %v549 = vpack.c.b16 %v505, %v501
    %v550 = vpack.c.b16 %v506, %v502
    %v551 = vpack.c.b16 %v507, %v503
    %v552 = vpack.c.b16 %v508, %v504
    %v553 = vpack.c.b16 %v513, %v509
    %v554 = vpack.c.b16 %v514, %v510
    %v555 = vpack.c.b16 %v515, %v511
    %v556 = vpack.c.b16 %v516, %v512
    %v557 = vpack.c.b16 %v521, %v517
    %v558 = vpack.c.b16 %v522, %v518
    %v559 = vpack.c.b16 %v523, %v519
    %v560 = vpack.c.b16 %v524, %v520
    %v561 = vpack.c.b16 %v529, %v525
    %v562 = vpack.c.b16 %v530, %v526
    %v563 = vpack.c.b16 %v531, %v527
    %v564 = vpack.c.b16 %v532, %v528
    %597 = vmatprep.subr.bf16.mxu0 %v534
    %598 = vmatpush1.bf16.msra.mxu0 %v533
    %599 = vmatprep.subr.bf16.mxu0 %v538
    %600 = vmatpush1.bf16.msra.mxu0 %v537
    %601 = vmatprep.subr.bf16.mxu0 %v542
    %602 = vmatpush1.bf16.msra.mxu0 %v541
    %603 = vmatprep.subr.bf16.mxu0 %v546
    %604 = vmatpush1.bf16.msra.mxu0 %v545
    %605 = vmatprep.subr.bf16.mxu0 %v550
    %606 = vmatpush1.bf16.msra.mxu0 %v549
    %607 = vmatprep.subr.bf16.mxu0 %v554
    %608 = vmatpush1.bf16.msra.mxu0 %v553
    %609 = vmatprep.subr.bf16.mxu0 %v558
    %610 = vmatpush1.bf16.msra.mxu0 %v557
    %611 = vmatprep.subr.bf16.mxu0 %v562
    %612 = vmatpush1.bf16.msra.mxu0 %v561
    %613 = vmatprep.subr.bf16.mxu0 0
    %614 = vmatpush1.bf16.msra.mxu0 0
    %615 = vmatprep.subr.bf16.mxu0 0
    %616 = vmatpush1.bf16.msra.mxu0 0
    %617 = vmatprep.subr.bf16.mxu0 0
    %618 = vmatpush1.bf16.msra.mxu0 0
    %619 = vmatprep.subr.bf16.mxu0 0
    %620 = vmatpush1.bf16.msra.mxu0 0
    %621 = vmatprep.subr.bf16.mxu0 0
    %622 = vmatpush1.bf16.msra.mxu0 0
    %623 = vmatprep.subr.bf16.mxu0 0
    %624 = vmatpush1.bf16.msra.mxu0 0
    %625 = vmatprep.subr.bf16.mxu0 0
    %626 = vmatpush1.bf16.msra.mxu0 0
    %627 = vmatprep.subr.bf16.mxu0 0
    %628 = vmatpush1.bf16.msra.mxu0 0
    %629 = vmatprep.mubr.bf16.mxu0 0
    %630 = vmatmul.mubr.bf16.gmra.mrb[0].mxu0 %v415
    %v631 = vpop.f32.mrb[0].mxu0
    %v632 = vadd.f32 %v420, %v631
    %v633 = vpop.f32.mrb[0].mxu0
    %v634 = vpop.f32.mrb[0].mxu0
    %v635 = vpop.f32.mrb[0].mxu0
    %636 = vdwg.mxu0
    %637 = vmatprep.subr.bf16.mxu0 %v536
    %638 = vmatpush1.bf16.msra.mxu0 %v535
    %639 = vmatprep.subr.bf16.mxu0 %v540
    %640 = vmatpush1.bf16.msra.mxu0 %v539
    %641 = vmatprep.subr.bf16.mxu0 %v544
    %642 = vmatpush1.bf16.msra.mxu0 %v543
    %643 = vmatprep.subr.bf16.mxu0 %v548
    %644 = vmatpush1.bf16.msra.mxu0 %v547
    %645 = vmatprep.subr.bf16.mxu0 %v552
    %646 = vmatpush1.bf16.msra.mxu0 %v551
    %647 = vmatprep.subr.bf16.mxu0 %v556
    %648 = vmatpush1.bf16.msra.mxu0 %v555
    %649 = vmatprep.subr.bf16.mxu0 %v560
    %650 = vmatpush1.bf16.msra.mxu0 %v559
    %651 = vmatprep.subr.bf16.mxu0 %v564
    %652 = vmatpush1.bf16.msra.mxu0 %v563
    %653 = vmatprep.subr.bf16.mxu0 0
    %654 = vmatpush1.bf16.msra.mxu0 0
    %655 = vmatprep.subr.bf16.mxu0 0
    %656 = vmatpush1.bf16.msra.mxu0 0
    %657 = vmatprep.subr.bf16.mxu0 0
    %658 = vmatpush1.bf16.msra.mxu0 0
    %659 = vmatprep.subr.bf16.mxu0 0
    %660 = vmatpush1.bf16.msra.mxu0 0
    %661 = vmatprep.subr.bf16.mxu0 0
    %662 = vmatpush1.bf16.msra.mxu0 0
    %663 = vmatprep.subr.bf16.mxu0 0
    %664 = vmatpush1.bf16.msra.mxu0 0
    %665 = vmatprep.subr.bf16.mxu0 0
    %666 = vmatpush1.bf16.msra.mxu0 0
    %667 = vmatprep.subr.bf16.mxu0 0
    %668 = vmatpush1.bf16.msra.mxu0 0
    %669 = vmatprep.mubr.bf16.mxu0 0
    %670 = vmatmul.mubr.bf16.gmra.mrb[0].mxu0 %v415
    %v671 = vpop.f32.mrb[0].mxu0
    %v672 = vadd.f32 %v428, %v671
    %v673 = vpop.f32.mrb[0].mxu0
    %v674 = vadd.f32 %v432, %v673
    %v675 = vpop.f32.mrb[0].mxu0
    %v676 = vpop.f32.mrb[0].mxu0
    %677 = vdwg.mxu0
    %v678 = vmul.f32 %v632, 0.5
    %v679 = vmul.f32 %v672, 0.5
    %v680 = vtanh.pop %v678
    %v681 = vtanh.pop %v679
    %v682 = vmul.f32 %v680, 0.5
    %v683 = vmul.f32 %v681, 0.5
    %v684 = vadd.f32 %v682, 0.5
    %v685 = vadd.f32 %v683, 0.5
    %v686 = vtanh.pop %v674
    %v687 = vmul.f32 %v684, %v686
    %v688 = vtanh.pop %v687
    %v689 = vmul.f32 %v685, %v688
    %v722 = vunpack.c.l.b16 %v81
    %v723 = vunpack.c.h.b16 %v81
    %v724 = vunpack.c.l.b16 %v82
    %v725 = vunpack.c.h.b16 %v82
    %v726 = vunpack.c.l.b16 %v83
    %v727 = vunpack.c.h.b16 %v83
    %v728 = vunpack.c.l.b16 %v84
    %v729 = vunpack.c.h.b16 %v84
    %v730 = vunpack.c.l.b16 %v85
    %v731 = vunpack.c.h.b16 %v85
    %v732 = vunpack.c.l.b16 %v86
    %v733 = vunpack.c.h.b16 %v86
    %v734 = vunpack.c.l.b16 %v87
    %v735 = vunpack.c.h.b16 %v87
    %v736 = vunpack.c.l.b16 %v88
    %v737 = vunpack.c.h.b16 %v88
    %v738 = vunpack.c.l.b16 %v89
    %v739 = vunpack.c.h.b16 %v89
    %v740 = vunpack.c.l.b16 %v90
    %v741 = vunpack.c.h.b16 %v90
    %v742 = vunpack.c.l.b16 %v91
    %v743 = vunpack.c.h.b16 %v91
    %v744 = vunpack.c.l.b16 %v92
    %v745 = vunpack.c.h.b16 %v92
    %v746 = vunpack.c.l.b16 %v93
    %v747 = vunpack.c.h.b16 %v93
    %v748 = vunpack.c.l.b16 %v94
    %v749 = vunpack.c.h.b16 %v94
    %v750 = vunpack.c.l.b16 %v95
    %v751 = vunpack.c.h.b16 %v95
    %v752 = vunpack.c.l.b16 %v96
    %v753 = vunpack.c.h.b16 %v96
    %v754 = vunpack.c.l.b16 %v97
    %v755 = vunpack.c.h.b16 %v97
    %v756 = vunpack.c.l.b16 %v98
    %v757 = vunpack.c.h.b16 %v98
    %v758 = vunpack.c.l.b16 %v99
    %v759 = vunpack.c.h.b16 %v99
    %v760 = vunpack.c.l.b16 %v100
    %v761 = vunpack.c.h.b16 %v100
    %v762 = vunpack.c.l.b16 %v101
    %v763 = vunpack.c.h.b16 %v101
    %v764 = vunpack.c.l.b16 %v102
    %v765 = vunpack.c.h.b16 %v102
    %v766 = vunpack.c.l.b16 %v103
    %v767 = vunpack.c.h.b16 %v103
    %v768 = vunpack.c.l.b16 %v104
    %v769 = vunpack.c.h.b16 %v104
    %v770 = vunpack.c.l.b16 %v105
    %v771 = vunpack.c.h.b16 %v105
    %v772 = vunpack.c.l.b16 %v106
    %v773 = vunpack.c.h.b16 %v106
    %v774 = vunpack.c.l.b16 %v107
    %v775 = vunpack.c.h.b16 %v107
    %v776 = vunpack.c.l.b16 %v108
    %v777 = vunpack.c.h.b16 %v108
    %v778 = vunpack.c.l.b16 %v109
    %v779 = vunpack.c.h.b16 %v109
    %v780 = vunpack.c.l.b16 %v110
    %v781 = vunpack.c.h.b16 %v110
    %v782 = vunpack.c.l.b16 %v111
    %v783 = vunpack.c.h.b16 %v111
    %v784 = vunpack.c.l.b16 %v112
    %v785 = vunpack.c.h.b16 %v112
    %v786 = vpack.c.b16 %v726, %v722
    %v787 = vpack.c.b16 %v727, %v723
    %v788 = vpack.c.b16 %v728, %v724
    %v789 = vpack.c.b16 %v729, %v725
    %v790 = vpack.c.b16 %v734, %v730
    %v791 = vpack.c.b16 %v735, %v731
    %v792 = vpack.c.b16 %v736, %v732
    %v793 = vpack.c.b16 %v737, %v733
    %v794 = vpack.c.b16 %v742, %v738
    %v795 = vpack.c.b16 %v743, %v739
    %v796 = vpack.c.b16 %v744, %v740
    %v797 = vpack.c.b16 %v745, %v741
    %v798 = vpack.c.b16 %v750, %v746
    %v799 = vpack.c.b16 %v751, %v747
    %v800 = vpack.c.b16 %v752, %v748
    %v801 = vpack.c.b16 %v753, %v749
    %v802 = vpack.c.b16 %v758, %v754
    %v803 = vpack.c.b16 %v759, %v755
    %v804 = vpack.c.b16 %v760, %v756
    %v805 = vpack.c.b16 %v761, %v757
    %v806 = vpack.c.b16 %v766, %v762
    %v807 = vpack.c.b16 %v767, %v763
    %v808 = vpack.c.b16 %v768, %v764
    %v809 = vpack.c.b16 %v769, %v765
    %v810 = vpack.c.b16 %v774, %v770
    %v811 = vpack.c.b16 %v775, %v771
    %v812 = vpack.c.b16 %v776, %v772
    %v813 = vpack.c.b16 %v777, %v773
    %v814 = vpack.c.b16 %v782, %v778
    %v815 = vpack.c.b16 %v783, %v779
    %v816 = vpack.c.b16 %v784, %v780
    %v817 = vpack.c.b16 %v785, %v781
    %850 = vmatprep.subr.bf16.mxu0 %v787
    %851 = vmatpush1.bf16.msra.mxu0 %v786
    %852 = vmatprep.subr.bf16.mxu0 %v791
    %853 = vmatpush1.bf16.msra.mxu0 %v790
    %854 = vmatprep.subr.bf16.mxu0 %v795
    %855 = vmatpush1.bf16.msra.mxu0 %v794
    %856 = vmatprep.subr.bf16.mxu0 %v799
    %857 = vmatpush1.bf16.msra.mxu0 %v798
    %858 = vmatprep.subr.bf16.mxu0 %v803
    %859 = vmatpush1.bf16.msra.mxu0 %v802
    %860 = vmatprep.subr.bf16.mxu0 %v807
    %861 = vmatpush1.bf16.msra.mxu0 %v806
    %862 = vmatprep.subr.bf16.mxu0 %v811
    %863 = vmatpush1.bf16.msra.mxu0 %v810
    %864 = vmatprep.subr.bf16.mxu0 %v815
    %865 = vmatpush1.bf16.msra.mxu0 %v814
    %866 = vmatprep.subr.bf16.mxu0 0
    %867 = vmatpush1.bf16.msra.mxu0 0
    %868 = vmatprep.subr.bf16.mxu0 0
    %869 = vmatpush1.bf16.msra.mxu0 0
    %870 = vmatprep.subr.bf16.mxu0 0
    %871 = vmatpush1.bf16.msra.mxu0 0
    %872 = vmatprep.subr.bf16.mxu0 0
    %873 = vmatpush1.bf16.msra.mxu0 0
    %874 = vmatprep.subr.bf16.mxu0 0
    %875 = vmatpush1.bf16.msra.mxu0 0
    %876 = vmatprep.subr.bf16.mxu0 0
    %877 = vmatpush1.bf16.msra.mxu0 0
    %878 = vmatprep.subr.bf16.mxu0 0
    %879 = vmatpush1.bf16.msra.mxu0 0
    %880 = vmatprep.subr.bf16.mxu0 0
    %881 = vmatpush1.bf16.msra.mxu0 0
    %882 = vmatprep.mubr.bf16.mxu0 0
    %883 = vmatmul.mubr.bf16.gmra.mrb[0].mxu0 %v415
    %v884 = vpop.f32.mrb[0].mxu0
    %v885 = vadd.f32 0.0, %v884
    %v886 = vpop.f32.mrb[0].mxu0
    %v887 = vadd.f32 0.0, %v886
    %v888 = vpop.f32.mrb[0].mxu0
    %v889 = vpop.f32.mrb[0].mxu0
    %890 = vdwg.mxu0
    %891 = vmatprep.subr.bf16.mxu0 %v789
    %892 = vmatpush1.bf16.msra.mxu0 %v788
    %893 = vmatprep.subr.bf16.mxu0 %v793
    %894 = vmatpush1.bf16.msra.mxu0 %v792
    %895 = vmatprep.subr.bf16.mxu0 %v797
    %896 = vmatpush1.bf16.msra.mxu0 %v796
    %897 = vmatprep.subr.bf16.mxu0 %v801
    %898 = vmatpush1.bf16.msra.mxu0 %v800
    %899 = vmatprep.subr.bf16.mxu0 %v805
    %900 = vmatpush1.bf16.msra.mxu0 %v804
    %901 = vmatprep.subr.bf16.mxu0 %v809
    %902 = vmatpush1.bf16.msra.mxu0 %v808
    %903 = vmatprep.subr.bf16.mxu0 %v813
    %904 = vmatpush1.bf16.msra.mxu0 %v812
    %905 = vmatprep.subr.bf16.mxu0 %v817
    %906 = vmatpush1.bf16.msra.mxu0 %v816
    %907 = vmatprep.subr.bf16.mxu0 0
    %908 = vmatpush1.bf16.msra.mxu0 0
    %909 = vmatprep.subr.bf16.mxu0 0
    %910 = vmatpush1.bf16.msra.mxu0 0
    %911 = vmatprep.subr.bf16.mxu0 0
    %912 = vmatpush1.bf16.msra.mxu0 0
    %913 = vmatprep.subr.bf16.mxu0 0
    %914 = vmatpush1.bf16.msra.mxu0 0
    %915 = vmatprep.subr.bf16.mxu0 0
    %916 = vmatpush1.bf16.msra.mxu0 0
    %917 = vmatprep.subr.bf16.mxu0 0
    %918 = vmatpush1.bf16.msra.mxu0 0
    %919 = vmatprep.subr.bf16.mxu0 0
    %920 = vmatpush1.bf16.msra.mxu0 0
    %921 = vmatprep.subr.bf16.mxu0 0
    %922 = vmatpush1.bf16.msra.mxu0 0
    %923 = vmatprep.mubr.bf16.mxu0 0
    %924 = vmatmul.mubr.bf16.gmra.mrb[0].mxu0 %v415
    %v925 = vpop.f32.mrb[0].mxu0
    %v926 = vadd.f32 0.0, %v925
    %v927 = vpop.f32.mrb[0].mxu0
    %v928 = vadd.f32 0.0, %v927
    %v929 = vpop.f32.mrb[0].mxu0
    %v930 = vpop.f32.mrb[0].mxu0
    %931 = vdwg.mxu0
    %v932 = vadd.f32 %v296, %v885
    %v933 = vadd.f32 %v298, %v887
    %v934 = vadd.f32 %v369, %v926
    %v935 = vadd.f32 %v371, %v928
    %v936 = vmul.f32 %v932, 0.5
    %v937 = vmul.f32 %v933, 0.5
    %v938 = vmul.f32 %v934, 0.5
    %v939 = vtanh.pop %v936
    %v940 = vtanh.pop %v937
    %v941 = vtanh.pop %v938
    %v942 = vmul.f32 %v939, 0.5
    %v943 = vmul.f32 %v940, 0.5
    %v944 = vmul.f32 %v941, 0.5
    %v945 = vadd.f32 %v942, 0.5
    %v946 = vadd.f32 %v943, 0.5
    %v947 = vadd.f32 %v944, 0.5
    %v948 = vtanh.pop %v935
    %v949 = vmul.f32 %v946, %v412
    %v950 = vmul.f32 %v945, %v948
    %v951 = vadd.f32 %v949, %v950
    %v952 = vtanh.pop %v951
    %v953 = vmul.f32 %v947, %v952
    %v954 = vpack.c.bf16 %v953, %v953
    %955 = vmatprep.subr.bf16.mxu0 %v534
    %956 = vmatpush1.bf16.msra.mxu0 %v533
    %957 = vmatprep.subr.bf16.mxu0 %v538
    %958 = vmatpush1.bf16.msra.mxu0 %v537
    %959 = vmatprep.subr.bf16.mxu0 %v542
    %960 = vmatpush1.bf16.msra.mxu0 %v541
    %961 = vmatprep.subr.bf16.mxu0 %v546
    %962 = vmatpush1.bf16.msra.mxu0 %v545
    %963 = vmatprep.subr.bf16.mxu0 %v550
    %964 = vmatpush1.bf16.msra.mxu0 %v549
    %965 = vmatprep.subr.bf16.mxu0 %v554
    %966 = vmatpush1.bf16.msra.mxu0 %v553
    %967 = vmatprep.subr.bf16.mxu0 %v558
    %968 = vmatpush1.bf16.msra.mxu0 %v557
    %969 = vmatprep.subr.bf16.mxu0 %v562
    %970 = vmatpush1.bf16.msra.mxu0 %v561
    %971 = vmatprep.subr.bf16.mxu0 0
    %972 = vmatpush1.bf16.msra.mxu0 0
    %973 = vmatprep.subr.bf16.mxu0 0
    %974 = vmatpush1.bf16.msra.mxu0 0
    %975 = vmatprep.subr.bf16.mxu0 0
    %976 = vmatpush1.bf16.msra.mxu0 0
    %977 = vmatprep.subr.bf16.mxu0 0
    %978 = vmatpush1.bf16.msra.mxu0 0
    %979 = vmatprep.subr.bf16.mxu0 0
    %980 = vmatpush1.bf16.msra.mxu0 0
    %981 = vmatprep.subr.bf16.mxu0 0
    %982 = vmatpush1.bf16.msra.mxu0 0
    %983 = vmatprep.subr.bf16.mxu0 0
    %984 = vmatpush1.bf16.msra.mxu0 0
    %985 = vmatprep.subr.bf16.mxu0 0
    %986 = vmatpush1.bf16.msra.mxu0 0
    %987 = vmatprep.mubr.bf16.mxu0 0
    %988 = vmatmul.mubr.bf16.gmra.mrb[0].mxu0 %v954
    %v989 = vpop.f32.mrb[0].mxu0
    %v990 = vadd.f32 %v420, %v989
    %v991 = vpop.f32.mrb[0].mxu0
    %v992 = vadd.f32 %v424, %v991
    %v993 = vpop.f32.mrb[0].mxu0
    %v994 = vpop.f32.mrb[0].mxu0
    %995 = vdwg.mxu0
    %996 = vmatprep.subr.bf16.mxu0 %v536
    %997 = vmatpush1.bf16.msra.mxu0 %v535
    %998 = vmatprep.subr.bf16.mxu0 %v540
    %999 = vmatpush1.bf16.msra.mxu0 %v539
    %1000 = vmatprep.subr.bf16.mxu0 %v544
    %1001 = vmatpush1.bf16.msra.mxu0 %v543
    %1002 = vmatprep.subr.bf16.mxu0 %v548
    %1003 = vmatpush1.bf16.msra.mxu0 %v547
    %1004 = vmatprep.subr.bf16.mxu0 %v552
    %1005 = vmatpush1.bf16.msra.mxu0 %v551
    %1006 = vmatprep.subr.bf16.mxu0 %v556
    %1007 = vmatpush1.bf16.msra.mxu0 %v555
    %1008 = vmatprep.subr.bf16.mxu0 %v560
    %1009 = vmatpush1.bf16.msra.mxu0 %v559
    %1010 = vmatprep.subr.bf16.mxu0 %v564
    %1011 = vmatpush1.bf16.msra.mxu0 %v563
    %1012 = vmatprep.subr.bf16.mxu0 0
    %1013 = vmatpush1.bf16.msra.mxu0 0
    %1014 = vmatprep.subr.bf16.mxu0 0
    %1015 = vmatpush1.bf16.msra.mxu0 0
    %1016 = vmatprep.subr.bf16.mxu0 0
    %1017 = vmatpush1.bf16.msra.mxu0 0
    %1018 = vmatprep.subr.bf16.mxu0 0
    %1019 = vmatpush1.bf16.msra.mxu0 0
    %1020 = vmatprep.subr.bf16.mxu0 0
    %1021 = vmatpush1.bf16.msra.mxu0 0
    %1022 = vmatprep.subr.bf16.mxu0 0
    %1023 = vmatpush1.bf16.msra.mxu0 0
    %1024 = vmatprep.subr.bf16.mxu0 0
    %1025 = vmatpush1.bf16.msra.mxu0 0
    %1026 = vmatprep.subr.bf16.mxu0 0
    %1027 = vmatpush1.bf16.msra.mxu0 0
    %1028 = vmatprep.mubr.bf16.mxu0 0
    %1029 = vmatmul.mubr.bf16.gmra.mrb[0].mxu0 %v954
    %v1030 = vpop.f32.mrb[0].mxu0
    %v1031 = vadd.f32 %v428, %v1030
    %v1032 = vpop.f32.mrb[0].mxu0
    %v1033 = vadd.f32 %v432, %v1032
    %v1034 = vpop.f32.mrb[0].mxu0
    %v1035 = vpop.f32.mrb[0].mxu0
    %1036 = vdwg.mxu0
    %v1037 = vpack.c.bf16 %v689, %v689
    %v1070 = vunpack.c.l.b16 %v113
    %v1071 = vunpack.c.h.b16 %v113
    %v1072 = vunpack.c.l.b16 %v114
    %v1073 = vunpack.c.h.b16 %v114
    %v1074 = vunpack.c.l.b16 %v115
    %v1075 = vunpack.c.h.b16 %v115
    %v1076 = vunpack.c.l.b16 %v116
    %v1077 = vunpack.c.h.b16 %v116
    %v1078 = vunpack.c.l.b16 %v117
    %v1079 = vunpack.c.h.b16 %v117
    %v1080 = vunpack.c.l.b16 %v118
    %v1081 = vunpack.c.h.b16 %v118
    %v1082 = vunpack.c.l.b16 %v119
    %v1083 = vunpack.c.h.b16 %v119
    %v1084 = vunpack.c.l.b16 %v120
    %v1085 = vunpack.c.h.b16 %v120
    %v1086 = vunpack.c.l.b16 %v121
    %v1087 = vunpack.c.h.b16 %v121
    %v1088 = vunpack.c.l.b16 %v122
    %v1089 = vunpack.c.h.b16 %v122
    %v1090 = vunpack.c.l.b16 %v123
    %v1091 = vunpack.c.h.b16 %v123
    %v1092 = vunpack.c.l.b16 %v124
    %v1093 = vunpack.c.h.b16 %v124
    %v1094 = vunpack.c.l.b16 %v125
    %v1095 = vunpack.c.h.b16 %v125
    %v1096 = vunpack.c.l.b16 %v126
    %v1097 = vunpack.c.h.b16 %v126
    %v1098 = vunpack.c.l.b16 %v127
    %v1099 = vunpack.c.h.b16 %v127
    %v1100 = vunpack.c.l.b16 %v128
    %v1101 = vunpack.c.h.b16 %v128
    %v1102 = vunpack.c.l.b16 %v129
    %v1103 = vunpack.c.h.b16 %v129
    %v1104 = vunpack.c.l.b16 %v130
    %v1105 = vunpack.c.h.b16 %v130
    %v1106 = vunpack.c.l.b16 %v131
    %v1107 = vunpack.c.h.b16 %v131
    %v1108 = vunpack.c.l.b16 %v132
    %v1109 = vunpack.c.h.b16 %v132
    %v1110 = vunpack.c.l.b16 %v133
    %v1111 = vunpack.c.h.b16 %v133
    %v1112 = vunpack.c.l.b16 %v134
    %v1113 = vunpack.c.h.b16 %v134
    %v1114 = vunpack.c.l.b16 %v135
    %v1115 = vunpack.c.h.b16 %v135
    %v1116 = vunpack.c.l.b16 %v136
    %v1117 = vunpack.c.h.b16 %v136
    %v1118 = vunpack.c.l.b16 %v137
    %v1119 = vunpack.c.h.b16 %v137
    %v1120 = vunpack.c.l.b16 %v138
    %v1121 = vunpack.c.h.b16 %v138
    %v1122 = vunpack.c.l.b16 %v139
    %v1123 = vunpack.c.h.b16 %v139
    %v1124 = vunpack.c.l.b16 %v140
    %v1125 = vunpack.c.h.b16 %v140
    %v1126 = vunpack.c.l.b16 %v141
    %v1127 = vunpack.c.h.b16 %v141
    %v1128 = vunpack.c.l.b16 %v142
    %v1129 = vunpack.c.h.b16 %v142
    %v1130 = vunpack.c.l.b16 %v143
    %v1131 = vunpack.c.h.b16 %v143
    %v1132 = vunpack.c.l.b16 %v144
    %v1133 = vunpack.c.h.b16 %v144
    %v1134 = vpack.c.b16 %v1074, %v1070
    %v1135 = vpack.c.b16 %v1075, %v1071
    %v1136 = vpack.c.b16 %v1076, %v1072
    %v1137 = vpack.c.b16 %v1077, %v1073
    %v1138 = vpack.c.b16 %v1082, %v1078
    %v1139 = vpack.c.b16 %v1083, %v1079
    %v1140 = vpack.c.b16 %v1084, %v1080
    %v1141 = vpack.c.b16 %v1085, %v1081
    %v1142 = vpack.c.b16 %v1090, %v1086
    %v1143 = vpack.c.b16 %v1091, %v1087
    %v1144 = vpack.c.b16 %v1092, %v1088
    %v1145 = vpack.c.b16 %v1093, %v1089
    %v1146 = vpack.c.b16 %v1098, %v1094
    %v1147 = vpack.c.b16 %v1099, %v1095
    %v1148 = vpack.c.b16 %v1100, %v1096
    %v1149 = vpack.c.b16 %v1101, %v1097
    %v1150 = vpack.c.b16 %v1106, %v1102
    %v1151 = vpack.c.b16 %v1107, %v1103
    %v1152 = vpack.c.b16 %v1108, %v1104
    %v1153 = vpack.c.b16 %v1109, %v1105
    %v1154 = vpack.c.b16 %v1114, %v1110
    %v1155 = vpack.c.b16 %v1115, %v1111
    %v1156 = vpack.c.b16 %v1116, %v1112
    %v1157 = vpack.c.b16 %v1117, %v1113
    %v1158 = vpack.c.b16 %v1122, %v1118
    %v1159 = vpack.c.b16 %v1123, %v1119
    %v1160 = vpack.c.b16 %v1124, %v1120
    %v1161 = vpack.c.b16 %v1125, %v1121
    %v1162 = vpack.c.b16 %v1130, %v1126
    %v1163 = vpack.c.b16 %v1131, %v1127
    %v1164 = vpack.c.b16 %v1132, %v1128
    %v1165 = vpack.c.b16 %v1133, %v1129
    %1198 = vmatprep.subr.bf16.mxu0 %v1135
    %1199 = vmatpush1.bf16.msra.mxu0 %v1134
    %1200 = vmatprep.subr.bf16.mxu0 %v1139
    %1201 = vmatpush1.bf16.msra.mxu0 %v1138
    %1202 = vmatprep.subr.bf16.mxu0 %v1143
    %1203 = vmatpush1.bf16.msra.mxu0 %v1142
    %1204 = vmatprep.subr.bf16.mxu0 %v1147
    %1205 = vmatpush1.bf16.msra.mxu0 %v1146
    %1206 = vmatprep.subr.bf16.mxu0 %v1151
    %1207 = vmatpush1.bf16.msra.mxu0 %v1150
    %1208 = vmatprep.subr.bf16.mxu0 %v1155
    %1209 = vmatpush1.bf16.msra.mxu0 %v1154
    %1210 = vmatprep.subr.bf16.mxu0 %v1159
    %1211 = vmatpush1.bf16.msra.mxu0 %v1158
    %1212 = vmatprep.subr.bf16.mxu0 %v1163
    %1213 = vmatpush1.bf16.msra.mxu0 %v1162
    %1214 = vmatprep.subr.bf16.mxu0 0
    %1215 = vmatpush1.bf16.msra.mxu0 0
    %1216 = vmatprep.subr.bf16.mxu0 0
    %1217 = vmatpush1.bf16.msra.mxu0 0
    %1218 = vmatprep.subr.bf16.mxu0 0
    %1219 = vmatpush1.bf16.msra.mxu0 0
    %1220 = vmatprep.subr.bf16.mxu0 0
    %1221 = vmatpush1.bf16.msra.mxu0 0
    %1222 = vmatprep.subr.bf16.mxu0 0
    %1223 = vmatpush1.bf16.msra.mxu0 0
    %1224 = vmatprep.subr.bf16.mxu0 0
    %1225 = vmatpush1.bf16.msra.mxu0 0
    %1226 = vmatprep.subr.bf16.mxu0 0
    %1227 = vmatpush1.bf16.msra.mxu0 0
    %1228 = vmatprep.subr.bf16.mxu0 0
    %1229 = vmatpush1.bf16.msra.mxu0 0
    %1230 = vmatprep.mubr.bf16.mxu0 0
    %1231 = vmatmul.mubr.bf16.gmra.mrb[0].mxu0 %v1037
    %v1232 = vpop.f32.mrb[0].mxu0
    %v1233 = vadd.f32 0.0, %v1232
    %v1234 = vpop.f32.mrb[0].mxu0
    %v1235 = vadd.f32 0.0, %v1234
    %v1236 = vpop.f32.mrb[0].mxu0
    %v1237 = vpop.f32.mrb[0].mxu0
    %1238 = vdwg.mxu0
    %1239 = vmatprep.subr.bf16.mxu0 %v1137
    %1240 = vmatpush1.bf16.msra.mxu0 %v1136
    %1241 = vmatprep.subr.bf16.mxu0 %v1141
    %1242 = vmatpush1.bf16.msra.mxu0 %v1140
    %1243 = vmatprep.subr.bf16.mxu0 %v1145
    %1244 = vmatpush1.bf16.msra.mxu0 %v1144
    %1245 = vmatprep.subr.bf16.mxu0 %v1149
    %1246 = vmatpush1.bf16.msra.mxu0 %v1148
    %1247 = vmatprep.subr.bf16.mxu0 %v1153
    %1248 = vmatpush1.bf16.msra.mxu0 %v1152
    %1249 = vmatprep.subr.bf16.mxu0 %v1157
    %1250 = vmatpush1.bf16.msra.mxu0 %v1156
    %1251 = vmatprep.subr.bf16.mxu0 %v1161
    %1252 = vmatpush1.bf16.msra.mxu0 %v1160
    %1253 = vmatprep.subr.bf16.mxu0 %v1165
    %1254 = vmatpush1.bf16.msra.mxu0 %v1164
    %1255 = vmatprep.subr.bf16.mxu0 0
    %1256 = vmatpush1.bf16.msra.mxu0 0
    %1257 = vmatprep.subr.bf16.mxu0 0
    %1258 = vmatpush1.bf16.msra.mxu0 0
    %1259 = vmatprep.subr.bf16.mxu0 0
    %1260 = vmatpush1.bf16.msra.mxu0 0
    %1261 = vmatprep.subr.bf16.mxu0 0
    %1262 = vmatpush1.bf16.msra.mxu0 0
    %1263 = vmatprep.subr.bf16.mxu0 0
    %1264 = vmatpush1.bf16.msra.mxu0 0
    %1265 = vmatprep.subr.bf16.mxu0 0
    %1266 = vmatpush1.bf16.msra.mxu0 0
    %1267 = vmatprep.subr.bf16.mxu0 0
    %1268 = vmatpush1.bf16.msra.mxu0 0
    %1269 = vmatprep.subr.bf16.mxu0 0
    %1270 = vmatpush1.bf16.msra.mxu0 0
    %1271 = vmatprep.mubr.bf16.mxu0 0
    %1272 = vmatmul.mubr.bf16.gmra.mrb[0].mxu0 %v1037
    %v1273 = vpop.f32.mrb[0].mxu0
    %v1274 = vadd.f32 0.0, %v1273
    %v1275 = vpop.f32.mrb[0].mxu0
    %v1276 = vadd.f32 0.0, %v1275
    %v1277 = vpop.f32.mrb[0].mxu0
    %v1278 = vpop.f32.mrb[0].mxu0
    %1279 = vdwg.mxu0
    %v1280 = vadd.f32 %v990, %v1233
    %v1281 = vadd.f32 %v992, %v1235
    %v1282 = vadd.f32 %v1031, %v1274
    %v1283 = vadd.f32 %v1033, %v1276
    %v1284 = vmul.f32 %v1280, 0.5
    %v1285 = vmul.f32 %v1281, 0.5
    %v1286 = vmul.f32 %v1282, 0.5
    %v1287 = vtanh.pop %v1284
    %v1288 = vtanh.pop %v1285
    %v1289 = vtanh.pop %v1286
    %v1290 = vmul.f32 %v1287, 0.5
    %v1291 = vmul.f32 %v1288, 0.5
    %v1292 = vmul.f32 %v1289, 0.5
    %v1293 = vadd.f32 %v1290, 0.5
    %v1294 = vadd.f32 %v1291, 0.5
    %v1295 = vadd.f32 %v1292, 0.5
    %v1296 = vtanh.pop %v1283
    %v1297 = vmul.f32 %v1294, %v687
    %v1298 = vmul.f32 %v1293, %v1296
    %v1299 = vadd.f32 %v1297, %v1298
    %v1300 = vtanh.pop %v1299
    %v1301 = vmul.f32 %v1295, %v1300
    %1302 = vmatprep.subr.bf16.mxu0 %v787
    %1303 = vmatpush1.bf16.msra.mxu0 %v786
    %1304 = vmatprep.subr.bf16.mxu0 %v791
    %1305 = vmatpush1.bf16.msra.mxu0 %v790
    %1306 = vmatprep.subr.bf16.mxu0 %v795
    %1307 = vmatpush1.bf16.msra.mxu0 %v794
    %1308 = vmatprep.subr.bf16.mxu0 %v799
    %1309 = vmatpush1.bf16.msra.mxu0 %v798
    %1310 = vmatprep.subr.bf16.mxu0 %v803
    %1311 = vmatpush1.bf16.msra.mxu0 %v802
    %1312 = vmatprep.subr.bf16.mxu0 %v807
    %1313 = vmatpush1.bf16.msra.mxu0 %v806
    %1314 = vmatprep.subr.bf16.mxu0 %v811
    %1315 = vmatpush1.bf16.msra.mxu0 %v810
    %1316 = vmatprep.subr.bf16.mxu0 %v815
    %1317 = vmatpush1.bf16.msra.mxu0 %v814
    %1318 = vmatprep.subr.bf16.mxu0 0
    %1319 = vmatpush1.bf16.msra.mxu0 0
    %1320 = vmatprep.subr.bf16.mxu0 0
    %1321 = vmatpush1.bf16.msra.mxu0 0
    %1322 = vmatprep.subr.bf16.mxu0 0
    %1323 = vmatpush1.bf16.msra.mxu0 0
    %1324 = vmatprep.subr.bf16.mxu0 0
    %1325 = vmatpush1.bf16.msra.mxu0 0
    %1326 = vmatprep.subr.bf16.mxu0 0
    %1327 = vmatpush1.bf16.msra.mxu0 0
    %1328 = vmatprep.subr.bf16.mxu0 0
    %1329 = vmatpush1.bf16.msra.mxu0 0
    %1330 = vmatprep.subr.bf16.mxu0 0
    %1331 = vmatpush1.bf16.msra.mxu0 0
    %1332 = vmatprep.subr.bf16.mxu0 0
    %1333 = vmatpush1.bf16.msra.mxu0 0
    %1334 = vmatprep.mubr.bf16.mxu0 0
    %1335 = vmatmul.mubr.bf16.gmra.mrb[0].mxu0 %v954
    %v1336 = vpop.f32.mrb[0].mxu0
    %v1337 = vadd.f32 0.0, %v1336
    %v1338 = vpop.f32.mrb[0].mxu0
    %v1339 = vadd.f32 0.0, %v1338
    %v1340 = vpop.f32.mrb[0].mxu0
    %v1341 = vpop.f32.mrb[0].mxu0
    %1342 = vdwg.mxu0
    %1343 = vmatprep.subr.bf16.mxu0 %v789
    %1344 = vmatpush1.bf16.msra.mxu0 %v788
    %1345 = vmatprep.subr.bf16.mxu0 %v793
    %1346 = vmatpush1.bf16.msra.mxu0 %v792
    %1347 = vmatprep.subr.bf16.mxu0 %v797
    %1348 = vmatpush1.bf16.msra.mxu0 %v796
    %1349 = vmatprep.subr.bf16.mxu0 %v801
    %1350 = vmatpush1.bf16.msra.mxu0 %v800
    %1351 = vmatprep.subr.bf16.mxu0 %v805
    %1352 = vmatpush1.bf16.msra.mxu0 %v804
    %1353 = vmatprep.subr.bf16.mxu0 %v809
    %1354 = vmatpush1.bf16.msra.mxu0 %v808
    %1355 = vmatprep.subr.bf16.mxu0 %v813
    %1356 = vmatpush1.bf16.msra.mxu0 %v812
    %1357 = vmatprep.subr.bf16.mxu0 %v817
    %1358 = vmatpush1.bf16.msra.mxu0 %v816
    %1359 = vmatprep.subr.bf16.mxu0 0
    %1360 = vmatpush1.bf16.msra.mxu0 0
    %1361 = vmatprep.subr.bf16.mxu0 0
    %1362 = vmatpush1.bf16.msra.mxu0 0
    %1363 = vmatprep.subr.bf16.mxu0 0
    %1364 = vmatpush1.bf16.msra.mxu0 0
    %1365 = vmatprep.subr.bf16.mxu0 0
    %1366 = vmatpush1.bf16.msra.mxu0 0
    %1367 = vmatprep.subr.bf16.mxu0 0
    %1368 = vmatpush1.bf16.msra.mxu0 0
    %1369 = vmatprep.subr.bf16.mxu0 0
    %1370 = vmatpush1.bf16.msra.mxu0 0
    %1371 = vmatprep.subr.bf16.mxu0 0
    %1372 = vmatpush1.bf16.msra.mxu0 0
    %1373 = vmatprep.subr.bf16.mxu0 0
    %1374 = vmatpush1.bf16.msra.mxu0 0
    %1375 = vmatprep.mubr.bf16.mxu0 0
    %1376 = vmatmul.mubr.bf16.gmra.mrb[0].mxu0 %v954
    %v1377 = vpop.f32.mrb[0].mxu0
    %v1378 = vadd.f32 0.0, %v1377
    %v1379 = vpop.f32.mrb[0].mxu0
    %v1380 = vadd.f32 0.0, %v1379
    %v1381 = vpop.f32.mrb[0].mxu0
    %v1382 = vpop.f32.mrb[0].mxu0
    %1383 = vdwg.mxu0
    %v1384 = vadd.f32 %v302, %v1337
    %v1385 = vadd.f32 %v304, %v1339
    %v1386 = vadd.f32 %v375, %v1378
    %v1387 = vadd.f32 %v377, %v1380
    %v1388 = vmul.f32 %v1384, 0.5
    %v1389 = vmul.f32 %v1385, 0.5
    %v1390 = vmul.f32 %v1386, 0.5
    %v1391 = vtanh.pop %v1388
    %v1392 = vtanh.pop %v1389
    %v1393 = vtanh.pop %v1390
    %v1394 = vmul.f32 %v1391, 0.5
    %v1395 = vmul.f32 %v1392, 0.5
    %v1396 = vmul.f32 %v1393, 0.5
    %v1397 = vadd.f32 %v1394, 0.5
    %v1398 = vadd.f32 %v1395, 0.5
    %v1399 = vadd.f32 %v1396, 0.5
    %v1400 = vtanh.pop %v1387
    %v1401 = vmul.f32 %v1398, %v951
    %v1402 = vmul.f32 %v1397, %v1400
    %v1403 = vadd.f32 %v1401, %v1402
    %v1404 = vtanh.pop %v1403
    %v1405 = vmul.f32 %v1399, %v1404
    %v1406 = vpack.c.bf16 %v1405, %v1405
    %1407 = vmatprep.subr.bf16.mxu0 %v534
    %1408 = vmatpush1.bf16.msra.mxu0 %v533
    %1409 = vmatprep.subr.bf16.mxu0 %v538
    %1410 = vmatpush1.bf16.msra.mxu0 %v537
    %1411 = vmatprep.subr.bf16.mxu0 %v542
    %1412 = vmatpush1.bf16.msra.mxu0 %v541
    %1413 = vmatprep.subr.bf16.mxu0 %v546
    %1414 = vmatpush1.bf16.msra.mxu0 %v545
    %1415 = vmatprep.subr.bf16.mxu0 %v550
    %1416 = vmatpush1.bf16.msra.mxu0 %v549
    %1417 = vmatprep.subr.bf16.mxu0 %v554
    %1418 = vmatpush1.bf16.msra.mxu0 %v553
    %1419 = vmatprep.subr.bf16.mxu0 %v558
    %1420 = vmatpush1.bf16.msra.mxu0 %v557
    %1421 = vmatprep.subr.bf16.mxu0 %v562
    %1422 = vmatpush1.bf16.msra.mxu0 %v561
    %1423 = vmatprep.subr.bf16.mxu0 0
    %1424 = vmatpush1.bf16.msra.mxu0 0
    %1425 = vmatprep.subr.bf16.mxu0 0
    %1426 = vmatpush1.bf16.msra.mxu0 0
    %1427 = vmatprep.subr.bf16.mxu0 0
    %1428 = vmatpush1.bf16.msra.mxu0 0
    %1429 = vmatprep.subr.bf16.mxu0 0
    %1430 = vmatpush1.bf16.msra.mxu0 0
    %1431 = vmatprep.subr.bf16.mxu0 0
    %1432 = vmatpush1.bf16.msra.mxu0 0
    %1433 = vmatprep.subr.bf16.mxu0 0
    %1434 = vmatpush1.bf16.msra.mxu0 0
    %1435 = vmatprep.subr.bf16.mxu0 0
    %1436 = vmatpush1.bf16.msra.mxu0 0
    %1437 = vmatprep.subr.bf16.mxu0 0
    %1438 = vmatpush1.bf16.msra.mxu0 0
    %1439 = vmatprep.mubr.bf16.mxu0 0
    %1440 = vmatmul.mubr.bf16.gmra.mrb[0].mxu0 %v1406
    %v1441 = vpop.f32.mrb[0].mxu0
    %v1442 = vadd.f32 %v420, %v1441
    %v1443 = vpop.f32.mrb[0].mxu0
    %v1444 = vadd.f32 %v424, %v1443
    %v1445 = vpop.f32.mrb[0].mxu0
    %v1446 = vpop.f32.mrb[0].mxu0
    %1447 = vdwg.mxu0
    %1448 = vmatprep.subr.bf16.mxu0 %v536
    %1449 = vmatpush1.bf16.msra.mxu0 %v535
    %1450 = vmatprep.subr.bf16.mxu0 %v540
    %1451 = vmatpush1.bf16.msra.mxu0 %v539
    %1452 = vmatprep.subr.bf16.mxu0 %v544
    %1453 = vmatpush1.bf16.msra.mxu0 %v543
    %1454 = vmatprep.subr.bf16.mxu0 %v548
    %1455 = vmatpush1.bf16.msra.mxu0 %v547
    %1456 = vmatprep.subr.bf16.mxu0 %v552
    %1457 = vmatpush1.bf16.msra.mxu0 %v551
    %1458 = vmatprep.subr.bf16.mxu0 %v556
    %1459 = vmatpush1.bf16.msra.mxu0 %v555
    %1460 = vmatprep.subr.bf16.mxu0 %v560
    %1461 = vmatpush1.bf16.msra.mxu0 %v559
    %1462 = vmatprep.subr.bf16.mxu0 %v564
    %1463 = vmatpush1.bf16.msra.mxu0 %v563
    %1464 = vmatprep.subr.bf16.mxu0 0
    %1465 = vmatpush1.bf16.msra.mxu0 0
    %1466 = vmatprep.subr.bf16.mxu0 0
    %1467 = vmatpush1.bf16.msra.mxu0 0
    %1468 = vmatprep.subr.bf16.mxu0 0
    %1469 = vmatpush1.bf16.msra.mxu0 0
    %1470 = vmatprep.subr.bf16.mxu0 0
    %1471 = vmatpush1.bf16.msra.mxu0 0
    %1472 = vmatprep.subr.bf16.mxu0 0
    %1473 = vmatpush1.bf16.msra.mxu0 0
    %1474 = vmatprep.subr.bf16.mxu0 0
    %1475 = vmatpush1.bf16.msra.mxu0 0
    %1476 = vmatprep.subr.bf16.mxu0 0
    %1477 = vmatpush1.bf16.msra.mxu0 0
    %1478 = vmatprep.subr.bf16.mxu0 0
    %1479 = vmatpush1.bf16.msra.mxu0 0
    %1480 = vmatprep.mubr.bf16.mxu0 0
    %1481 = vmatmul.mubr.bf16.gmra.mrb[0].mxu0 %v1406
    %v1482 = vpop.f32.mrb[0].mxu0
    %v1483 = vadd.f32 %v428, %v1482
    %v1484 = vpop.f32.mrb[0].mxu0
    %v1485 = vadd.f32 %v432, %v1484
    %v1486 = vpop.f32.mrb[0].mxu0
    %v1487 = vpop.f32.mrb[0].mxu0
    %1488 = vdwg.mxu0
    %v1489 = vpack.c.bf16 %v1301, %v1301
    %1490 = vmatprep.subr.bf16.mxu0 %v1135
    %1491 = vmatpush1.bf16.msra.mxu0 %v1134
    %1492 = vmatprep.subr.bf16.mxu0 %v1139
    %1493 = vmatpush1.bf16.msra.mxu0 %v1138
    %1494 = vmatprep.subr.bf16.mxu0 %v1143
    %1495 = vmatpush1.bf16.msra.mxu0 %v1142
    %1496 = vmatprep.subr.bf16.mxu0 %v1147
    %1497 = vmatpush1.bf16.msra.mxu0 %v1146
    %1498 = vmatprep.subr.bf16.mxu0 %v1151
    %1499 = vmatpush1.bf16.msra.mxu0 %v1150
    %1500 = vmatprep.subr.bf16.mxu0 %v1155
    %1501 = vmatpush1.bf16.msra.mxu0 %v1154
    %1502 = vmatprep.subr.bf16.mxu0 %v1159
    %1503 = vmatpush1.bf16.msra.mxu0 %v1158
    %1504 = vmatprep.subr.bf16.mxu0 %v1163
    %1505 = vmatpush1.bf16.msra.mxu0 %v1162
    %1506 = vmatprep.subr.bf16.mxu0 0
    %1507 = vmatpush1.bf16.msra.mxu0 0
    %1508 = vmatprep.subr.bf16.mxu0 0
    %1509 = vmatpush1.bf16.msra.mxu0 0
    %1510 = vmatprep.subr.bf16.mxu0 0
    %1511 = vmatpush1.bf16.msra.mxu0 0
    %1512 = vmatprep.subr.bf16.mxu0 0
    %1513 = vmatpush1.bf16.msra.mxu0 0
    %1514 = vmatprep.subr.bf16.mxu0 0
    %1515 = vmatpush1.bf16.msra.mxu0 0
    %1516 = vmatprep.subr.bf16.mxu0 0
    %1517 = vmatpush1.bf16.msra.mxu0 0
    %1518 = vmatprep.subr.bf16.mxu0 0
    %1519 = vmatpush1.bf16.msra.mxu0 0
    %1520 = vmatprep.subr.bf16.mxu0 0
    %1521 = vmatpush1.bf16.msra.mxu0 0
    %1522 = vmatprep.mubr.bf16.mxu0 0
    %1523 = vmatmul.mubr.bf16.gmra.mrb[0].mxu0 %v1489
    %v1524 = vpop.f32.mrb[0].mxu0
    %v1525 = vadd.f32 0.0, %v1524
    %v1526 = vpop.f32.mrb[0].mxu0
    %v1527 = vadd.f32 0.0, %v1526
    %v1528 = vpop.f32.mrb[0].mxu0
    %v1529 = vpop.f32.mrb[0].mxu0
    %1530 = vdwg.mxu0
    %1531 = vmatprep.subr.bf16.mxu0 %v1137
    %1532 = vmatpush1.bf16.msra.mxu0 %v1136
    %1533 = vmatprep.subr.bf16.mxu0 %v1141
    %1534 = vmatpush1.bf16.msra.mxu0 %v1140
    %1535 = vmatprep.subr.bf16.mxu0 %v1145
    %1536 = vmatpush1.bf16.msra.mxu0 %v1144
    %1537 = vmatprep.subr.bf16.mxu0 %v1149
    %1538 = vmatpush1.bf16.msra.mxu0 %v1148
    %1539 = vmatprep.subr.bf16.mxu0 %v1153
    %1540 = vmatpush1.bf16.msra.mxu0 %v1152
    %1541 = vmatprep.subr.bf16.mxu0 %v1157
    %1542 = vmatpush1.bf16.msra.mxu0 %v1156
    %1543 = vmatprep.subr.bf16.mxu0 %v1161
    %1544 = vmatpush1.bf16.msra.mxu0 %v1160
    %1545 = vmatprep.subr.bf16.mxu0 %v1165
    %1546 = vmatpush1.bf16.msra.mxu0 %v1164
    %1547 = vmatprep.subr.bf16.mxu0 0
    %1548 = vmatpush1.bf16.msra.mxu0 0
    %1549 = vmatprep.subr.bf16.mxu0 0
    %1550 = vmatpush1.bf16.msra.mxu0 0
    %1551 = vmatprep.subr.bf16.mxu0 0
    %1552 = vmatpush1.bf16.msra.mxu0 0
    %1553 = vmatprep.subr.bf16.mxu0 0
    %1554 = vmatpush1.bf16.msra.mxu0 0
    %1555 = vmatprep.subr.bf16.mxu0 0
    %1556 = vmatpush1.bf16.msra.mxu0 0
    %1557 = vmatprep.subr.bf16.mxu0 0
    %1558 = vmatpush1.bf16.msra.mxu0 0
    %1559 = vmatprep.subr.bf16.mxu0 0
    %1560 = vmatpush1.bf16.msra.mxu0 0
    %1561 = vmatprep.subr.bf16.mxu0 0
    %1562 = vmatpush1.bf16.msra.mxu0 0
    %1563 = vmatprep.mubr.bf16.mxu0 0
    %1564 = vmatmul.mubr.bf16.gmra.mrb[0].mxu0 %v1489
    %v1565 = vpop.f32.mrb[0].mxu0
    %v1566 = vadd.f32 0.0, %v1565
    %v1567 = vpop.f32.mrb[0].mxu0
    %v1568 = vadd.f32 0.0, %v1567
    %v1569 = vpop.f32.mrb[0].mxu0
    %v1570 = vpop.f32.mrb[0].mxu0
    %1571 = vdwg.mxu0
    %v1572 = vadd.f32 %v1442, %v1525
    %v1573 = vadd.f32 %v1444, %v1527
    %v1574 = vadd.f32 %v1483, %v1566
    %v1575 = vadd.f32 %v1485, %v1568
    %v1576 = vmul.f32 %v1572, 0.5
    %v1577 = vmul.f32 %v1573, 0.5
    %v1578 = vmul.f32 %v1574, 0.5
    %v1579 = vtanh.pop %v1576
    %v1580 = vtanh.pop %v1577
    %v1581 = vtanh.pop %v1578
    %v1582 = vmul.f32 %v1579, 0.5
    %v1583 = vmul.f32 %v1580, 0.5
    %v1584 = vmul.f32 %v1581, 0.5
    %v1585 = vadd.f32 %v1582, 0.5
    %v1586 = vadd.f32 %v1583, 0.5
    %v1587 = vadd.f32 %v1584, 0.5
    %v1588 = vtanh.pop %v1575
    %v1589 = vmul.f32 %v1586, %v1299
    %v1590 = vmul.f32 %v1585, %v1588
    %v1591 = vadd.f32 %v1589, %v1590
    %v1592 = vtanh.pop %v1591
    %v1593 = vmul.f32 %v1587, %v1592
    %1594 = vmatprep.subr.bf16.mxu0 %v787
    %1595 = vmatpush1.bf16.msra.mxu0 %v786
    %1596 = vmatprep.subr.bf16.mxu0 %v791
    %1597 = vmatpush1.bf16.msra.mxu0 %v790
    %1598 = vmatprep.subr.bf16.mxu0 %v795
    %1599 = vmatpush1.bf16.msra.mxu0 %v794
    %1600 = vmatprep.subr.bf16.mxu0 %v799
    %1601 = vmatpush1.bf16.msra.mxu0 %v798
    %1602 = vmatprep.subr.bf16.mxu0 %v803
    %1603 = vmatpush1.bf16.msra.mxu0 %v802
    %1604 = vmatprep.subr.bf16.mxu0 %v807
    %1605 = vmatpush1.bf16.msra.mxu0 %v806
    %1606 = vmatprep.subr.bf16.mxu0 %v811
    %1607 = vmatpush1.bf16.msra.mxu0 %v810
    %1608 = vmatprep.subr.bf16.mxu0 %v815
    %1609 = vmatpush1.bf16.msra.mxu0 %v814
    %1610 = vmatprep.subr.bf16.mxu0 0
    %1611 = vmatpush1.bf16.msra.mxu0 0
    %1612 = vmatprep.subr.bf16.mxu0 0
    %1613 = vmatpush1.bf16.msra.mxu0 0
    %1614 = vmatprep.subr.bf16.mxu0 0
    %1615 = vmatpush1.bf16.msra.mxu0 0
    %1616 = vmatprep.subr.bf16.mxu0 0
    %1617 = vmatpush1.bf16.msra.mxu0 0
    %1618 = vmatprep.subr.bf16.mxu0 0
    %1619 = vmatpush1.bf16.msra.mxu0 0
    %1620 = vmatprep.subr.bf16.mxu0 0
    %1621 = vmatpush1.bf16.msra.mxu0 0
    %1622 = vmatprep.subr.bf16.mxu0 0
    %1623 = vmatpush1.bf16.msra.mxu0 0
    %1624 = vmatprep.subr.bf16.mxu0 0
    %1625 = vmatpush1.bf16.msra.mxu0 0
    %1626 = vmatprep.mubr.bf16.mxu0 0
    %1627 = vmatmul.mubr.bf16.gmra.mrb[0].mxu0 %v1406
    %v1628 = vpop.f32.mrb[0].mxu0
    %v1629 = vadd.f32 0.0, %v1628
    %v1630 = vpop.f32.mrb[0].mxu0
    %v1631 = vadd.f32 0.0, %v1630
    %v1632 = vpop.f32.mrb[0].mxu0
    %v1633 = vpop.f32.mrb[0].mxu0
    %1634 = vdwg.mxu0
    %1635 = vmatprep.subr.bf16.mxu0 %v789
    %1636 = vmatpush1.bf16.msra.mxu0 %v788
    %1637 = vmatprep.subr.bf16.mxu0 %v793
    %1638 = vmatpush1.bf16.msra.mxu0 %v792
    %1639 = vmatprep.subr.bf16.mxu0 %v797
    %1640 = vmatpush1.bf16.msra.mxu0 %v796
    %1641 = vmatprep.subr.bf16.mxu0 %v801
    %1642 = vmatpush1.bf16.msra.mxu0 %v800
    %1643 = vmatprep.subr.bf16.mxu0 %v805
    %1644 = vmatpush1.bf16.msra.mxu0 %v804
    %1645 = vmatprep.subr.bf16.mxu0 %v809
    %1646 = vmatpush1.bf16.msra.mxu0 %v808
    %1647 = vmatprep.subr.bf16.mxu0 %v813
    %1648 = vmatpush1.bf16.msra.mxu0 %v812
    %1649 = vmatprep.subr.bf16.mxu0 %v817
    %1650 = vmatpush1.bf16.msra.mxu0 %v816
    %1651 = vmatprep.subr.bf16.mxu0 0
    %1652 = vmatpush1.bf16.msra.mxu0 0
    %1653 = vmatprep.subr.bf16.mxu0 0
    %1654 = vmatpush1.bf16.msra.mxu0 0
    %1655 = vmatprep.subr.bf16.mxu0 0
    %1656 = vmatpush1.bf16.msra.mxu0 0
    %1657 = vmatprep.subr.bf16.mxu0 0
    %1658 = vmatpush1.bf16.msra.mxu0 0
    %1659 = vmatprep.subr.bf16.mxu0 0
    %1660 = vmatpush1.bf16.msra.mxu0 0
    %1661 = vmatprep.subr.bf16.mxu0 0
    %1662 = vmatpush1.bf16.msra.mxu0 0
    %1663 = vmatprep.subr.bf16.mxu0 0
    %1664 = vmatpush1.bf16.msra.mxu0 0
    %1665 = vmatprep.subr.bf16.mxu0 0
    %1666 = vmatpush1.bf16.msra.mxu0 0
    %1667 = vmatprep.mubr.bf16.mxu0 0
    %1668 = vmatmul.mubr.bf16.gmra.mrb[0].mxu0 %v1406
    %v1669 = vpop.f32.mrb[0].mxu0
    %v1670 = vadd.f32 0.0, %v1669
    %v1671 = vpop.f32.mrb[0].mxu0
    %v1672 = vadd.f32 0.0, %v1671
    %v1673 = vpop.f32.mrb[0].mxu0
    %v1674 = vpop.f32.mrb[0].mxu0
    %1675 = vdwg.mxu0
    %v1676 = vadd.f32 %v306, %v1629
    %v1677 = vadd.f32 %v308, %v1631
    %v1678 = vadd.f32 %v379, %v1670
    %v1679 = vadd.f32 %v381, %v1672
    %v1680 = vmul.f32 %v1676, 0.5
    %v1681 = vmul.f32 %v1677, 0.5
    %v1682 = vmul.f32 %v1678, 0.5
    %v1683 = vtanh.pop %v1680
    %v1684 = vtanh.pop %v1681
    %v1685 = vtanh.pop %v1682
    %v1686 = vmul.f32 %v1683, 0.5
    %v1687 = vmul.f32 %v1684, 0.5
    %v1688 = vmul.f32 %v1685, 0.5
    %v1689 = vadd.f32 %v1686, 0.5
    %v1690 = vadd.f32 %v1687, 0.5
    %v1691 = vadd.f32 %v1688, 0.5
    %v1692 = vtanh.pop %v1679
    %v1693 = vmul.f32 %v1690, %v1403
    %v1694 = vmul.f32 %v1689, %v1692
    %v1695 = vadd.f32 %v1693, %v1694
    %v1696 = vtanh.pop %v1695
    %v1697 = vmul.f32 %v1691, %v1696
    %v1698 = vpack.c.bf16 %v1697, %v1697
    %1699 = vmatprep.subr.bf16.mxu0 %v534
    %1700 = vmatpush1.bf16.msra.mxu0 %v533
    %1701 = vmatprep.subr.bf16.mxu0 %v538
    %1702 = vmatpush1.bf16.msra.mxu0 %v537
    %1703 = vmatprep.subr.bf16.mxu0 %v542
    %1704 = vmatpush1.bf16.msra.mxu0 %v541
    %1705 = vmatprep.subr.bf16.mxu0 %v546
    %1706 = vmatpush1.bf16.msra.mxu0 %v545
    %1707 = vmatprep.subr.bf16.mxu0 %v550
    %1708 = vmatpush1.bf16.msra.mxu0 %v549
    %1709 = vmatprep.subr.bf16.mxu0 %v554
    %1710 = vmatpush1.bf16.msra.mxu0 %v553
    %1711 = vmatprep.subr.bf16.mxu0 %v558
    %1712 = vmatpush1.bf16.msra.mxu0 %v557
    %1713 = vmatprep.subr.bf16.mxu0 %v562
    %1714 = vmatpush1.bf16.msra.mxu0 %v561
    %1715 = vmatprep.subr.bf16.mxu0 0
    %1716 = vmatpush1.bf16.msra.mxu0 0
    %1717 = vmatprep.subr.bf16.mxu0 0
    %1718 = vmatpush1.bf16.msra.mxu0 0
    %1719 = vmatprep.subr.bf16.mxu0 0
    %1720 = vmatpush1.bf16.msra.mxu0 0
    %1721 = vmatprep.subr.bf16.mxu0 0
    %1722 = vmatpush1.bf16.msra.mxu0 0
    %1723 = vmatprep.subr.bf16.mxu0 0
    %1724 = vmatpush1.bf16.msra.mxu0 0
    %1725 = vmatprep.subr.bf16.mxu0 0
    %1726 = vmatpush1.bf16.msra.mxu0 0
    %1727 = vmatprep.subr.bf16.mxu0 0
    %1728 = vmatpush1.bf16.msra.mxu0 0
    %1729 = vmatprep.subr.bf16.mxu0 0
    %1730 = vmatpush1.bf16.msra.mxu0 0
    %1731 = vmatprep.mubr.bf16.mxu0 0
    %1732 = vmatmul.mubr.bf16.gmra.mrb[0].mxu0 %v1698
    %v1733 = vpop.f32.mrb[0].mxu0
    %v1734 = vadd.f32 %v420, %v1733
    %v1735 = vpop.f32.mrb[0].mxu0
    %v1736 = vadd.f32 %v424, %v1735
    %v1737 = vpop.f32.mrb[0].mxu0
    %v1738 = vpop.f32.mrb[0].mxu0
    %1739 = vdwg.mxu0
    %1740 = vmatprep.subr.bf16.mxu0 %v536
    %1741 = vmatpush1.bf16.msra.mxu0 %v535
    %1742 = vmatprep.subr.bf16.mxu0 %v540
    %1743 = vmatpush1.bf16.msra.mxu0 %v539
    %1744 = vmatprep.subr.bf16.mxu0 %v544
    %1745 = vmatpush1.bf16.msra.mxu0 %v543
    %1746 = vmatprep.subr.bf16.mxu0 %v548
    %1747 = vmatpush1.bf16.msra.mxu0 %v547
    %1748 = vmatprep.subr.bf16.mxu0 %v552
    %1749 = vmatpush1.bf16.msra.mxu0 %v551
    %1750 = vmatprep.subr.bf16.mxu0 %v556
    %1751 = vmatpush1.bf16.msra.mxu0 %v555
    %1752 = vmatprep.subr.bf16.mxu0 %v560
    %1753 = vmatpush1.bf16.msra.mxu0 %v559
    %1754 = vmatprep.subr.bf16.mxu0 %v564
    %1755 = vmatpush1.bf16.msra.mxu0 %v563
    %1756 = vmatprep.subr.bf16.mxu0 0
    %1757 = vmatpush1.bf16.msra.mxu0 0
    %1758 = vmatprep.subr.bf16.mxu0 0
    %1759 = vmatpush1.bf16.msra.mxu0 0
    %1760 = vmatprep.subr.bf16.mxu0 0
    %1761 = vmatpush1.bf16.msra.mxu0 0
    %1762 = vmatprep.subr.bf16.mxu0 0
    %1763 = vmatpush1.bf16.msra.mxu0 0
    %1764 = vmatprep.subr.bf16.mxu0 0
    %1765 = vmatpush1.bf16.msra.mxu0 0
    %1766 = vmatprep.subr.bf16.mxu0 0
    %1767 = vmatpush1.bf16.msra.mxu0 0
    %1768 = vmatprep.subr.bf16.mxu0 0
    %1769 = vmatpush1.bf16.msra.mxu0 0
    %1770 = vmatprep.subr.bf16.mxu0 0
    %1771 = vmatpush1.bf16.msra.mxu0 0
    %1772 = vmatprep.mubr.bf16.mxu0 0
    %1773 = vmatmul.mubr.bf16.gmra.mrb[0].mxu0 %v1698
    %v1774 = vpop.f32.mrb[0].mxu0
    %v1775 = vadd.f32 %v428, %v1774
    %v1776 = vpop.f32.mrb[0].mxu0
    %v1777 = vadd.f32 %v432, %v1776
    %v1778 = vpop.f32.mrb[0].mxu0
    %v1779 = vpop.f32.mrb[0].mxu0
    %1780 = vdwg.mxu0
    %v1781 = vpack.c.bf16 %v1593, %v1593
    %1782 = vmatprep.subr.bf16.mxu0 %v1135
    %1783 = vmatpush1.bf16.msra.mxu0 %v1134
    %1784 = vmatprep.subr.bf16.mxu0 %v1139
    %1785 = vmatpush1.bf16.msra.mxu0 %v1138
    %1786 = vmatprep.subr.bf16.mxu0 %v1143
    %1787 = vmatpush1.bf16.msra.mxu0 %v1142
    %1788 = vmatprep.subr.bf16.mxu0 %v1147
    %1789 = vmatpush1.bf16.msra.mxu0 %v1146
    %1790 = vmatprep.subr.bf16.mxu0 %v1151
    %1791 = vmatpush1.bf16.msra.mxu0 %v1150
    %1792 = vmatprep.subr.bf16.mxu0 %v1155
    %1793 = vmatpush1.bf16.msra.mxu0 %v1154
    %1794 = vmatprep.subr.bf16.mxu0 %v1159
    %1795 = vmatpush1.bf16.msra.mxu0 %v1158
    %1796 = vmatprep.subr.bf16.mxu0 %v1163
    %1797 = vmatpush1.bf16.msra.mxu0 %v1162
    %1798 = vmatprep.subr.bf16.mxu0 0
    %1799 = vmatpush1.bf16.msra.mxu0 0
    %1800 = vmatprep.subr.bf16.mxu0 0
    %1801 = vmatpush1.bf16.msra.mxu0 0
    %1802 = vmatprep.subr.bf16.mxu0 0
    %1803 = vmatpush1.bf16.msra.mxu0 0
    %1804 = vmatprep.subr.bf16.mxu0 0
    %1805 = vmatpush1.bf16.msra.mxu0 0
    %1806 = vmatprep.subr.bf16.mxu0 0
    %1807 = vmatpush1.bf16.msra.mxu0 0
    %1808 = vmatprep.subr.bf16.mxu0 0
    %1809 = vmatpush1.bf16.msra.mxu0 0
    %1810 = vmatprep.subr.bf16.mxu0 0
    %1811 = vmatpush1.bf16.msra.mxu0 0
    %1812 = vmatprep.subr.bf16.mxu0 0
    %1813 = vmatpush1.bf16.msra.mxu0 0
    %1814 = vmatprep.mubr.bf16.mxu0 0
    %1815 = vmatmul.mubr.bf16.gmra.mrb[0].mxu0 %v1781
    %v1816 = vpop.f32.mrb[0].mxu0
    %v1817 = vadd.f32 0.0, %v1816
    %v1818 = vpop.f32.mrb[0].mxu0
    %v1819 = vadd.f32 0.0, %v1818
    %v1820 = vpop.f32.mrb[0].mxu0
    %v1821 = vpop.f32.mrb[0].mxu0
    %1822 = vdwg.mxu0
    %1823 = vmatprep.subr.bf16.mxu0 %v1137
    %1824 = vmatpush1.bf16.msra.mxu0 %v1136
    %1825 = vmatprep.subr.bf16.mxu0 %v1141
    %1826 = vmatpush1.bf16.msra.mxu0 %v1140
    %1827 = vmatprep.subr.bf16.mxu0 %v1145
    %1828 = vmatpush1.bf16.msra.mxu0 %v1144
    %1829 = vmatprep.subr.bf16.mxu0 %v1149
    %1830 = vmatpush1.bf16.msra.mxu0 %v1148
    %1831 = vmatprep.subr.bf16.mxu0 %v1153
    %1832 = vmatpush1.bf16.msra.mxu0 %v1152
    %1833 = vmatprep.subr.bf16.mxu0 %v1157
    %1834 = vmatpush1.bf16.msra.mxu0 %v1156
    %1835 = vmatprep.subr.bf16.mxu0 %v1161
    %1836 = vmatpush1.bf16.msra.mxu0 %v1160
    %1837 = vmatprep.subr.bf16.mxu0 %v1165
    %1838 = vmatpush1.bf16.msra.mxu0 %v1164
    %1839 = vmatprep.subr.bf16.mxu0 0
    %1840 = vmatpush1.bf16.msra.mxu0 0
    %1841 = vmatprep.subr.bf16.mxu0 0
    %1842 = vmatpush1.bf16.msra.mxu0 0
    %1843 = vmatprep.subr.bf16.mxu0 0
    %1844 = vmatpush1.bf16.msra.mxu0 0
    %1845 = vmatprep.subr.bf16.mxu0 0
    %1846 = vmatpush1.bf16.msra.mxu0 0
    %1847 = vmatprep.subr.bf16.mxu0 0
    %1848 = vmatpush1.bf16.msra.mxu0 0
    %1849 = vmatprep.subr.bf16.mxu0 0
    %1850 = vmatpush1.bf16.msra.mxu0 0
    %1851 = vmatprep.subr.bf16.mxu0 0
    %1852 = vmatpush1.bf16.msra.mxu0 0
    %1853 = vmatprep.subr.bf16.mxu0 0
    %1854 = vmatpush1.bf16.msra.mxu0 0
    %1855 = vmatprep.mubr.bf16.mxu0 0
    %1856 = vmatmul.mubr.bf16.gmra.mrb[0].mxu0 %v1781
    %v1857 = vpop.f32.mrb[0].mxu0
    %v1858 = vadd.f32 0.0, %v1857
    %v1859 = vpop.f32.mrb[0].mxu0
    %v1860 = vadd.f32 0.0, %v1859
    %v1861 = vpop.f32.mrb[0].mxu0
    %v1862 = vpop.f32.mrb[0].mxu0
    %1863 = vdwg.mxu0
    %v1864 = vadd.f32 %v1734, %v1817
    %v1865 = vadd.f32 %v1736, %v1819
    %v1866 = vadd.f32 %v1775, %v1858
    %v1867 = vadd.f32 %v1777, %v1860
    %v1868 = vmul.f32 %v1864, 0.5
    %v1869 = vmul.f32 %v1865, 0.5
    %v1870 = vmul.f32 %v1866, 0.5
    %v1871 = vtanh.pop %v1868
    %v1872 = vtanh.pop %v1869
    %v1873 = vtanh.pop %v1870
    %v1874 = vmul.f32 %v1871, 0.5
    %v1875 = vmul.f32 %v1872, 0.5
    %v1876 = vmul.f32 %v1873, 0.5
    %v1877 = vadd.f32 %v1874, 0.5
    %v1878 = vadd.f32 %v1875, 0.5
    %v1879 = vadd.f32 %v1876, 0.5
    %v1880 = vtanh.pop %v1867
    %v1881 = vmul.f32 %v1878, %v1591
    %v1882 = vmul.f32 %v1877, %v1880
    %v1883 = vadd.f32 %v1881, %v1882
    %v1884 = vtanh.pop %v1883
    %v1885 = vmul.f32 %v1879, %v1884
    %1886 = vmatprep.subr.bf16.mxu0 %v787
    %1887 = vmatpush1.bf16.msra.mxu0 %v786
    %1888 = vmatprep.subr.bf16.mxu0 %v791
    %1889 = vmatpush1.bf16.msra.mxu0 %v790
    %1890 = vmatprep.subr.bf16.mxu0 %v795
    %1891 = vmatpush1.bf16.msra.mxu0 %v794
    %1892 = vmatprep.subr.bf16.mxu0 %v799
    %1893 = vmatpush1.bf16.msra.mxu0 %v798
    %1894 = vmatprep.subr.bf16.mxu0 %v803
    %1895 = vmatpush1.bf16.msra.mxu0 %v802
    %1896 = vmatprep.subr.bf16.mxu0 %v807
    %1897 = vmatpush1.bf16.msra.mxu0 %v806
    %1898 = vmatprep.subr.bf16.mxu0 %v811
    %1899 = vmatpush1.bf16.msra.mxu0 %v810
    %1900 = vmatprep.subr.bf16.mxu0 %v815
    %1901 = vmatpush1.bf16.msra.mxu0 %v814
    %1902 = vmatprep.subr.bf16.mxu0 0
    %1903 = vmatpush1.bf16.msra.mxu0 0
    %1904 = vmatprep.subr.bf16.mxu0 0
    %1905 = vmatpush1.bf16.msra.mxu0 0
    %1906 = vmatprep.subr.bf16.mxu0 0
    %1907 = vmatpush1.bf16.msra.mxu0 0
    %1908 = vmatprep.subr.bf16.mxu0 0
    %1909 = vmatpush1.bf16.msra.mxu0 0
    %1910 = vmatprep.subr.bf16.mxu0 0
    %1911 = vmatpush1.bf16.msra.mxu0 0
    %1912 = vmatprep.subr.bf16.mxu0 0
    %1913 = vmatpush1.bf16.msra.mxu0 0
    %1914 = vmatprep.subr.bf16.mxu0 0
    %1915 = vmatpush1.bf16.msra.mxu0 0
    %1916 = vmatprep.subr.bf16.mxu0 0
    %1917 = vmatpush1.bf16.msra.mxu0 0
    %1918 = vmatprep.mubr.bf16.mxu0 0
    %1919 = vmatmul.mubr.bf16.gmra.mrb[0].mxu0 %v1698
    %v1920 = vpop.f32.mrb[0].mxu0
    %v1921 = vadd.f32 0.0, %v1920
    %v1922 = vpop.f32.mrb[0].mxu0
    %v1923 = vadd.f32 0.0, %v1922
    %v1924 = vpop.f32.mrb[0].mxu0
    %v1925 = vpop.f32.mrb[0].mxu0
    %1926 = vdwg.mxu0
    %1927 = vmatprep.subr.bf16.mxu0 %v789
    %1928 = vmatpush1.bf16.msra.mxu0 %v788
    %1929 = vmatprep.subr.bf16.mxu0 %v793
    %1930 = vmatpush1.bf16.msra.mxu0 %v792
    %1931 = vmatprep.subr.bf16.mxu0 %v797
    %1932 = vmatpush1.bf16.msra.mxu0 %v796
    %1933 = vmatprep.subr.bf16.mxu0 %v801
    %1934 = vmatpush1.bf16.msra.mxu0 %v800
    %1935 = vmatprep.subr.bf16.mxu0 %v805
    %1936 = vmatpush1.bf16.msra.mxu0 %v804
    %1937 = vmatprep.subr.bf16.mxu0 %v809
    %1938 = vmatpush1.bf16.msra.mxu0 %v808
    %1939 = vmatprep.subr.bf16.mxu0 %v813
    %1940 = vmatpush1.bf16.msra.mxu0 %v812
    %1941 = vmatprep.subr.bf16.mxu0 %v817
    %1942 = vmatpush1.bf16.msra.mxu0 %v816
    %1943 = vmatprep.subr.bf16.mxu0 0
    %1944 = vmatpush1.bf16.msra.mxu0 0
    %1945 = vmatprep.subr.bf16.mxu0 0
    %1946 = vmatpush1.bf16.msra.mxu0 0
    %1947 = vmatprep.subr.bf16.mxu0 0
    %1948 = vmatpush1.bf16.msra.mxu0 0
    %1949 = vmatprep.subr.bf16.mxu0 0
    %1950 = vmatpush1.bf16.msra.mxu0 0
    %1951 = vmatprep.subr.bf16.mxu0 0
    %1952 = vmatpush1.bf16.msra.mxu0 0
    %1953 = vmatprep.subr.bf16.mxu0 0
    %1954 = vmatpush1.bf16.msra.mxu0 0
    %1955 = vmatprep.subr.bf16.mxu0 0
    %1956 = vmatpush1.bf16.msra.mxu0 0
    %1957 = vmatprep.subr.bf16.mxu0 0
    %1958 = vmatpush1.bf16.msra.mxu0 0
    %1959 = vmatprep.mubr.bf16.mxu0 0
    %1960 = vmatmul.mubr.bf16.gmra.mrb[0].mxu0 %v1698
    %v1961 = vpop.f32.mrb[0].mxu0
    %v1962 = vadd.f32 0.0, %v1961
    %v1963 = vpop.f32.mrb[0].mxu0
    %v1964 = vadd.f32 0.0, %v1963
    %v1965 = vpop.f32.mrb[0].mxu0
    %v1966 = vpop.f32.mrb[0].mxu0
    %1967 = vdwg.mxu0
    %v1968 = vadd.f32 %v312, %v1921
    %v1969 = vadd.f32 %v314, %v1923
    %v1970 = vadd.f32 %v385, %v1962
    %v1971 = vadd.f32 %v387, %v1964
    %v1972 = vmul.f32 %v1968, 0.5
    %v1973 = vmul.f32 %v1969, 0.5
    %v1974 = vmul.f32 %v1970, 0.5
    %v1975 = vtanh.pop %v1972
    %v1976 = vtanh.pop %v1973
    %v1977 = vtanh.pop %v1974
    %v1978 = vmul.f32 %v1975, 0.5
    %v1979 = vmul.f32 %v1976, 0.5
    %v1980 = vmul.f32 %v1977, 0.5
    %v1981 = vadd.f32 %v1978, 0.5
    %v1982 = vadd.f32 %v1979, 0.5
    %v1983 = vadd.f32 %v1980, 0.5
    %v1984 = vtanh.pop %v1971
    %v1985 = vmul.f32 %v1982, %v1695
    %v1986 = vmul.f32 %v1981, %v1984
    %v1987 = vadd.f32 %v1985, %v1986
    %v1988 = vtanh.pop %v1987
    %v1989 = vmul.f32 %v1983, %v1988
    %v1990 = vpack.c.bf16 %v1989, %v1989
    %1991 = vmatprep.subr.bf16.mxu0 %v534
    %1992 = vmatpush1.bf16.msra.mxu0 %v533
    %1993 = vmatprep.subr.bf16.mxu0 %v538
    %1994 = vmatpush1.bf16.msra.mxu0 %v537
    %1995 = vmatprep.subr.bf16.mxu0 %v542
    %1996 = vmatpush1.bf16.msra.mxu0 %v541
    %1997 = vmatprep.subr.bf16.mxu0 %v546
    %1998 = vmatpush1.bf16.msra.mxu0 %v545
    %1999 = vmatprep.subr.bf16.mxu0 %v550
    %2000 = vmatpush1.bf16.msra.mxu0 %v549
    %2001 = vmatprep.subr.bf16.mxu0 %v554
    %2002 = vmatpush1.bf16.msra.mxu0 %v553
    %2003 = vmatprep.subr.bf16.mxu0 %v558
    %2004 = vmatpush1.bf16.msra.mxu0 %v557
    %2005 = vmatprep.subr.bf16.mxu0 %v562
    %2006 = vmatpush1.bf16.msra.mxu0 %v561
    %2007 = vmatprep.subr.bf16.mxu0 0
    %2008 = vmatpush1.bf16.msra.mxu0 0
    %2009 = vmatprep.subr.bf16.mxu0 0
    %2010 = vmatpush1.bf16.msra.mxu0 0
    %2011 = vmatprep.subr.bf16.mxu0 0
    %2012 = vmatpush1.bf16.msra.mxu0 0
    %2013 = vmatprep.subr.bf16.mxu0 0
    %2014 = vmatpush1.bf16.msra.mxu0 0
    %2015 = vmatprep.subr.bf16.mxu0 0
    %2016 = vmatpush1.bf16.msra.mxu0 0
    %2017 = vmatprep.subr.bf16.mxu0 0
    %2018 = vmatpush1.bf16.msra.mxu0 0
    %2019 = vmatprep.subr.bf16.mxu0 0
    %2020 = vmatpush1.bf16.msra.mxu0 0
    %2021 = vmatprep.subr.bf16.mxu0 0
    %2022 = vmatpush1.bf16.msra.mxu0 0
    %2023 = vmatprep.mubr.bf16.mxu0 0
    %2024 = vmatmul.mubr.bf16.gmra.mrb[0].mxu0 %v1990
    %v2025 = vpop.f32.mrb[0].mxu0
    %v2026 = vadd.f32 %v420, %v2025
    %v2027 = vpop.f32.mrb[0].mxu0
    %v2028 = vadd.f32 %v424, %v2027
    %v2029 = vpop.f32.mrb[0].mxu0
    %v2030 = vpop.f32.mrb[0].mxu0
    %2031 = vdwg.mxu0
    %2032 = vmatprep.subr.bf16.mxu0 %v536
    %2033 = vmatpush1.bf16.msra.mxu0 %v535
    %2034 = vmatprep.subr.bf16.mxu0 %v540
    %2035 = vmatpush1.bf16.msra.mxu0 %v539
    %2036 = vmatprep.subr.bf16.mxu0 %v544
    %2037 = vmatpush1.bf16.msra.mxu0 %v543
    %2038 = vmatprep.subr.bf16.mxu0 %v548
    %2039 = vmatpush1.bf16.msra.mxu0 %v547
    %2040 = vmatprep.subr.bf16.mxu0 %v552
    %2041 = vmatpush1.bf16.msra.mxu0 %v551
    %2042 = vmatprep.subr.bf16.mxu0 %v556
    %2043 = vmatpush1.bf16.msra.mxu0 %v555
    %2044 = vmatprep.subr.bf16.mxu0 %v560
    %2045 = vmatpush1.bf16.msra.mxu0 %v559
    %2046 = vmatprep.subr.bf16.mxu0 %v564
    %2047 = vmatpush1.bf16.msra.mxu0 %v563
    %2048 = vmatprep.subr.bf16.mxu0 0
    %2049 = vmatpush1.bf16.msra.mxu0 0
    %2050 = vmatprep.subr.bf16.mxu0 0
    %2051 = vmatpush1.bf16.msra.mxu0 0
    %2052 = vmatprep.subr.bf16.mxu0 0
    %2053 = vmatpush1.bf16.msra.mxu0 0
    %2054 = vmatprep.subr.bf16.mxu0 0
    %2055 = vmatpush1.bf16.msra.mxu0 0
    %2056 = vmatprep.subr.bf16.mxu0 0
    %2057 = vmatpush1.bf16.msra.mxu0 0
    %2058 = vmatprep.subr.bf16.mxu0 0
    %2059 = vmatpush1.bf16.msra.mxu0 0
    %2060 = vmatprep.subr.bf16.mxu0 0
    %2061 = vmatpush1.bf16.msra.mxu0 0
    %2062 = vmatprep.subr.bf16.mxu0 0
    %2063 = vmatpush1.bf16.msra.mxu0 0
    %2064 = vmatprep.mubr.bf16.mxu0 0
    %2065 = vmatmul.mubr.bf16.gmra.mrb[0].mxu0 %v1990
    %v2066 = vpop.f32.mrb[0].mxu0
    %v2067 = vadd.f32 %v428, %v2066
    %v2068 = vpop.f32.mrb[0].mxu0
    %v2069 = vadd.f32 %v432, %v2068
    %v2070 = vpop.f32.mrb[0].mxu0
    %v2071 = vpop.f32.mrb[0].mxu0
    %2072 = vdwg.mxu0
    %v2073 = vpack.c.bf16 %v1885, %v1885
    %2074 = vmatprep.subr.bf16.mxu0 %v1135
    %2075 = vmatpush1.bf16.msra.mxu0 %v1134
    %2076 = vmatprep.subr.bf16.mxu0 %v1139
    %2077 = vmatpush1.bf16.msra.mxu0 %v1138
    %2078 = vmatprep.subr.bf16.mxu0 %v1143
    %2079 = vmatpush1.bf16.msra.mxu0 %v1142
    %2080 = vmatprep.subr.bf16.mxu0 %v1147
    %2081 = vmatpush1.bf16.msra.mxu0 %v1146
    %2082 = vmatprep.subr.bf16.mxu0 %v1151
    %2083 = vmatpush1.bf16.msra.mxu0 %v1150
    %2084 = vmatprep.subr.bf16.mxu0 %v1155
    %2085 = vmatpush1.bf16.msra.mxu0 %v1154
    %2086 = vmatprep.subr.bf16.mxu0 %v1159
    %2087 = vmatpush1.bf16.msra.mxu0 %v1158
    %2088 = vmatprep.subr.bf16.mxu0 %v1163
    %2089 = vmatpush1.bf16.msra.mxu0 %v1162
    %2090 = vmatprep.subr.bf16.mxu0 0
    %2091 = vmatpush1.bf16.msra.mxu0 0
    %2092 = vmatprep.subr.bf16.mxu0 0
    %2093 = vmatpush1.bf16.msra.mxu0 0
    %2094 = vmatprep.subr.bf16.mxu0 0
    %2095 = vmatpush1.bf16.msra.mxu0 0
    %2096 = vmatprep.subr.bf16.mxu0 0
    %2097 = vmatpush1.bf16.msra.mxu0 0
    %2098 = vmatprep.subr.bf16.mxu0 0
    %2099 = vmatpush1.bf16.msra.mxu0 0
    %2100 = vmatprep.subr.bf16.mxu0 0
    %2101 = vmatpush1.bf16.msra.mxu0 0
    %2102 = vmatprep.subr.bf16.mxu0 0
    %2103 = vmatpush1.bf16.msra.mxu0 0
    %2104 = vmatprep.subr.bf16.mxu0 0
    %2105 = vmatpush1.bf16.msra.mxu0 0
    %2106 = vmatprep.mubr.bf16.mxu0 0
    %2107 = vmatmul.mubr.bf16.gmra.mrb[0].mxu0 %v2073
    %v2108 = vpop.f32.mrb[0].mxu0
    %v2109 = vadd.f32 0.0, %v2108
    %v2110 = vpop.f32.mrb[0].mxu0
    %v2111 = vadd.f32 0.0, %v2110
    %v2112 = vpop.f32.mrb[0].mxu0
    %v2113 = vpop.f32.mrb[0].mxu0
    %2114 = vdwg.mxu0
    %2115 = vmatprep.subr.bf16.mxu0 %v1137
    %2116 = vmatpush1.bf16.msra.mxu0 %v1136
    %2117 = vmatprep.subr.bf16.mxu0 %v1141
    %2118 = vmatpush1.bf16.msra.mxu0 %v1140
    %2119 = vmatprep.subr.bf16.mxu0 %v1145
    %2120 = vmatpush1.bf16.msra.mxu0 %v1144
    %2121 = vmatprep.subr.bf16.mxu0 %v1149
    %2122 = vmatpush1.bf16.msra.mxu0 %v1148
    %2123 = vmatprep.subr.bf16.mxu0 %v1153
    %2124 = vmatpush1.bf16.msra.mxu0 %v1152
    %2125 = vmatprep.subr.bf16.mxu0 %v1157
    %2126 = vmatpush1.bf16.msra.mxu0 %v1156
    %2127 = vmatprep.subr.bf16.mxu0 %v1161
    %2128 = vmatpush1.bf16.msra.mxu0 %v1160
    %2129 = vmatprep.subr.bf16.mxu0 %v1165
    %2130 = vmatpush1.bf16.msra.mxu0 %v1164
    %2131 = vmatprep.subr.bf16.mxu0 0
    %2132 = vmatpush1.bf16.msra.mxu0 0
    %2133 = vmatprep.subr.bf16.mxu0 0
    %2134 = vmatpush1.bf16.msra.mxu0 0
    %2135 = vmatprep.subr.bf16.mxu0 0
    %2136 = vmatpush1.bf16.msra.mxu0 0
    %2137 = vmatprep.subr.bf16.mxu0 0
    %2138 = vmatpush1.bf16.msra.mxu0 0
    %2139 = vmatprep.subr.bf16.mxu0 0
    %2140 = vmatpush1.bf16.msra.mxu0 0
    %2141 = vmatprep.subr.bf16.mxu0 0
    %2142 = vmatpush1.bf16.msra.mxu0 0
    %2143 = vmatprep.subr.bf16.mxu0 0
    %2144 = vmatpush1.bf16.msra.mxu0 0
    %2145 = vmatprep.subr.bf16.mxu0 0
    %2146 = vmatpush1.bf16.msra.mxu0 0
    %2147 = vmatprep.mubr.bf16.mxu0 0
    %2148 = vmatmul.mubr.bf16.gmra.mrb[0].mxu0 %v2073
    %v2149 = vpop.f32.mrb[0].mxu0
    %v2150 = vadd.f32 0.0, %v2149
    %v2151 = vpop.f32.mrb[0].mxu0
    %v2152 = vadd.f32 0.0, %v2151
    %v2153 = vpop.f32.mrb[0].mxu0
    %v2154 = vpop.f32.mrb[0].mxu0
    %2155 = vdwg.mxu0
    %v2156 = vadd.f32 %v2026, %v2109
    %v2157 = vadd.f32 %v2028, %v2111
    %v2158 = vadd.f32 %v2067, %v2150
    %v2159 = vadd.f32 %v2069, %v2152
    %v2160 = vmul.f32 %v2156, 0.5
    %v2161 = vmul.f32 %v2157, 0.5
    %v2162 = vmul.f32 %v2158, 0.5
    %v2163 = vtanh.pop %v2160
    %v2164 = vtanh.pop %v2161
    %v2165 = vtanh.pop %v2162
    %v2166 = vmul.f32 %v2163, 0.5
    %v2167 = vmul.f32 %v2164, 0.5
    %v2168 = vmul.f32 %v2165, 0.5
    %v2169 = vadd.f32 %v2166, 0.5
    %v2170 = vadd.f32 %v2167, 0.5
    %v2171 = vadd.f32 %v2168, 0.5
    %v2172 = vtanh.pop %v2159
    %v2173 = vmul.f32 %v2170, %v1883
    %v2174 = vmul.f32 %v2169, %v2172
    %v2175 = vadd.f32 %v2173, %v2174
    %v2176 = vtanh.pop %v2175
    %v2177 = vmul.f32 %v2171, %v2176
    %2178 = vmatprep.subr.bf16.mxu0 %v787
    %2179 = vmatpush1.bf16.msra.mxu0 %v786
    %2180 = vmatprep.subr.bf16.mxu0 %v791
    %2181 = vmatpush1.bf16.msra.mxu0 %v790
    %2182 = vmatprep.subr.bf16.mxu0 %v795
    %2183 = vmatpush1.bf16.msra.mxu0 %v794
    %2184 = vmatprep.subr.bf16.mxu0 %v799
    %2185 = vmatpush1.bf16.msra.mxu0 %v798
    %2186 = vmatprep.subr.bf16.mxu0 %v803
    %2187 = vmatpush1.bf16.msra.mxu0 %v802
    %2188 = vmatprep.subr.bf16.mxu0 %v807
    %2189 = vmatpush1.bf16.msra.mxu0 %v806
    %2190 = vmatprep.subr.bf16.mxu0 %v811
    %2191 = vmatpush1.bf16.msra.mxu0 %v810
    %2192 = vmatprep.subr.bf16.mxu0 %v815
    %2193 = vmatpush1.bf16.msra.mxu0 %v814
    %2194 = vmatprep.subr.bf16.mxu0 0
    %2195 = vmatpush1.bf16.msra.mxu0 0
    %2196 = vmatprep.subr.bf16.mxu0 0
    %2197 = vmatpush1.bf16.msra.mxu0 0
    %2198 = vmatprep.subr.bf16.mxu0 0
    %2199 = vmatpush1.bf16.msra.mxu0 0
    %2200 = vmatprep.subr.bf16.mxu0 0
    %2201 = vmatpush1.bf16.msra.mxu0 0
    %2202 = vmatprep.subr.bf16.mxu0 0
    %2203 = vmatpush1.bf16.msra.mxu0 0
    %2204 = vmatprep.subr.bf16.mxu0 0
    %2205 = vmatpush1.bf16.msra.mxu0 0
    %2206 = vmatprep.subr.bf16.mxu0 0
    %2207 = vmatpush1.bf16.msra.mxu0 0
    %2208 = vmatprep.subr.bf16.mxu0 0
    %2209 = vmatpush1.bf16.msra.mxu0 0
    %2210 = vmatprep.mubr.bf16.mxu0 0
    %2211 = vmatmul.mubr.bf16.gmra.mrb[0].mxu0 %v1990
    %v2212 = vpop.f32.mrb[0].mxu0
    %v2213 = vadd.f32 0.0, %v2212
    %v2214 = vpop.f32.mrb[0].mxu0
    %v2215 = vadd.f32 0.0, %v2214
    %v2216 = vpop.f32.mrb[0].mxu0
    %v2217 = vpop.f32.mrb[0].mxu0
    %2218 = vdwg.mxu0
    %2219 = vmatprep.subr.bf16.mxu0 %v789
    %2220 = vmatpush1.bf16.msra.mxu0 %v788
    %2221 = vmatprep.subr.bf16.mxu0 %v793
    %2222 = vmatpush1.bf16.msra.mxu0 %v792
    %2223 = vmatprep.subr.bf16.mxu0 %v797
    %2224 = vmatpush1.bf16.msra.mxu0 %v796
    %2225 = vmatprep.subr.bf16.mxu0 %v801
    %2226 = vmatpush1.bf16.msra.mxu0 %v800
    %2227 = vmatprep.subr.bf16.mxu0 %v805
    %2228 = vmatpush1.bf16.msra.mxu0 %v804
    %2229 = vmatprep.subr.bf16.mxu0 %v809
    %2230 = vmatpush1.bf16.msra.mxu0 %v808
    %2231 = vmatprep.subr.bf16.mxu0 %v813
    %2232 = vmatpush1.bf16.msra.mxu0 %v812
    %2233 = vmatprep.subr.bf16.mxu0 %v817
    %2234 = vmatpush1.bf16.msra.mxu0 %v816
    %2235 = vmatprep.subr.bf16.mxu0 0
    %2236 = vmatpush1.bf16.msra.mxu0 0
    %2237 = vmatprep.subr.bf16.mxu0 0
    %2238 = vmatpush1.bf16.msra.mxu0 0
    %2239 = vmatprep.subr.bf16.mxu0 0
    %2240 = vmatpush1.bf16.msra.mxu0 0
    %2241 = vmatprep.subr.bf16.mxu0 0
    %2242 = vmatpush1.bf16.msra.mxu0 0
    %2243 = vmatprep.subr.bf16.mxu0 0
    %2244 = vmatpush1.bf16.msra.mxu0 0
    %2245 = vmatprep.subr.bf16.mxu0 0
    %2246 = vmatpush1.bf16.msra.mxu0 0
    %2247 = vmatprep.subr.bf16.mxu0 0
    %2248 = vmatpush1.bf16.msra.mxu0 0
    %2249 = vmatprep.subr.bf16.mxu0 0
    %2250 = vmatpush1.bf16.msra.mxu0 0
    %2251 = vmatprep.mubr.bf16.mxu0 0
    %2252 = vmatmul.mubr.bf16.gmra.mrb[0].mxu0 %v1990
    %v2253 = vpop.f32.mrb[0].mxu0
    %v2254 = vadd.f32 0.0, %v2253
    %v2255 = vpop.f32.mrb[0].mxu0
    %v2256 = vadd.f32 0.0, %v2255
    %v2257 = vpop.f32.mrb[0].mxu0
    %v2258 = vpop.f32.mrb[0].mxu0
    %2259 = vdwg.mxu0
    %v2260 = vadd.f32 %v316, %v2213
    %v2261 = vadd.f32 %v318, %v2215
    %v2262 = vadd.f32 %v389, %v2254
    %v2263 = vadd.f32 %v391, %v2256
    %v2264 = vmul.f32 %v2260, 0.5
    %v2265 = vmul.f32 %v2261, 0.5
    %v2266 = vmul.f32 %v2262, 0.5
    %v2267 = vtanh.pop %v2264
    %v2268 = vtanh.pop %v2265
    %v2269 = vtanh.pop %v2266
    %v2270 = vmul.f32 %v2267, 0.5
    %v2271 = vmul.f32 %v2268, 0.5
    %v2272 = vmul.f32 %v2269, 0.5
    %v2273 = vadd.f32 %v2270, 0.5
    %v2274 = vadd.f32 %v2271, 0.5
    %v2275 = vadd.f32 %v2272, 0.5
    %v2276 = vtanh.pop %v2263
    %v2277 = vmul.f32 %v2274, %v1987
    %v2278 = vmul.f32 %v2273, %v2276
    %v2279 = vadd.f32 %v2277, %v2278
    %v2280 = vtanh.pop %v2279
    %v2281 = vmul.f32 %v2275, %v2280
    %v2282 = vpack.c.bf16 %v2281, %v2281
    %2283 = vmatprep.subr.bf16.mxu0 %v534
    %2284 = vmatpush1.bf16.msra.mxu0 %v533
    %2285 = vmatprep.subr.bf16.mxu0 %v538
    %2286 = vmatpush1.bf16.msra.mxu0 %v537
    %2287 = vmatprep.subr.bf16.mxu0 %v542
    %2288 = vmatpush1.bf16.msra.mxu0 %v541
    %2289 = vmatprep.subr.bf16.mxu0 %v546
    %2290 = vmatpush1.bf16.msra.mxu0 %v545
    %2291 = vmatprep.subr.bf16.mxu0 %v550
    %2292 = vmatpush1.bf16.msra.mxu0 %v549
    %2293 = vmatprep.subr.bf16.mxu0 %v554
    %2294 = vmatpush1.bf16.msra.mxu0 %v553
    %2295 = vmatprep.subr.bf16.mxu0 %v558
    %2296 = vmatpush1.bf16.msra.mxu0 %v557
    %2297 = vmatprep.subr.bf16.mxu0 %v562
    %2298 = vmatpush1.bf16.msra.mxu0 %v561
    %2299 = vmatprep.subr.bf16.mxu0 0
    %2300 = vmatpush1.bf16.msra.mxu0 0
    %2301 = vmatprep.subr.bf16.mxu0 0
    %2302 = vmatpush1.bf16.msra.mxu0 0
    %2303 = vmatprep.subr.bf16.mxu0 0
    %2304 = vmatpush1.bf16.msra.mxu0 0
    %2305 = vmatprep.subr.bf16.mxu0 0
    %2306 = vmatpush1.bf16.msra.mxu0 0
    %2307 = vmatprep.subr.bf16.mxu0 0
    %2308 = vmatpush1.bf16.msra.mxu0 0
    %2309 = vmatprep.subr.bf16.mxu0 0
    %2310 = vmatpush1.bf16.msra.mxu0 0
    %2311 = vmatprep.subr.bf16.mxu0 0
    %2312 = vmatpush1.bf16.msra.mxu0 0
    %2313 = vmatprep.subr.bf16.mxu0 0
    %2314 = vmatpush1.bf16.msra.mxu0 0
    %2315 = vmatprep.mubr.bf16.mxu0 0
    %2316 = vmatmul.mubr.bf16.gmra.mrb[0].mxu0 %v2282
    %v2317 = vpop.f32.mrb[0].mxu0
    %v2318 = vadd.f32 %v420, %v2317
    %v2319 = vpop.f32.mrb[0].mxu0
    %v2320 = vadd.f32 %v424, %v2319
    %v2321 = vpop.f32.mrb[0].mxu0
    %v2322 = vpop.f32.mrb[0].mxu0
    %2323 = vdwg.mxu0
    %2324 = vmatprep.subr.bf16.mxu0 %v536
    %2325 = vmatpush1.bf16.msra.mxu0 %v535
    %2326 = vmatprep.subr.bf16.mxu0 %v540
    %2327 = vmatpush1.bf16.msra.mxu0 %v539
    %2328 = vmatprep.subr.bf16.mxu0 %v544
    %2329 = vmatpush1.bf16.msra.mxu0 %v543
    %2330 = vmatprep.subr.bf16.mxu0 %v548
    %2331 = vmatpush1.bf16.msra.mxu0 %v547
    %2332 = vmatprep.subr.bf16.mxu0 %v552
    %2333 = vmatpush1.bf16.msra.mxu0 %v551
    %2334 = vmatprep.subr.bf16.mxu0 %v556
    %2335 = vmatpush1.bf16.msra.mxu0 %v555
    %2336 = vmatprep.subr.bf16.mxu0 %v560
    %2337 = vmatpush1.bf16.msra.mxu0 %v559
    %2338 = vmatprep.subr.bf16.mxu0 %v564
    %2339 = vmatpush1.bf16.msra.mxu0 %v563
    %2340 = vmatprep.subr.bf16.mxu0 0
    %2341 = vmatpush1.bf16.msra.mxu0 0
    %2342 = vmatprep.subr.bf16.mxu0 0
    %2343 = vmatpush1.bf16.msra.mxu0 0
    %2344 = vmatprep.subr.bf16.mxu0 0
    %2345 = vmatpush1.bf16.msra.mxu0 0
    %2346 = vmatprep.subr.bf16.mxu0 0
    %2347 = vmatpush1.bf16.msra.mxu0 0
    %2348 = vmatprep.subr.bf16.mxu0 0
    %2349 = vmatpush1.bf16.msra.mxu0 0
    %2350 = vmatprep.subr.bf16.mxu0 0
    %2351 = vmatpush1.bf16.msra.mxu0 0
    %2352 = vmatprep.subr.bf16.mxu0 0
    %2353 = vmatpush1.bf16.msra.mxu0 0
    %2354 = vmatprep.subr.bf16.mxu0 0
    %2355 = vmatpush1.bf16.msra.mxu0 0
    %2356 = vmatprep.mubr.bf16.mxu0 0
    %2357 = vmatmul.mubr.bf16.gmra.mrb[0].mxu0 %v2282
    %v2358 = vpop.f32.mrb[0].mxu0
    %v2359 = vadd.f32 %v428, %v2358
    %v2360 = vpop.f32.mrb[0].mxu0
    %v2361 = vadd.f32 %v432, %v2360
    %v2362 = vpop.f32.mrb[0].mxu0
    %v2363 = vpop.f32.mrb[0].mxu0
    %2364 = vdwg.mxu0
    %v2365 = vpack.c.bf16 %v2177, %v2177
    %2366 = vmatprep.subr.bf16.mxu0 %v1135
    %2367 = vmatpush1.bf16.msra.mxu0 %v1134
    %2368 = vmatprep.subr.bf16.mxu0 %v1139
    %2369 = vmatpush1.bf16.msra.mxu0 %v1138
    %2370 = vmatprep.subr.bf16.mxu0 %v1143
    %2371 = vmatpush1.bf16.msra.mxu0 %v1142
    %2372 = vmatprep.subr.bf16.mxu0 %v1147
    %2373 = vmatpush1.bf16.msra.mxu0 %v1146
    %2374 = vmatprep.subr.bf16.mxu0 %v1151
    %2375 = vmatpush1.bf16.msra.mxu0 %v1150
    %2376 = vmatprep.subr.bf16.mxu0 %v1155
    %2377 = vmatpush1.bf16.msra.mxu0 %v1154
    %2378 = vmatprep.subr.bf16.mxu0 %v1159
    %2379 = vmatpush1.bf16.msra.mxu0 %v1158
    %2380 = vmatprep.subr.bf16.mxu0 %v1163
    %2381 = vmatpush1.bf16.msra.mxu0 %v1162
    %2382 = vmatprep.subr.bf16.mxu0 0
    %2383 = vmatpush1.bf16.msra.mxu0 0
    %2384 = vmatprep.subr.bf16.mxu0 0
    %2385 = vmatpush1.bf16.msra.mxu0 0
    %2386 = vmatprep.subr.bf16.mxu0 0
    %2387 = vmatpush1.bf16.msra.mxu0 0
    %2388 = vmatprep.subr.bf16.mxu0 0
    %2389 = vmatpush1.bf16.msra.mxu0 0
    %2390 = vmatprep.subr.bf16.mxu0 0
    %2391 = vmatpush1.bf16.msra.mxu0 0
    %2392 = vmatprep.subr.bf16.mxu0 0
    %2393 = vmatpush1.bf16.msra.mxu0 0
    %2394 = vmatprep.subr.bf16.mxu0 0
    %2395 = vmatpush1.bf16.msra.mxu0 0
    %2396 = vmatprep.subr.bf16.mxu0 0
    %2397 = vmatpush1.bf16.msra.mxu0 0
    %2398 = vmatprep.mubr.bf16.mxu0 0
    %2399 = vmatmul.mubr.bf16.gmra.mrb[0].mxu0 %v2365
    %v2400 = vpop.f32.mrb[0].mxu0
    %v2401 = vadd.f32 0.0, %v2400
    %v2402 = vpop.f32.mrb[0].mxu0
    %v2403 = vadd.f32 0.0, %v2402
    %v2404 = vpop.f32.mrb[0].mxu0
    %v2405 = vpop.f32.mrb[0].mxu0
    %2406 = vdwg.mxu0
    %2407 = vmatprep.subr.bf16.mxu0 %v1137
    %2408 = vmatpush1.bf16.msra.mxu0 %v1136
    %2409 = vmatprep.subr.bf16.mxu0 %v1141
    %2410 = vmatpush1.bf16.msra.mxu0 %v1140
    %2411 = vmatprep.subr.bf16.mxu0 %v1145
    %2412 = vmatpush1.bf16.msra.mxu0 %v1144
    %2413 = vmatprep.subr.bf16.mxu0 %v1149
    %2414 = vmatpush1.bf16.msra.mxu0 %v1148
    %2415 = vmatprep.subr.bf16.mxu0 %v1153
    %2416 = vmatpush1.bf16.msra.mxu0 %v1152
    %2417 = vmatprep.subr.bf16.mxu0 %v1157
    %2418 = vmatpush1.bf16.msra.mxu0 %v1156
    %2419 = vmatprep.subr.bf16.mxu0 %v1161
    %2420 = vmatpush1.bf16.msra.mxu0 %v1160
    %2421 = vmatprep.subr.bf16.mxu0 %v1165
    %2422 = vmatpush1.bf16.msra.mxu0 %v1164
    %2423 = vmatprep.subr.bf16.mxu0 0
    %2424 = vmatpush1.bf16.msra.mxu0 0
    %2425 = vmatprep.subr.bf16.mxu0 0
    %2426 = vmatpush1.bf16.msra.mxu0 0
    %2427 = vmatprep.subr.bf16.mxu0 0
    %2428 = vmatpush1.bf16.msra.mxu0 0
    %2429 = vmatprep.subr.bf16.mxu0 0
    %2430 = vmatpush1.bf16.msra.mxu0 0
    %2431 = vmatprep.subr.bf16.mxu0 0
    %2432 = vmatpush1.bf16.msra.mxu0 0
    %2433 = vmatprep.subr.bf16.mxu0 0
    %2434 = vmatpush1.bf16.msra.mxu0 0
    %2435 = vmatprep.subr.bf16.mxu0 0
    %2436 = vmatpush1.bf16.msra.mxu0 0
    %2437 = vmatprep.subr.bf16.mxu0 0
    %2438 = vmatpush1.bf16.msra.mxu0 0
    %2439 = vmatprep.mubr.bf16.mxu0 0
    %2440 = vmatmul.mubr.bf16.gmra.mrb[0].mxu0 %v2365
    %v2441 = vpop.f32.mrb[0].mxu0
    %v2442 = vadd.f32 0.0, %v2441
    %v2443 = vpop.f32.mrb[0].mxu0
    %v2444 = vadd.f32 0.0, %v2443
    %v2445 = vpop.f32.mrb[0].mxu0
    %v2446 = vpop.f32.mrb[0].mxu0
    %2447 = vdwg.mxu0
    %v2448 = vadd.f32 %v2318, %v2401
    %v2449 = vadd.f32 %v2320, %v2403
    %v2450 = vadd.f32 %v2359, %v2442
    %v2451 = vadd.f32 %v2361, %v2444
    %v2452 = vmul.f32 %v2448, 0.5
    %v2453 = vmul.f32 %v2449, 0.5
    %v2454 = vmul.f32 %v2450, 0.5
    %v2455 = vtanh.pop %v2452
    %v2456 = vtanh.pop %v2453
    %v2457 = vtanh.pop %v2454
    %v2458 = vmul.f32 %v2455, 0.5
    %v2459 = vmul.f32 %v2456, 0.5
    %v2460 = vmul.f32 %v2457, 0.5
    %v2461 = vadd.f32 %v2458, 0.5
    %v2462 = vadd.f32 %v2459, 0.5
    %v2463 = vadd.f32 %v2460, 0.5
    %v2464 = vtanh.pop %v2451
    %v2465 = vmul.f32 %v2462, %v2175
    %v2466 = vmul.f32 %v2461, %v2464
    %v2467 = vadd.f32 %v2465, %v2466
    %v2468 = vtanh.pop %v2467
    %v2469 = vmul.f32 %v2463, %v2468
    %2470 = vmatprep.subr.bf16.mxu0 %v787
    %2471 = vmatpush1.bf16.msra.mxu0 %v786
    %2472 = vmatprep.subr.bf16.mxu0 %v791
    %2473 = vmatpush1.bf16.msra.mxu0 %v790
    %2474 = vmatprep.subr.bf16.mxu0 %v795
    %2475 = vmatpush1.bf16.msra.mxu0 %v794
    %2476 = vmatprep.subr.bf16.mxu0 %v799
    %2477 = vmatpush1.bf16.msra.mxu0 %v798
    %2478 = vmatprep.subr.bf16.mxu0 %v803
    %2479 = vmatpush1.bf16.msra.mxu0 %v802
    %2480 = vmatprep.subr.bf16.mxu0 %v807
    %2481 = vmatpush1.bf16.msra.mxu0 %v806
    %2482 = vmatprep.subr.bf16.mxu0 %v811
    %2483 = vmatpush1.bf16.msra.mxu0 %v810
    %2484 = vmatprep.subr.bf16.mxu0 %v815
    %2485 = vmatpush1.bf16.msra.mxu0 %v814
    %2486 = vmatprep.subr.bf16.mxu0 0
    %2487 = vmatpush1.bf16.msra.mxu0 0
    %2488 = vmatprep.subr.bf16.mxu0 0
    %2489 = vmatpush1.bf16.msra.mxu0 0
    %2490 = vmatprep.subr.bf16.mxu0 0
    %2491 = vmatpush1.bf16.msra.mxu0 0
    %2492 = vmatprep.subr.bf16.mxu0 0
    %2493 = vmatpush1.bf16.msra.mxu0 0
    %2494 = vmatprep.subr.bf16.mxu0 0
    %2495 = vmatpush1.bf16.msra.mxu0 0
    %2496 = vmatprep.subr.bf16.mxu0 0
    %2497 = vmatpush1.bf16.msra.mxu0 0
    %2498 = vmatprep.subr.bf16.mxu0 0
    %2499 = vmatpush1.bf16.msra.mxu0 0
    %2500 = vmatprep.subr.bf16.mxu0 0
    %2501 = vmatpush1.bf16.msra.mxu0 0
    %2502 = vmatprep.mubr.bf16.mxu0 0
    %2503 = vmatmul.mubr.bf16.gmra.mrb[0].mxu0 %v2282
    %v2504 = vpop.f32.mrb[0].mxu0
    %v2505 = vadd.f32 0.0, %v2504
    %v2506 = vpop.f32.mrb[0].mxu0
    %v2507 = vadd.f32 0.0, %v2506
    %v2508 = vpop.f32.mrb[0].mxu0
    %v2509 = vpop.f32.mrb[0].mxu0
    %2510 = vdwg.mxu0
    %2511 = vmatprep.subr.bf16.mxu0 %v789
    %2512 = vmatpush1.bf16.msra.mxu0 %v788
    %2513 = vmatprep.subr.bf16.mxu0 %v793
    %2514 = vmatpush1.bf16.msra.mxu0 %v792
    %2515 = vmatprep.subr.bf16.mxu0 %v797
    %2516 = vmatpush1.bf16.msra.mxu0 %v796
    %2517 = vmatprep.subr.bf16.mxu0 %v801
    %2518 = vmatpush1.bf16.msra.mxu0 %v800
    %2519 = vmatprep.subr.bf16.mxu0 %v805
    %2520 = vmatpush1.bf16.msra.mxu0 %v804
    %2521 = vmatprep.subr.bf16.mxu0 %v809
    %2522 = vmatpush1.bf16.msra.mxu0 %v808
    %2523 = vmatprep.subr.bf16.mxu0 %v813
    %2524 = vmatpush1.bf16.msra.mxu0 %v812
    %2525 = vmatprep.subr.bf16.mxu0 %v817
    %2526 = vmatpush1.bf16.msra.mxu0 %v816
    %2527 = vmatprep.subr.bf16.mxu0 0
    %2528 = vmatpush1.bf16.msra.mxu0 0
    %2529 = vmatprep.subr.bf16.mxu0 0
    %2530 = vmatpush1.bf16.msra.mxu0 0
    %2531 = vmatprep.subr.bf16.mxu0 0
    %2532 = vmatpush1.bf16.msra.mxu0 0
    %2533 = vmatprep.subr.bf16.mxu0 0
    %2534 = vmatpush1.bf16.msra.mxu0 0
    %2535 = vmatprep.subr.bf16.mxu0 0
    %2536 = vmatpush1.bf16.msra.mxu0 0
    %2537 = vmatprep.subr.bf16.mxu0 0
    %2538 = vmatpush1.bf16.msra.mxu0 0
    %2539 = vmatprep.subr.bf16.mxu0 0
    %2540 = vmatpush1.bf16.msra.mxu0 0
    %2541 = vmatprep.subr.bf16.mxu0 0
    %2542 = vmatpush1.bf16.msra.mxu0 0
    %2543 = vmatprep.mubr.bf16.mxu0 0
    %2544 = vmatmul.mubr.bf16.gmra.mrb[0].mxu0 %v2282
    %v2545 = vpop.f32.mrb[0].mxu0
    %v2546 = vadd.f32 0.0, %v2545
    %v2547 = vpop.f32.mrb[0].mxu0
    %v2548 = vadd.f32 0.0, %v2547
    %v2549 = vpop.f32.mrb[0].mxu0
    %v2550 = vpop.f32.mrb[0].mxu0
    %2551 = vdwg.mxu0
    %v2552 = vadd.f32 %v322, %v2505
    %v2553 = vadd.f32 %v324, %v2507
    %v2554 = vadd.f32 %v395, %v2546
    %v2555 = vadd.f32 %v397, %v2548
    %v2556 = vmul.f32 %v2552, 0.5
    %v2557 = vmul.f32 %v2553, 0.5
    %v2558 = vmul.f32 %v2554, 0.5
    %v2559 = vtanh.pop %v2556
    %v2560 = vtanh.pop %v2557
    %v2561 = vtanh.pop %v2558
    %v2562 = vmul.f32 %v2559, 0.5
    %v2563 = vmul.f32 %v2560, 0.5
    %v2564 = vmul.f32 %v2561, 0.5
    %v2565 = vadd.f32 %v2562, 0.5
    %v2566 = vadd.f32 %v2563, 0.5
    %v2567 = vadd.f32 %v2564, 0.5
    %v2568 = vtanh.pop %v2555
    %v2569 = vmul.f32 %v2566, %v2279
    %v2570 = vmul.f32 %v2565, %v2568
    %v2571 = vadd.f32 %v2569, %v2570
    %v2572 = vtanh.pop %v2571
    %v2573 = vmul.f32 %v2567, %v2572
    %v2574 = vpack.c.bf16 %v2573, %v2573
    %2575 = vmatprep.subr.bf16.mxu0 %v534
    %2576 = vmatpush1.bf16.msra.mxu0 %v533
    %2577 = vmatprep.subr.bf16.mxu0 %v538
    %2578 = vmatpush1.bf16.msra.mxu0 %v537
    %2579 = vmatprep.subr.bf16.mxu0 %v542
    %2580 = vmatpush1.bf16.msra.mxu0 %v541
    %2581 = vmatprep.subr.bf16.mxu0 %v546
    %2582 = vmatpush1.bf16.msra.mxu0 %v545
    %2583 = vmatprep.subr.bf16.mxu0 %v550
    %2584 = vmatpush1.bf16.msra.mxu0 %v549
    %2585 = vmatprep.subr.bf16.mxu0 %v554
    %2586 = vmatpush1.bf16.msra.mxu0 %v553
    %2587 = vmatprep.subr.bf16.mxu0 %v558
    %2588 = vmatpush1.bf16.msra.mxu0 %v557
    %2589 = vmatprep.subr.bf16.mxu0 %v562
    %2590 = vmatpush1.bf16.msra.mxu0 %v561
    %2591 = vmatprep.subr.bf16.mxu0 0
    %2592 = vmatpush1.bf16.msra.mxu0 0
    %2593 = vmatprep.subr.bf16.mxu0 0
    %2594 = vmatpush1.bf16.msra.mxu0 0
    %2595 = vmatprep.subr.bf16.mxu0 0
    %2596 = vmatpush1.bf16.msra.mxu0 0
    %2597 = vmatprep.subr.bf16.mxu0 0
    %2598 = vmatpush1.bf16.msra.mxu0 0
    %2599 = vmatprep.subr.bf16.mxu0 0
    %2600 = vmatpush1.bf16.msra.mxu0 0
    %2601 = vmatprep.subr.bf16.mxu0 0
    %2602 = vmatpush1.bf16.msra.mxu0 0
    %2603 = vmatprep.subr.bf16.mxu0 0
    %2604 = vmatpush1.bf16.msra.mxu0 0
    %2605 = vmatprep.subr.bf16.mxu0 0
    %2606 = vmatpush1.bf16.msra.mxu0 0
    %2607 = vmatprep.mubr.bf16.mxu0 0
    %2608 = vmatmul.mubr.bf16.gmra.mrb[0].mxu0 %v2574
    %v2609 = vpop.f32.mrb[0].mxu0
    %v2610 = vadd.f32 %v420, %v2609
    %v2611 = vpop.f32.mrb[0].mxu0
    %v2612 = vadd.f32 %v424, %v2611
    %v2613 = vpop.f32.mrb[0].mxu0
    %v2614 = vpop.f32.mrb[0].mxu0
    %2615 = vdwg.mxu0
    %2616 = vmatprep.subr.bf16.mxu0 %v536
    %2617 = vmatpush1.bf16.msra.mxu0 %v535
    %2618 = vmatprep.subr.bf16.mxu0 %v540
    %2619 = vmatpush1.bf16.msra.mxu0 %v539
    %2620 = vmatprep.subr.bf16.mxu0 %v544
    %2621 = vmatpush1.bf16.msra.mxu0 %v543
    %2622 = vmatprep.subr.bf16.mxu0 %v548
    %2623 = vmatpush1.bf16.msra.mxu0 %v547
    %2624 = vmatprep.subr.bf16.mxu0 %v552
    %2625 = vmatpush1.bf16.msra.mxu0 %v551
    %2626 = vmatprep.subr.bf16.mxu0 %v556
    %2627 = vmatpush1.bf16.msra.mxu0 %v555
    %2628 = vmatprep.subr.bf16.mxu0 %v560
    %2629 = vmatpush1.bf16.msra.mxu0 %v559
    %2630 = vmatprep.subr.bf16.mxu0 %v564
    %2631 = vmatpush1.bf16.msra.mxu0 %v563
    %2632 = vmatprep.subr.bf16.mxu0 0
    %2633 = vmatpush1.bf16.msra.mxu0 0
    %2634 = vmatprep.subr.bf16.mxu0 0
    %2635 = vmatpush1.bf16.msra.mxu0 0
    %2636 = vmatprep.subr.bf16.mxu0 0
    %2637 = vmatpush1.bf16.msra.mxu0 0
    %2638 = vmatprep.subr.bf16.mxu0 0
    %2639 = vmatpush1.bf16.msra.mxu0 0
    %2640 = vmatprep.subr.bf16.mxu0 0
    %2641 = vmatpush1.bf16.msra.mxu0 0
    %2642 = vmatprep.subr.bf16.mxu0 0
    %2643 = vmatpush1.bf16.msra.mxu0 0
    %2644 = vmatprep.subr.bf16.mxu0 0
    %2645 = vmatpush1.bf16.msra.mxu0 0
    %2646 = vmatprep.subr.bf16.mxu0 0
    %2647 = vmatpush1.bf16.msra.mxu0 0
    %2648 = vmatprep.mubr.bf16.mxu0 0
    %2649 = vmatmul.mubr.bf16.gmra.mrb[0].mxu0 %v2574
    %v2650 = vpop.f32.mrb[0].mxu0
    %v2651 = vadd.f32 %v428, %v2650
    %v2652 = vpop.f32.mrb[0].mxu0
    %v2653 = vadd.f32 %v432, %v2652
    %v2654 = vpop.f32.mrb[0].mxu0
    %v2655 = vpop.f32.mrb[0].mxu0
    %2656 = vdwg.mxu0
    %v2657 = vpack.c.bf16 %v2469, %v2469
    %2658 = vmatprep.subr.bf16.mxu0 %v1135
    %2659 = vmatpush1.bf16.msra.mxu0 %v1134
    %2660 = vmatprep.subr.bf16.mxu0 %v1139
    %2661 = vmatpush1.bf16.msra.mxu0 %v1138
    %2662 = vmatprep.subr.bf16.mxu0 %v1143
    %2663 = vmatpush1.bf16.msra.mxu0 %v1142
    %2664 = vmatprep.subr.bf16.mxu0 %v1147
    %2665 = vmatpush1.bf16.msra.mxu0 %v1146
    %2666 = vmatprep.subr.bf16.mxu0 %v1151
    %2667 = vmatpush1.bf16.msra.mxu0 %v1150
    %2668 = vmatprep.subr.bf16.mxu0 %v1155
    %2669 = vmatpush1.bf16.msra.mxu0 %v1154
    %2670 = vmatprep.subr.bf16.mxu0 %v1159
    %2671 = vmatpush1.bf16.msra.mxu0 %v1158
    %2672 = vmatprep.subr.bf16.mxu0 %v1163
    %2673 = vmatpush1.bf16.msra.mxu0 %v1162
    %2674 = vmatprep.subr.bf16.mxu0 0
    %2675 = vmatpush1.bf16.msra.mxu0 0
    %2676 = vmatprep.subr.bf16.mxu0 0
    %2677 = vmatpush1.bf16.msra.mxu0 0
    %2678 = vmatprep.subr.bf16.mxu0 0
    %2679 = vmatpush1.bf16.msra.mxu0 0
    %2680 = vmatprep.subr.bf16.mxu0 0
    %2681 = vmatpush1.bf16.msra.mxu0 0
    %2682 = vmatprep.subr.bf16.mxu0 0
    %2683 = vmatpush1.bf16.msra.mxu0 0
    %2684 = vmatprep.subr.bf16.mxu0 0
    %2685 = vmatpush1.bf16.msra.mxu0 0
    %2686 = vmatprep.subr.bf16.mxu0 0
    %2687 = vmatpush1.bf16.msra.mxu0 0
    %2688 = vmatprep.subr.bf16.mxu0 0
    %2689 = vmatpush1.bf16.msra.mxu0 0
    %2690 = vmatprep.mubr.bf16.mxu0 0
    %2691 = vmatmul.mubr.bf16.gmra.mrb[0].mxu0 %v2657
    %v2692 = vpop.f32.mrb[0].mxu0
    %v2693 = vadd.f32 0.0, %v2692
    %v2694 = vpop.f32.mrb[0].mxu0
    %v2695 = vadd.f32 0.0, %v2694
    %v2696 = vpop.f32.mrb[0].mxu0
    %v2697 = vpop.f32.mrb[0].mxu0
    %2698 = vdwg.mxu0
    %2699 = vmatprep.subr.bf16.mxu0 %v1137
    %2700 = vmatpush1.bf16.msra.mxu0 %v1136
    %2701 = vmatprep.subr.bf16.mxu0 %v1141
    %2702 = vmatpush1.bf16.msra.mxu0 %v1140
    %2703 = vmatprep.subr.bf16.mxu0 %v1145
    %2704 = vmatpush1.bf16.msra.mxu0 %v1144
    %2705 = vmatprep.subr.bf16.mxu0 %v1149
    %2706 = vmatpush1.bf16.msra.mxu0 %v1148
    %2707 = vmatprep.subr.bf16.mxu0 %v1153
    %2708 = vmatpush1.bf16.msra.mxu0 %v1152
    %2709 = vmatprep.subr.bf16.mxu0 %v1157
    %2710 = vmatpush1.bf16.msra.mxu0 %v1156
    %2711 = vmatprep.subr.bf16.mxu0 %v1161
    %2712 = vmatpush1.bf16.msra.mxu0 %v1160
    %2713 = vmatprep.subr.bf16.mxu0 %v1165
    %2714 = vmatpush1.bf16.msra.mxu0 %v1164
    %2715 = vmatprep.subr.bf16.mxu0 0
    %2716 = vmatpush1.bf16.msra.mxu0 0
    %2717 = vmatprep.subr.bf16.mxu0 0
    %2718 = vmatpush1.bf16.msra.mxu0 0
    %2719 = vmatprep.subr.bf16.mxu0 0
    %2720 = vmatpush1.bf16.msra.mxu0 0
    %2721 = vmatprep.subr.bf16.mxu0 0
    %2722 = vmatpush1.bf16.msra.mxu0 0
    %2723 = vmatprep.subr.bf16.mxu0 0
    %2724 = vmatpush1.bf16.msra.mxu0 0
    %2725 = vmatprep.subr.bf16.mxu0 0
    %2726 = vmatpush1.bf16.msra.mxu0 0
    %2727 = vmatprep.subr.bf16.mxu0 0
    %2728 = vmatpush1.bf16.msra.mxu0 0
    %2729 = vmatprep.subr.bf16.mxu0 0
    %2730 = vmatpush1.bf16.msra.mxu0 0
    %2731 = vmatprep.mubr.bf16.mxu0 0
    %2732 = vmatmul.mubr.bf16.gmra.mrb[0].mxu0 %v2657
    %v2733 = vpop.f32.mrb[0].mxu0
    %v2734 = vadd.f32 0.0, %v2733
    %v2735 = vpop.f32.mrb[0].mxu0
    %v2736 = vadd.f32 0.0, %v2735
    %v2737 = vpop.f32.mrb[0].mxu0
    %v2738 = vpop.f32.mrb[0].mxu0
    %2739 = vdwg.mxu0
    %v2740 = vadd.f32 %v2610, %v2693
    %v2741 = vadd.f32 %v2612, %v2695
    %v2742 = vadd.f32 %v2651, %v2734
    %v2743 = vadd.f32 %v2653, %v2736
    %v2744 = vmul.f32 %v2740, 0.5
    %v2745 = vmul.f32 %v2741, 0.5
    %v2746 = vmul.f32 %v2742, 0.5
    %v2747 = vtanh.pop %v2744
    %v2748 = vtanh.pop %v2745
    %v2749 = vtanh.pop %v2746
    %v2750 = vmul.f32 %v2747, 0.5
    %v2751 = vmul.f32 %v2748, 0.5
    %v2752 = vmul.f32 %v2749, 0.5
    %v2753 = vadd.f32 %v2750, 0.5
    %v2754 = vadd.f32 %v2751, 0.5
    %v2755 = vadd.f32 %v2752, 0.5
    %v2756 = vtanh.pop %v2743
    %v2757 = vmul.f32 %v2754, %v2467
    %v2758 = vmul.f32 %v2753, %v2756
    %v2759 = vadd.f32 %v2757, %v2758
    %v2760 = vtanh.pop %v2759
    %v2761 = vmul.f32 %v2755, %v2760
    %2762 = vmatprep.subr.bf16.mxu0 %v787
    %2763 = vmatpush1.bf16.msra.mxu0 %v786
    %2764 = vmatprep.subr.bf16.mxu0 %v791
    %2765 = vmatpush1.bf16.msra.mxu0 %v790
    %2766 = vmatprep.subr.bf16.mxu0 %v795
    %2767 = vmatpush1.bf16.msra.mxu0 %v794
    %2768 = vmatprep.subr.bf16.mxu0 %v799
    %2769 = vmatpush1.bf16.msra.mxu0 %v798
    %2770 = vmatprep.subr.bf16.mxu0 %v803
    %2771 = vmatpush1.bf16.msra.mxu0 %v802
    %2772 = vmatprep.subr.bf16.mxu0 %v807
    %2773 = vmatpush1.bf16.msra.mxu0 %v806
    %2774 = vmatprep.subr.bf16.mxu0 %v811
    %2775 = vmatpush1.bf16.msra.mxu0 %v810
    %2776 = vmatprep.subr.bf16.mxu0 %v815
    %2777 = vmatpush1.bf16.msra.mxu0 %v814
    %2778 = vmatprep.subr.bf16.mxu0 0
    %2779 = vmatpush1.bf16.msra.mxu0 0
    %2780 = vmatprep.subr.bf16.mxu0 0
    %2781 = vmatpush1.bf16.msra.mxu0 0
    %2782 = vmatprep.subr.bf16.mxu0 0
    %2783 = vmatpush1.bf16.msra.mxu0 0
    %2784 = vmatprep.subr.bf16.mxu0 0
    %2785 = vmatpush1.bf16.msra.mxu0 0
    %2786 = vmatprep.subr.bf16.mxu0 0
    %2787 = vmatpush1.bf16.msra.mxu0 0
    %2788 = vmatprep.subr.bf16.mxu0 0
    %2789 = vmatpush1.bf16.msra.mxu0 0
    %2790 = vmatprep.subr.bf16.mxu0 0
    %2791 = vmatpush1.bf16.msra.mxu0 0
    %2792 = vmatprep.subr.bf16.mxu0 0
    %2793 = vmatpush1.bf16.msra.mxu0 0
    %2794 = vmatprep.mubr.bf16.mxu0 0
    %2795 = vmatmul.mubr.bf16.gmra.mrb[0].mxu0 %v2574
    %v2796 = vpop.f32.mrb[0].mxu0
    %v2797 = vadd.f32 0.0, %v2796
    %v2798 = vpop.f32.mrb[0].mxu0
    %v2799 = vadd.f32 0.0, %v2798
    %v2800 = vpop.f32.mrb[0].mxu0
    %v2801 = vpop.f32.mrb[0].mxu0
    %2802 = vdwg.mxu0
    %2803 = vmatprep.subr.bf16.mxu0 %v789
    %2804 = vmatpush1.bf16.msra.mxu0 %v788
    %2805 = vmatprep.subr.bf16.mxu0 %v793
    %2806 = vmatpush1.bf16.msra.mxu0 %v792
    %2807 = vmatprep.subr.bf16.mxu0 %v797
    %2808 = vmatpush1.bf16.msra.mxu0 %v796
    %2809 = vmatprep.subr.bf16.mxu0 %v801
    %2810 = vmatpush1.bf16.msra.mxu0 %v800
    %2811 = vmatprep.subr.bf16.mxu0 %v805
    %2812 = vmatpush1.bf16.msra.mxu0 %v804
    %2813 = vmatprep.subr.bf16.mxu0 %v809
    %2814 = vmatpush1.bf16.msra.mxu0 %v808
    %2815 = vmatprep.subr.bf16.mxu0 %v813
    %2816 = vmatpush1.bf16.msra.mxu0 %v812
    %2817 = vmatprep.subr.bf16.mxu0 %v817
    %2818 = vmatpush1.bf16.msra.mxu0 %v816
    %2819 = vmatprep.subr.bf16.mxu0 0
    %2820 = vmatpush1.bf16.msra.mxu0 0
    %2821 = vmatprep.subr.bf16.mxu0 0
    %2822 = vmatpush1.bf16.msra.mxu0 0
    %2823 = vmatprep.subr.bf16.mxu0 0
    %2824 = vmatpush1.bf16.msra.mxu0 0
    %2825 = vmatprep.subr.bf16.mxu0 0
    %2826 = vmatpush1.bf16.msra.mxu0 0
    %2827 = vmatprep.subr.bf16.mxu0 0
    %2828 = vmatpush1.bf16.msra.mxu0 0
    %2829 = vmatprep.subr.bf16.mxu0 0
    %2830 = vmatpush1.bf16.msra.mxu0 0
    %2831 = vmatprep.subr.bf16.mxu0 0
    %2832 = vmatpush1.bf16.msra.mxu0 0
    %2833 = vmatprep.subr.bf16.mxu0 0
    %2834 = vmatpush1.bf16.msra.mxu0 0
    %2835 = vmatprep.mubr.bf16.mxu0 0
    %2836 = vmatmul.mubr.bf16.gmra.mrb[0].mxu0 %v2574
    %v2837 = vpop.f32.mrb[0].mxu0
    %v2838 = vadd.f32 0.0, %v2837
    %v2839 = vpop.f32.mrb[0].mxu0
    %v2840 = vadd.f32 0.0, %v2839
    %v2841 = vpop.f32.mrb[0].mxu0
    %v2842 = vpop.f32.mrb[0].mxu0
    %2843 = vdwg.mxu0
    %v2844 = vadd.f32 %v326, %v2797
    %v2845 = vadd.f32 %v328, %v2799
    %v2846 = vadd.f32 %v399, %v2838
    %v2847 = vadd.f32 %v401, %v2840
    %v2848 = vmul.f32 %v2844, 0.5
    %v2849 = vmul.f32 %v2845, 0.5
    %v2850 = vmul.f32 %v2846, 0.5
    %v2851 = vtanh.pop %v2848
    %v2852 = vtanh.pop %v2849
    %v2853 = vtanh.pop %v2850
    %v2854 = vmul.f32 %v2851, 0.5
    %v2855 = vmul.f32 %v2852, 0.5
    %v2856 = vmul.f32 %v2853, 0.5
    %v2857 = vadd.f32 %v2854, 0.5
    %v2858 = vadd.f32 %v2855, 0.5
    %v2859 = vadd.f32 %v2856, 0.5
    %v2860 = vtanh.pop %v2847
    %v2861 = vmul.f32 %v2858, %v2571
    %v2862 = vmul.f32 %v2857, %v2860
    %v2863 = vadd.f32 %v2861, %v2862
    %v2864 = vtanh.pop %v2863
    %v2865 = vmul.f32 %v2859, %v2864
    %v2866 = vpack.c.bf16 %v2865, %v2865
    %2867 = vmatprep.subr.bf16.mxu0 %v534
    %2868 = vmatpush1.bf16.msra.mxu0 %v533
    %2869 = vmatprep.subr.bf16.mxu0 %v538
    %2870 = vmatpush1.bf16.msra.mxu0 %v537
    %2871 = vmatprep.subr.bf16.mxu0 %v542
    %2872 = vmatpush1.bf16.msra.mxu0 %v541
    %2873 = vmatprep.subr.bf16.mxu0 %v546
    %2874 = vmatpush1.bf16.msra.mxu0 %v545
    %2875 = vmatprep.subr.bf16.mxu0 %v550
    %2876 = vmatpush1.bf16.msra.mxu0 %v549
    %2877 = vmatprep.subr.bf16.mxu0 %v554
    %2878 = vmatpush1.bf16.msra.mxu0 %v553
    %2879 = vmatprep.subr.bf16.mxu0 %v558
    %2880 = vmatpush1.bf16.msra.mxu0 %v557
    %2881 = vmatprep.subr.bf16.mxu0 %v562
    %2882 = vmatpush1.bf16.msra.mxu0 %v561
    %2883 = vmatprep.subr.bf16.mxu0 0
    %2884 = vmatpush1.bf16.msra.mxu0 0
    %2885 = vmatprep.subr.bf16.mxu0 0
    %2886 = vmatpush1.bf16.msra.mxu0 0
    %2887 = vmatprep.subr.bf16.mxu0 0
    %2888 = vmatpush1.bf16.msra.mxu0 0
    %2889 = vmatprep.subr.bf16.mxu0 0
    %2890 = vmatpush1.bf16.msra.mxu0 0
    %2891 = vmatprep.subr.bf16.mxu0 0
    %2892 = vmatpush1.bf16.msra.mxu0 0
    %2893 = vmatprep.subr.bf16.mxu0 0
    %2894 = vmatpush1.bf16.msra.mxu0 0
    %2895 = vmatprep.subr.bf16.mxu0 0
    %2896 = vmatpush1.bf16.msra.mxu0 0
    %2897 = vmatprep.subr.bf16.mxu0 0
    %2898 = vmatpush1.bf16.msra.mxu0 0
    %2899 = vmatprep.mubr.bf16.mxu0 0
    %2900 = vmatmul.mubr.bf16.gmra.mrb[0].mxu0 %v2866
    %v2901 = vpop.f32.mrb[0].mxu0
    %v2902 = vadd.f32 %v420, %v2901
    %v2903 = vpop.f32.mrb[0].mxu0
    %v2904 = vadd.f32 %v424, %v2903
    %v2905 = vpop.f32.mrb[0].mxu0
    %v2906 = vpop.f32.mrb[0].mxu0
    %2907 = vdwg.mxu0
    %2908 = vmatprep.subr.bf16.mxu0 %v536
    %2909 = vmatpush1.bf16.msra.mxu0 %v535
    %2910 = vmatprep.subr.bf16.mxu0 %v540
    %2911 = vmatpush1.bf16.msra.mxu0 %v539
    %2912 = vmatprep.subr.bf16.mxu0 %v544
    %2913 = vmatpush1.bf16.msra.mxu0 %v543
    %2914 = vmatprep.subr.bf16.mxu0 %v548
    %2915 = vmatpush1.bf16.msra.mxu0 %v547
    %2916 = vmatprep.subr.bf16.mxu0 %v552
    %2917 = vmatpush1.bf16.msra.mxu0 %v551
    %2918 = vmatprep.subr.bf16.mxu0 %v556
    %2919 = vmatpush1.bf16.msra.mxu0 %v555
    %2920 = vmatprep.subr.bf16.mxu0 %v560
    %2921 = vmatpush1.bf16.msra.mxu0 %v559
    %2922 = vmatprep.subr.bf16.mxu0 %v564
    %2923 = vmatpush1.bf16.msra.mxu0 %v563
    %2924 = vmatprep.subr.bf16.mxu0 0
    %2925 = vmatpush1.bf16.msra.mxu0 0
    %2926 = vmatprep.subr.bf16.mxu0 0
    %2927 = vmatpush1.bf16.msra.mxu0 0
    %2928 = vmatprep.subr.bf16.mxu0 0
    %2929 = vmatpush1.bf16.msra.mxu0 0
    %2930 = vmatprep.subr.bf16.mxu0 0
    %2931 = vmatpush1.bf16.msra.mxu0 0
    %2932 = vmatprep.subr.bf16.mxu0 0
    %2933 = vmatpush1.bf16.msra.mxu0 0
    %2934 = vmatprep.subr.bf16.mxu0 0
    %2935 = vmatpush1.bf16.msra.mxu0 0
    %2936 = vmatprep.subr.bf16.mxu0 0
    %2937 = vmatpush1.bf16.msra.mxu0 0
    %2938 = vmatprep.subr.bf16.mxu0 0
    %2939 = vmatpush1.bf16.msra.mxu0 0
    %2940 = vmatprep.mubr.bf16.mxu0 0
    %2941 = vmatmul.mubr.bf16.gmra.mrb[0].mxu0 %v2866
    %v2942 = vpop.f32.mrb[0].mxu0
    %v2943 = vadd.f32 %v428, %v2942
    %v2944 = vpop.f32.mrb[0].mxu0
    %v2945 = vadd.f32 %v432, %v2944
    %v2946 = vpop.f32.mrb[0].mxu0
    %v2947 = vpop.f32.mrb[0].mxu0
    %2948 = vdwg.mxu0
    %v2949 = vpack.c.bf16 %v2761, %v2761
    %2950 = vmatprep.subr.bf16.mxu0 %v1135
    %2951 = vmatpush1.bf16.msra.mxu0 %v1134
    %2952 = vmatprep.subr.bf16.mxu0 %v1139
    %2953 = vmatpush1.bf16.msra.mxu0 %v1138
    %2954 = vmatprep.subr.bf16.mxu0 %v1143
    %2955 = vmatpush1.bf16.msra.mxu0 %v1142
    %2956 = vmatprep.subr.bf16.mxu0 %v1147
    %2957 = vmatpush1.bf16.msra.mxu0 %v1146
    %2958 = vmatprep.subr.bf16.mxu0 %v1151
    %2959 = vmatpush1.bf16.msra.mxu0 %v1150
    %2960 = vmatprep.subr.bf16.mxu0 %v1155
    %2961 = vmatpush1.bf16.msra.mxu0 %v1154
    %2962 = vmatprep.subr.bf16.mxu0 %v1159
    %2963 = vmatpush1.bf16.msra.mxu0 %v1158
    %2964 = vmatprep.subr.bf16.mxu0 %v1163
    %2965 = vmatpush1.bf16.msra.mxu0 %v1162
    %2966 = vmatprep.subr.bf16.mxu0 0
    %2967 = vmatpush1.bf16.msra.mxu0 0
    %2968 = vmatprep.subr.bf16.mxu0 0
    %2969 = vmatpush1.bf16.msra.mxu0 0
    %2970 = vmatprep.subr.bf16.mxu0 0
    %2971 = vmatpush1.bf16.msra.mxu0 0
    %2972 = vmatprep.subr.bf16.mxu0 0
    %2973 = vmatpush1.bf16.msra.mxu0 0
    %2974 = vmatprep.subr.bf16.mxu0 0
    %2975 = vmatpush1.bf16.msra.mxu0 0
    %2976 = vmatprep.subr.bf16.mxu0 0
    %2977 = vmatpush1.bf16.msra.mxu0 0
    %2978 = vmatprep.subr.bf16.mxu0 0
    %2979 = vmatpush1.bf16.msra.mxu0 0
    %2980 = vmatprep.subr.bf16.mxu0 0
    %2981 = vmatpush1.bf16.msra.mxu0 0
    %2982 = vmatprep.mubr.bf16.mxu0 0
    %2983 = vmatmul.mubr.bf16.gmra.mrb[0].mxu0 %v2949
    %v2984 = vpop.f32.mrb[0].mxu0
    %v2985 = vadd.f32 0.0, %v2984
    %v2986 = vpop.f32.mrb[0].mxu0
    %v2987 = vadd.f32 0.0, %v2986
    %v2988 = vpop.f32.mrb[0].mxu0
    %v2989 = vpop.f32.mrb[0].mxu0
    %2990 = vdwg.mxu0
    %2991 = vmatprep.subr.bf16.mxu0 %v1137
    %2992 = vmatpush1.bf16.msra.mxu0 %v1136
    %2993 = vmatprep.subr.bf16.mxu0 %v1141
    %2994 = vmatpush1.bf16.msra.mxu0 %v1140
    %2995 = vmatprep.subr.bf16.mxu0 %v1145
    %2996 = vmatpush1.bf16.msra.mxu0 %v1144
    %2997 = vmatprep.subr.bf16.mxu0 %v1149
    %2998 = vmatpush1.bf16.msra.mxu0 %v1148
    %2999 = vmatprep.subr.bf16.mxu0 %v1153
    %3000 = vmatpush1.bf16.msra.mxu0 %v1152
    %3001 = vmatprep.subr.bf16.mxu0 %v1157
    %3002 = vmatpush1.bf16.msra.mxu0 %v1156
    %3003 = vmatprep.subr.bf16.mxu0 %v1161
    %3004 = vmatpush1.bf16.msra.mxu0 %v1160
    %3005 = vmatprep.subr.bf16.mxu0 %v1165
    %3006 = vmatpush1.bf16.msra.mxu0 %v1164
    %3007 = vmatprep.subr.bf16.mxu0 0
    %3008 = vmatpush1.bf16.msra.mxu0 0
    %3009 = vmatprep.subr.bf16.mxu0 0
    %3010 = vmatpush1.bf16.msra.mxu0 0
    %3011 = vmatprep.subr.bf16.mxu0 0
    %3012 = vmatpush1.bf16.msra.mxu0 0
    %3013 = vmatprep.subr.bf16.mxu0 0
    %3014 = vmatpush1.bf16.msra.mxu0 0
    %3015 = vmatprep.subr.bf16.mxu0 0
    %3016 = vmatpush1.bf16.msra.mxu0 0
    %3017 = vmatprep.subr.bf16.mxu0 0
    %3018 = vmatpush1.bf16.msra.mxu0 0
    %3019 = vmatprep.subr.bf16.mxu0 0
    %3020 = vmatpush1.bf16.msra.mxu0 0
    %3021 = vmatprep.subr.bf16.mxu0 0
    %3022 = vmatpush1.bf16.msra.mxu0 0
    %3023 = vmatprep.mubr.bf16.mxu0 0
    %3024 = vmatmul.mubr.bf16.gmra.mrb[0].mxu0 %v2949
    %v3025 = vpop.f32.mrb[0].mxu0
    %v3026 = vadd.f32 0.0, %v3025
    %v3027 = vpop.f32.mrb[0].mxu0
    %v3028 = vadd.f32 0.0, %v3027
    %v3029 = vpop.f32.mrb[0].mxu0
    %v3030 = vpop.f32.mrb[0].mxu0
    %3031 = vdwg.mxu0
    %v3032 = vadd.f32 %v2902, %v2985
    %v3033 = vadd.f32 %v2904, %v2987
    %v3034 = vadd.f32 %v2943, %v3026
    %v3035 = vadd.f32 %v2945, %v3028
    %v3036 = vmul.f32 %v3032, 0.5
    %v3037 = vmul.f32 %v3033, 0.5
    %v3038 = vmul.f32 %v3034, 0.5
    %v3039 = vtanh.pop %v3036
    %v3040 = vtanh.pop %v3037
    %v3041 = vtanh.pop %v3038
    %v3042 = vmul.f32 %v3039, 0.5
    %v3043 = vmul.f32 %v3040, 0.5
    %v3044 = vmul.f32 %v3041, 0.5
    %v3045 = vadd.f32 %v3042, 0.5
    %v3046 = vadd.f32 %v3043, 0.5
    %v3047 = vadd.f32 %v3044, 0.5
    %v3048 = vtanh.pop %v3035
    %v3049 = vmul.f32 %v3046, %v2759
    %v3050 = vmul.f32 %v3045, %v3048
    %v3051 = vadd.f32 %v3049, %v3050
    %v3052 = vtanh.pop %v3051
    %v3053 = vmul.f32 %v3047, %v3052
    %v3054 = vpack.c.bf16 %v3053, %v3053
    %v3055 = vld [vmem:[%s7] sm:$0xf]
    %v3056 = vld [vmem:[%s7 + $0x4] sm:$0xf]
    %v3057 = vld [vmem:[%s7 + $0x8] sm:$0xf]
    %v3058 = vld [vmem:[%s7 + $0xc] sm:$0xf]
    %v3059 = vld [vmem:[%s7 + $0x10] sm:$0xf]
    %v3060 = vld [vmem:[%s7 + $0x14] sm:$0xf]
    %v3061 = vld [vmem:[%s7 + $0x18] sm:$0xf]
    %v3062 = vld [vmem:[%s7 + $0x1c] sm:$0xf]
    %v3063 = vld [vmem:[%s7 + $0x20] sm:$0xf]
    %v3064 = vld [vmem:[%s7 + $0x24] sm:$0xf]
    %v3065 = vld [vmem:[%s7 + $0x28] sm:$0xf]
    %v3066 = vld [vmem:[%s7 + $0x2c] sm:$0xf]
    %v3067 = vld [vmem:[%s7 + $0x30] sm:$0xf]
    %v3068 = vld [vmem:[%s7 + $0x34] sm:$0xf]
    %v3069 = vld [vmem:[%s7 + $0x38] sm:$0xf]
    %v3070 = vld [vmem:[%s7 + $0x3c] sm:$0xf]
    %v3071 = vld [vmem:[%s8] sm:$0x1]
    %v3073 = vlaneseq
    %v3074 = vshrl.u32 %v3073, 7
    %v3075 = vsub.s32 0, %v3074
    %v3076 = vrot.slane %v3071, %v3075
    %v3094 = vunpack.c.l.b16 %v3055
    %v3095 = vunpack.c.l.b16 %v3056
    %v3096 = vunpack.c.l.b16 %v3057
    %v3097 = vunpack.c.l.b16 %v3058
    %v3098 = vunpack.c.l.b16 %v3059
    %v3099 = vunpack.c.l.b16 %v3060
    %v3100 = vunpack.c.l.b16 %v3061
    %v3101 = vunpack.c.l.b16 %v3062
    %v3102 = vunpack.c.l.b16 %v3063
    %v3103 = vunpack.c.l.b16 %v3064
    %v3104 = vunpack.c.l.b16 %v3065
    %v3105 = vunpack.c.l.b16 %v3066
    %v3106 = vunpack.c.l.b16 %v3067
    %v3107 = vunpack.c.l.b16 %v3068
    %v3108 = vunpack.c.l.b16 %v3069
    %v3109 = vunpack.c.l.b16 %v3070
    %v3110 = vpack.c.b16 %v3095, %v3094
    %v3111 = vpack.c.b16 %v3097, %v3096
    %v3112 = vpack.c.b16 %v3099, %v3098
    %v3113 = vpack.c.b16 %v3101, %v3100
    %v3114 = vpack.c.b16 %v3103, %v3102
    %v3115 = vpack.c.b16 %v3105, %v3104
    %v3116 = vpack.c.b16 %v3107, %v3106
    %v3117 = vpack.c.b16 %v3109, %v3108
    %3126 = vmatprep.subr.bf16.mxu0 0
    %3127 = vmatpush1.bf16.msra.mxu0 %v3110
    %3128 = vmatprep.subr.bf16.mxu0 0
    %3129 = vmatpush1.bf16.msra.mxu0 %v3111
    %3130 = vmatprep.subr.bf16.mxu0 0
    %3131 = vmatpush1.bf16.msra.mxu0 %v3112
    %3132 = vmatprep.subr.bf16.mxu0 0
    %3133 = vmatpush1.bf16.msra.mxu0 %v3113
    %3134 = vmatprep.subr.bf16.mxu0 0
    %3135 = vmatpush1.bf16.msra.mxu0 %v3114
    %3136 = vmatprep.subr.bf16.mxu0 0
    %3137 = vmatpush1.bf16.msra.mxu0 %v3115
    %3138 = vmatprep.subr.bf16.mxu0 0
    %3139 = vmatpush1.bf16.msra.mxu0 %v3116
    %3140 = vmatprep.subr.bf16.mxu0 0
    %3141 = vmatpush1.bf16.msra.mxu0 %v3117
    %3142 = vmatprep.subr.bf16.mxu0 0
    %3143 = vmatpush1.bf16.msra.mxu0 0
    %3144 = vmatprep.subr.bf16.mxu0 0
    %3145 = vmatpush1.bf16.msra.mxu0 0
    %3146 = vmatprep.subr.bf16.mxu0 0
    %3147 = vmatpush1.bf16.msra.mxu0 0
    %3148 = vmatprep.subr.bf16.mxu0 0
    %3149 = vmatpush1.bf16.msra.mxu0 0
    %3150 = vmatprep.subr.bf16.mxu0 0
    %3151 = vmatpush1.bf16.msra.mxu0 0
    %3152 = vmatprep.subr.bf16.mxu0 0
    %3153 = vmatpush1.bf16.msra.mxu0 0
    %3154 = vmatprep.subr.bf16.mxu0 0
    %3155 = vmatpush1.bf16.msra.mxu0 0
    %3156 = vmatprep.subr.bf16.mxu0 0
    %3157 = vmatpush1.bf16.msra.mxu0 0
    %3158 = vmatprep.mubr.bf16.mxu0 0
    %3159 = vmatmul.mubr.bf16.gmra.mrb[0].mxu0 %v3054
    %v3160 = vpop.f32.mrb[0].mxu0
    %v3161 = vadd.f32 %v3076, %v3160
    %v3162 = vpop.f32.mrb[0].mxu0
    %v3163 = vpop.f32.mrb[0].mxu0
    %v3164 = vpop.f32.mrb[0].mxu0
    %3165 = vdwg.mxu0
    %v3166 = vmax.f32 %v3161, 0.0
    %v3167 = vpack.c.bf16 %v3166, %v3166
    %v3168 = vld [vmem:[%s9] sm:$0xf]
    %v3169 = vld [vmem:[%s9 + $0x4] sm:$0xf]
    %v3170 = vld [vmem:[%s9 + $0x8] sm:$0xf]
    %v3171 = vld [vmem:[%s9 + $0xc] sm:$0xf]
    %v3172 = vld [vmem:[%s9 + $0x10] sm:$0xf]
    %v3173 = vld [vmem:[%s9 + $0x14] sm:$0xf]
    %v3174 = vld [vmem:[%s9 + $0x18] sm:$0xf]
    %v3175 = vld [vmem:[%s9 + $0x1c] sm:$0xf]
    %v3176 = vld [vmem:[%s10] sm:$0x1]
    %v3178 = vlaneseq
    %v3179 = vshrl.u32 %v3178, 7
    %v3180 = vsub.s32 0, %v3179
    %v3181 = vrot.slane %v3176, %v3180
    %v3191 = vunpack.c.l.b16 %v3168
    %v3192 = vunpack.c.l.b16 %v3169
    %v3193 = vunpack.c.l.b16 %v3170
    %v3194 = vunpack.c.l.b16 %v3171
    %v3195 = vunpack.c.l.b16 %v3172
    %v3196 = vunpack.c.l.b16 %v3173
    %v3197 = vunpack.c.l.b16 %v3174
    %v3198 = vunpack.c.l.b16 %v3175
    %v3199 = vpack.c.b16 %v3192, %v3191
    %v3200 = vpack.c.b16 %v3194, %v3193
    %v3201 = vpack.c.b16 %v3196, %v3195
    %v3202 = vpack.c.b16 %v3198, %v3197
    %vm3207 = vcmask 523264
    %v3209 = vsel %vm3207, %v3167, 0
    %3211 = vmatprep.subr.bf16.mxu0 0
    %3212 = vmatpush1.bf16.msra.mxu0 %v3199
    %3213 = vmatprep.subr.bf16.mxu0 0
    %3214 = vmatpush1.bf16.msra.mxu0 %v3200
    %3215 = vmatprep.subr.bf16.mxu0 0
    %3216 = vmatpush1.bf16.msra.mxu0 %v3201
    %3217 = vmatprep.subr.bf16.mxu0 0
    %3218 = vmatpush1.bf16.msra.mxu0 %v3202
    %3219 = vmatprep.subr.bf16.mxu0 0
    %3220 = vmatpush1.bf16.msra.mxu0 0
    %3221 = vmatprep.subr.bf16.mxu0 0
    %3222 = vmatpush1.bf16.msra.mxu0 0
    %3223 = vmatprep.subr.bf16.mxu0 0
    %3224 = vmatpush1.bf16.msra.mxu0 0
    %3225 = vmatprep.subr.bf16.mxu0 0
    %3226 = vmatpush1.bf16.msra.mxu0 0
    %3227 = vmatprep.subr.bf16.mxu0 0
    %3228 = vmatpush1.bf16.msra.mxu0 0
    %3229 = vmatprep.subr.bf16.mxu0 0
    %3230 = vmatpush1.bf16.msra.mxu0 0
    %3231 = vmatprep.subr.bf16.mxu0 0
    %3232 = vmatpush1.bf16.msra.mxu0 0
    %3233 = vmatprep.subr.bf16.mxu0 0
    %3234 = vmatpush1.bf16.msra.mxu0 0
    %3235 = vmatprep.subr.bf16.mxu0 0
    %3236 = vmatpush1.bf16.msra.mxu0 0
    %3237 = vmatprep.subr.bf16.mxu0 0
    %3238 = vmatpush1.bf16.msra.mxu0 0
    %3239 = vmatprep.subr.bf16.mxu0 0
    %3240 = vmatpush1.bf16.msra.mxu0 0
    %3241 = vmatprep.subr.bf16.mxu0 0
    %3242 = vmatpush1.bf16.msra.mxu0 0
    %3243 = vmatprep.mubr.bf16.mxu0 0
    %3244 = vmatmul.mubr.bf16.gmra.mrb[0].mxu0 %v3209
    %v3245 = vpop.f32.mrb[0].mxu0
    %v3246 = vadd.f32 %v3181, %v3245
    %v3247 = vpop.f32.mrb[0].mxu0
    %v3248 = vpop.f32.mrb[0].mxu0
    %v3249 = vpop.f32.mrb[0].mxu0
    %3250 = vdwg.mxu0
    %3251 = vst.msk [vmem:[#allocation8] sm:$0xff] %vm232, %v3246
    // Predicated region
    $region58: #{tpu_custom_call.1} parent=1 // pred_check
      _
    $region59: #{tpu_custom_call.1} parent=1 // pred_check_branch
      %3253 = sbr.rel (0) target = $region61
    $region60: #{tpu_custom_call.1} parent=1 // pred_region
      %s3255 = ssub.s32 128, 128
      %3256 = vsyncadd [#allocation4], %s3255
      %s3258 = sshll.u32 [#allocation8], 4
      %s3259 = int_to_ptr.vmem [resolvable:$true] %s3258
      %3261 = dma.vmem_to_hbm [thread:$0]  %s3259, 128, %s11, [#allocation4]
    $region61: #{tpu_custom_call.1} parent=1 // pred_fallthru
      _
    // Predicated region
    $region62: #{tpu_custom_call.1} parent=1 // pred_check
      _
    $region63: #{tpu_custom_call.1} parent=1 // pred_check_branch
      %3263 = sbr.rel (0) target = $region65
    $region64: #{tpu_custom_call.1} parent=1 // pred_region
      %3264 = dma.done [#allocation4], 128
    $region65: #{tpu_custom_call.1} parent=1 // pred_fallthru
      _
    %3265 = vsyncpa [#allocation3], 1
    %3266 = vsyncpa [#allocation6], 1
    %3267 = vsyncpa [#allocation4], 1

</llo_original>
